<compile_context>
chip_gen: v6e
topology: v6e:2x2x1
jax: 0.10.0
libtpu: 0.0.40
codegen_flags: <defaults>
</compile_context>

<pallas_src>
import jax
import jax.numpy as jnp
from jax.experimental import pallas as pl
from jax.experimental.pallas import tpu as pltpu

INPUT_DIM = 560    # Frey-face 28x20 flattened (module default)
LATENT_DIM = 20
HIDDEN_DIM = 500

# Lane-padded sizes (multiples of 128 on the lane axis).
IN_PAD = 640       # 560 -> 640
HID_PAD = 512      # 500 -> 512
LAT_PAD = 128      # packed encoder head: mu at lanes [0,20), logvar at [64,84)
LOGVAR_OFF = 64


def _round_up(n, m):
    return ((n + m - 1) // m) * m


# ---------------------------------------------------------------------------
# Kernel
# ---------------------------------------------------------------------------
def _vae_kernel(x_ref, eps_ref,
                we_ref, be_ref,          # encoder: (IN_PAD, HID_PAD), (1, HID_PAD)
                wenc_ref, benc_ref,      # packed mean|logvar head: (HID_PAD, LAT_PAD)
                wd1_ref, bd1_ref,        # decoder: (LAT_PAD, HID_PAD), (1, HID_PAD)
                wdec_ref, bdec_ref,      # fused d21|d22 head: (HID_PAD, 2*IN_PAD)
                dec_ref, enc_ref):
    # ---- encoder ----  (x arrives already bf16)
    h = jnp.dot(x_ref[...], we_ref[...], preferred_element_type=jnp.float32) + be_ref[...]
    h = jnp.maximum(h, 0.0)                                   # F.relu

    # packed mean/logvar head: single 128-lane MXU push + lane-dense store.
    enc = (jnp.dot(h.astype(jnp.bfloat16), wenc_ref[...],
                   preferred_element_type=jnp.float32) + benc_ref[...])
    enc_ref[...] = enc

    # ---- sample_normal: z = eps * exp(0.5 * logvar) + mean ----
    # logvar lives at lanes [64,84); rotate it down to lanes [0,20) so it lines
    # up with eps and with mu.  Rolled-in garbage lanes are killed by eps == 0.
    logvar_aligned = pltpu.roll(enc, LOGVAR_OFF, axis=1)       # XLU, ~free
    z = eps_ref[...] * jnp.exp(logvar_aligned * 0.5) + enc
    # z lanes [64,84) still carry logvar, but W_d1 rows >= LATENT_DIM are zero,
    # so they contribute nothing to the decoder matmul.

    # ---- decoder ----
    hd = (jnp.dot(z.astype(jnp.bfloat16), wd1_ref[...],
                  preferred_element_type=jnp.float32) + bd1_ref[...])
    hd = jnp.maximum(hd, 0.0)                                 # F.relu

    # fused d21 / d22 head: one lane-dense (2*IN_PAD)-wide MXU push.
    logits = (jnp.dot(hd.astype(jnp.bfloat16), wdec_ref[...],
                      preferred_element_type=jnp.float32) + bdec_ref[...])

    # sigmoid(t) = 0.5 * (1 + tanh(0.5 t)): one EUP push per vreg, exact [0,1].
    dec_ref[...] = (0.5 * (jnp.tanh(0.5 * logits) + 1.0)).astype(dec_ref.dtype)


# ---------------------------------------------------------------------------
# Parameters
# ---------------------------------------------------------------------------
def init_params(key, input_dim=INPUT_DIM, latent_dim=LATENT_DIM, hidden_dim=HIDDEN_DIM):
    """Raw f32 params mimicking PyTorch Linear default init, weights as (in, out)."""
    def linear(k, fan_in, fan_out):
        kw, kb = jax.random.split(k)
        bound = 1.0 / jnp.sqrt(jnp.float32(fan_in))
        w = jax.random.uniform(kw, (fan_in, fan_out), jnp.float32, -bound, bound)
        b = jax.random.uniform(kb, (1, fan_out), jnp.float32, -bound, bound)
        return w, b

    keys = jax.random.split(key, 6)
    p = {}
    p["W_e"], p["b_e"] = linear(keys[0], input_dim, hidden_dim)
    p["W_mean"], p["b_mean"] = linear(keys[1], hidden_dim, latent_dim)
    p["W_logvar"], p["b_logvar"] = linear(keys[2], hidden_dim, latent_dim)
    p["W_d1"], p["b_d1"] = linear(keys[3], latent_dim, hidden_dim)
    p["W_d21"], p["b_d21"] = linear(keys[4], hidden_dim, input_dim)
    p["W_d22"], p["b_d22"] = linear(keys[5], hidden_dim, input_dim)
    return p


def pack_params(raw):
    """Fuse + zero-pad + bf16-cast weights once (outside jit). Biases stay f32."""
    def pad2(a, shape):
        out = jnp.zeros(shape, jnp.float32)
        return out.at[:a.shape[0], :a.shape[1]].set(a)

    W_e = pad2(raw["W_e"], (IN_PAD, HID_PAD)).astype(jnp.bfloat16)
    b_e = pad2(raw["b_e"], (1, HID_PAD))

    # Packed mean|logvar head: one 128-lane block.
    W_enc = jnp.zeros((HID_PAD, LAT_PAD), jnp.float32)
    W_enc = W_enc.at[:HIDDEN_DIM, :LATENT_DIM].set(raw["W_mean"])
    W_enc = W_enc.at[:HIDDEN_DIM, LOGVAR_OFF:LOGVAR_OFF + LATENT_DIM].set(raw["W_logvar"])
    b_enc = jnp.zeros((1, LAT_PAD), jnp.float32)
    b_enc = b_enc.at[:, :LATENT_DIM].set(raw["b_mean"])
    b_enc = b_enc.at[:, LOGVAR_OFF:LOGVAR_OFF + LATENT_DIM].set(raw["b_logvar"])

    W_d1 = pad2(raw["W_d1"], (LAT_PAD, HID_PAD)).astype(jnp.bfloat16)
    b_d1 = pad2(raw["b_d1"], (1, HID_PAD))

    W_dec = jnp.zeros((HID_PAD, 2 * IN_PAD), jnp.float32)
    W_dec = W_dec.at[:HIDDEN_DIM, :INPUT_DIM].set(raw["W_d21"])
    W_dec = W_dec.at[:HIDDEN_DIM, IN_PAD:IN_PAD + INPUT_DIM].set(raw["W_d22"])
    b_dec = jnp.zeros((1, 2 * IN_PAD), jnp.float32)
    b_dec = b_dec.at[:, :INPUT_DIM].set(raw["b_d21"])
    b_dec = b_dec.at[:, IN_PAD:IN_PAD + INPUT_DIM].set(raw["b_d22"])

    return {
        "W_e": W_e, "b_e": b_e,
        "W_enc": W_enc.astype(jnp.bfloat16), "b_enc": b_enc,
        "W_d1": W_d1, "b_d1": b_d1,
        "W_dec": W_dec.astype(jnp.bfloat16), "b_dec": b_dec,
    }


# ---------------------------------------------------------------------------
# Forward
# ---------------------------------------------------------------------------
def _pick_tile_b(B):
    """Biggest tile that fits, but keep >=2 grid steps when the batch allows it
    (feeds both TensorCores on v7x via the 'parallel' batch axis)."""
    b16 = _round_up(B, 16)                  # bf16 sublane tile = 16
    tile_b = min(512, b16)
    if b16 >= 32 and _round_up(B, tile_b) // tile_b < 2:
        tile_b = _round_up(b16 // 2, 16)
    return tile_b


@jax.jit
def vae_forward(x, eps, packed):
    B = x.shape[0]
    tile_b = _pick_tile_b(B)
    Bp = _round_up(B, tile_b)

    # Host-side pad + bf16 cast (halves the per-tile input DMA vs f32).
    x_pad = jnp.zeros((Bp, IN_PAD), jnp.bfloat16).at[:B, :INPUT_DIM].set(
        x.astype(jnp.bfloat16))
    eps_pad = jnp.zeros((Bp, LAT_PAD), jnp.bfloat16).at[:B, :LATENT_DIM].set(
        eps.astype(jnp.bfloat16))

    row = lambda i: (i, 0)      # batch-tiled operands
    pinned = lambda i: (0, 0)   # weights stay VMEM-resident across the grid
    # TODO(synk): single-buffer the pinned weight specs (pl.Buffered(1)) once
    # verified on-target; default double-buffering still fits comfortably.

    in_specs = [
        pl.BlockSpec((tile_b, IN_PAD), row),
        pl.BlockSpec((tile_b, LAT_PAD), row),
        pl.BlockSpec((IN_PAD, HID_PAD), pinned),
        pl.BlockSpec((1, HID_PAD), pinned),
        pl.BlockSpec((HID_PAD, LAT_PAD), pinned),
        pl.BlockSpec((1, LAT_PAD), pinned),
        pl.BlockSpec((LAT_PAD, HID_PAD), pinned),
        pl.BlockSpec((1, HID_PAD), pinned),
        pl.BlockSpec((HID_PAD, 2 * IN_PAD), pinned),
        pl.BlockSpec((1, 2 * IN_PAD), pinned),
    ]
    out_specs = (
        pl.BlockSpec((tile_b, 2 * IN_PAD), row),    # sigmoid(mu)|sigmoid(logvar), bf16
        pl.BlockSpec((tile_b, LAT_PAD), row),       # packed z_mu|z_logvar, f32
    )
    out_shape = (
        jax.ShapeDtypeStruct((Bp, 2 * IN_PAD), jnp.bfloat16),
        jax.ShapeDtypeStruct((Bp, LAT_PAD), jnp.float32),
    )

    flops = 2 * Bp * (IN_PAD * HID_PAD + HID_PAD * LAT_PAD
                      + LAT_PAD * HID_PAD + HID_PAD * 2 * IN_PAD)
    transcendentals = Bp * (LAT_PAD + 2 * IN_PAD)       # exp (latent) + tanh (decoder)
    weight_bytes = 2 * (IN_PAD * HID_PAD + HID_PAD * LAT_PAD
                        + LAT_PAD * HID_PAD + HID_PAD * 2 * IN_PAD)
    bias_bytes = 4 * (HID_PAD + LAT_PAD + HID_PAD + 2 * IN_PAD)
    io_bytes = Bp * (2 * IN_PAD + 2 * LAT_PAD        # bf16 x, eps
                     + 2 * (2 * IN_PAD)              # bf16 dec out
                     + 4 * LAT_PAD)                  # f32 enc out
    cost = pl.CostEstimate(flops=flops, transcendentals=transcendentals,
                           bytes_accessed=weight_bytes + bias_bytes + io_bytes)

    dec, enc = pl.pallas_call(
        _vae_kernel,
        grid=(Bp // tile_b,),
        in_specs=in_specs,
        out_specs=out_specs,
        out_shape=out_shape,
        compiler_params=pltpu.CompilerParams(
            dimension_semantics=("parallel",),
            vmem_limit_bytes=32 << 20,
        ),
        cost_estimate=cost,
    )(x_pad, eps_pad,
      packed["W_e"], packed["b_e"],
      packed["W_enc"], packed["b_enc"],
      packed["W_d1"], packed["b_d1"],
      packed["W_dec"], packed["b_dec"])

    x_out_mu = dec[:B, :INPUT_DIM].astype(jnp.float32)
    x_out_logvar = dec[:B, IN_PAD:IN_PAD + INPUT_DIM].astype(jnp.float32)
    z_mu = enc[:B, :LATENT_DIM]
    z_logvar = enc[:B, LOGVAR_OFF:LOGVAR_OFF + LATENT_DIM]
    return x_out_mu, x_out_logvar, z_mu, z_logvar


def vae_reference(x, eps, raw):
    """Pure-JAX f32 reference mirroring the PyTorch module."""
    h = jax.nn.relu(x @ raw["W_e"] + raw["b_e"])
    z_mu = h @ raw["W_mean"] + raw["b_mean"]
    z_logvar = h @ raw["W_logvar"] + raw["b_logvar"]
    z = eps * jnp.exp(0.5 * z_logvar) + z_mu
    hd = jax.nn.relu(z @ raw["W_d1"] + raw["b_d1"])
    x_mu = jax.nn.sigmoid(hd @ raw["W_d21"] + raw["b_d21"])
    x_lv = jax.nn.sigmoid(hd @ raw["W_d22"] + raw["b_d22"])
    return x_mu, x_lv, z_mu, z_logvar


if __name__ == "__main__":
    key = jax.random.PRNGKey(0)
    k_param, k_x, k_eps = jax.random.split(key, 3)

    B = 8
    raw = init_params(k_param)
    packed = pack_params(raw)           # fuse/pad/bf16-cast once, outside jit

    # Frey-face pixels live in [0, 1]; x arrives already flattened to (B, input_dim).
    x = jax.random.uniform(k_x, (B, INPUT_DIM), jnp.float32)
    eps = jax.random.normal(k_eps, (B, LATENT_DIM), jnp.float32)  # torch.randn equiv.

    x_out_mu, x_out_logvar, z_mu, z_logvar = jax.block_until_ready(
        vae_forward(x, eps, packed))

    assert x_out_mu.shape == (B, INPUT_DIM)
    assert x_out_logvar.shape == (B, INPUT_DIM)
    assert z_mu.shape == (B, LATENT_DIM)
    assert z_logvar.shape == (B, LATENT_DIM)
    assert bool(jnp.all(jnp.isfinite(x_out_mu)))
    # tanh-based sigmoid is exactly bounded; bf16 rounding stays within [0, 1].
    assert bool(jnp.all((x_out_mu >= 0.0) & (x_out_mu <= 1.0)))

    r_mu, r_lv, r_zmu, r_zlv = vae_reference(x, eps, raw)
    # enc path: bf16 weights only -> tight tolerance.
    assert bool(jnp.allclose(z_mu, r_zmu, atol=2e-2, rtol=2e-2))
    assert bool(jnp.allclose(z_logvar, r_zlv, atol=2e-2, rtol=2e-2))
    # decoder path additionally has bf16 eps + bf16 output store.
    assert bool(jnp.allclose(x_out_mu, r_mu, atol=3e-2, rtol=3e-2))
    assert bool(jnp.allclose(x_out_logvar, r_lv, atol=3e-2, rtol=3e-2))

    print("KERNEL_OK")
</pallas_src>

<mosaic_0001>
module attributes {stable_mosaic.version = 11 : i64} {
  func.func @_vae_kernel(%arg0: i32, %arg1: memref<16x640xbf16, #tpu.memory_space<vmem>>, %arg2: memref<16x128xbf16, #tpu.memory_space<vmem>>, %arg3: memref<640x512xbf16, #tpu.memory_space<vmem>>, %arg4: memref<1x512xf32, #tpu.memory_space<vmem>>, %arg5: memref<512x128xbf16, #tpu.memory_space<vmem>>, %arg6: memref<1x128xf32, #tpu.memory_space<vmem>>, %arg7: memref<128x512xbf16, #tpu.memory_space<vmem>>, %arg8: memref<1x512xf32, #tpu.memory_space<vmem>>, %arg9: memref<512x1280xbf16, #tpu.memory_space<vmem>>, %arg10: memref<1x1280xf32, #tpu.memory_space<vmem>>, %arg11: memref<16x1280xbf16, #tpu.memory_space<vmem>>, %arg12: memref<16x128xf32, #tpu.memory_space<vmem>>) attributes {dimension_semantics = [#tpu.dimension_semantics<parallel>], iteration_bounds = array<i64: 1>, scalar_prefetch = 0 : i64, scratch_operands = 0 : i64, tpu.core_type = #tpu.core_type<tc>, window_params = [{transform_indices = @transform_0, window_bounds = array<i64: 16, 640>}, {transform_indices = @transform_1, window_bounds = array<i64: 16, 128>}, {pipeline_mode = #tpu.pipeline_mode<synchronous>, transform_indices = @transform_2, window_bounds = array<i64: 640, 512>}, {pipeline_mode = #tpu.pipeline_mode<synchronous>, transform_indices = @transform_3, window_bounds = array<i64: 1, 512>}, {pipeline_mode = #tpu.pipeline_mode<synchronous>, transform_indices = @transform_4, window_bounds = array<i64: 512, 128>}, {pipeline_mode = #tpu.pipeline_mode<synchronous>, transform_indices = @transform_5, window_bounds = array<i64: 1, 128>}, {pipeline_mode = #tpu.pipeline_mode<synchronous>, transform_indices = @transform_6, window_bounds = array<i64: 128, 512>}, {pipeline_mode = #tpu.pipeline_mode<synchronous>, transform_indices = @transform_7, window_bounds = array<i64: 1, 512>}, {pipeline_mode = #tpu.pipeline_mode<synchronous>, transform_indices = @transform_8, window_bounds = array<i64: 512, 1280>}, {pipeline_mode = #tpu.pipeline_mode<synchronous>, transform_indices = @transform_9, window_bounds = array<i64: 1, 1280>}, {transform_indices = @transform_10, window_bounds = array<i64: 16, 1280>}, {transform_indices = @transform_11, window_bounds = array<i64: 16, 128>}]} {
    %c0 = arith.constant 0 : index
    %c0_0 = arith.constant 0 : index
    %0 = vector.load %arg1[%c0, %c0_0] : memref<16x640xbf16, #tpu.memory_space<vmem>>, vector<16x640xbf16>
    %c0_1 = arith.constant 0 : index
    %c0_2 = arith.constant 0 : index
    %1 = vector.load %arg3[%c0_1, %c0_2] : memref<640x512xbf16, #tpu.memory_space<vmem>>, vector<640x512xbf16>
    %cst = arith.constant dense<0.000000e+00> : vector<16x512xf32>
    %2 = tpu.matmul %0, %1, %cst {dimension_numbers = #tpu.dot_dimension_numbers<[1], [0], [0], [1], [0, 0, 1, 1], [], []>} : vector<16x640xbf16>, vector<640x512xbf16>, vector<16x512xf32> -> vector<16x512xf32>
    %c0_3 = arith.constant 0 : index
    %c0_4 = arith.constant 0 : index
    %3 = vector.load %arg4[%c0_3, %c0_4] : memref<1x512xf32, #tpu.memory_space<vmem>>, vector<1x512xf32>
    %4 = vector.broadcast %3 : vector<1x512xf32> to vector<16x512xf32>
    %5 = arith.addf %2, %4 : vector<16x512xf32>
    %cst_5 = arith.constant 0.000000e+00 : f32
    %6 = vector.broadcast %cst_5 : f32 to vector<16x512xf32>
    %7 = arith.maximumf %5, %6 : vector<16x512xf32>
    %8 = arith.truncf %7 : vector<16x512xf32> to vector<16x512xbf16>
    %c0_6 = arith.constant 0 : index
    %c0_7 = arith.constant 0 : index
    %9 = vector.load %arg5[%c0_6, %c0_7] : memref<512x128xbf16, #tpu.memory_space<vmem>>, vector<512x128xbf16>
    %cst_8 = arith.constant dense<0.000000e+00> : vector<16x128xf32>
    %10 = tpu.matmul %8, %9, %cst_8 {dimension_numbers = #tpu.dot_dimension_numbers<[1], [0], [0], [1], [0, 0, 1, 1], [], []>} : vector<16x512xbf16>, vector<512x128xbf16>, vector<16x128xf32> -> vector<16x128xf32>
    %c0_9 = arith.constant 0 : index
    %c0_10 = arith.constant 0 : index
    %11 = vector.load %arg6[%c0_9, %c0_10] : memref<1x128xf32, #tpu.memory_space<vmem>>, vector<1x128xf32>
    %12 = vector.broadcast %11 : vector<1x128xf32> to vector<16x128xf32>
    %13 = arith.addf %10, %12 : vector<16x128xf32>
    %c0_11 = arith.constant 0 : index
    %c0_12 = arith.constant 0 : index
    %14 = vector.load %arg12[%c0_11, %c0_12] : memref<16x128xf32, #tpu.memory_space<vmem>>, vector<16x128xf32>
    tpu.vector_store %arg12[%c0_11, %c0_12], %13 {strides = array<i32>} : memref<16x128xf32, #tpu.memory_space<vmem>>, vector<16x128xf32>,
    %c64_i32 = arith.constant 64 : i32
    %15 = tpu.dynamic_rotate %13 by %c64_i32 dim 1 : vector<16x128xf32>, i32 -> vector<16x128xf32>
    %c0_13 = arith.constant 0 : index
    %c0_14 = arith.constant 0 : index
    %16 = vector.load %arg2[%c0_13, %c0_14] : memref<16x128xbf16, #tpu.memory_space<vmem>>, vector<16x128xbf16>
    %cst_15 = arith.constant 5.000000e-01 : f32
    %17 = vector.broadcast %cst_15 : f32 to vector<16x128xf32>
    %18 = arith.mulf %15, %17 : vector<16x128xf32>
    %19 = math.exp %18 : vector<16x128xf32>
    %20 = arith.extf %16 : vector<16x128xbf16> to vector<16x128xf32>
    %21 = arith.mulf %20, %19 : vector<16x128xf32>
    %22 = arith.addf %21, %13 : vector<16x128xf32>
    %23 = arith.truncf %22 : vector<16x128xf32> to vector<16x128xbf16>
    %c0_16 = arith.constant 0 : index
    %c0_17 = arith.constant 0 : index
    %24 = vector.load %arg7[%c0_16, %c0_17] : memref<128x512xbf16, #tpu.memory_space<vmem>>, vector<128x512xbf16>
    %cst_18 = arith.constant dense<0.000000e+00> : vector<16x512xf32>
    %25 = tpu.matmul %23, %24, %cst_18 {dimension_numbers = #tpu.dot_dimension_numbers<[1], [0], [0], [1], [0, 0, 1, 1], [], []>} : vector<16x128xbf16>, vector<128x512xbf16>, vector<16x512xf32> -> vector<16x512xf32>
    %c0_19 = arith.constant 0 : index
    %c0_20 = arith.constant 0 : index
    %26 = vector.load %arg8[%c0_19, %c0_20] : memref<1x512xf32, #tpu.memory_space<vmem>>, vector<1x512xf32>
    %27 = vector.broadcast %26 : vector<1x512xf32> to vector<16x512xf32>
    %28 = arith.addf %25, %27 : vector<16x512xf32>
    %cst_21 = arith.constant 0.000000e+00 : f32
    %29 = vector.broadcast %cst_21 : f32 to vector<16x512xf32>
    %30 = arith.maximumf %28, %29 : vector<16x512xf32>
    %31 = arith.truncf %30 : vector<16x512xf32> to vector<16x512xbf16>
    %c0_22 = arith.constant 0 : index
    %c0_23 = arith.constant 0 : index
    %32 = vector.load %arg9[%c0_22, %c0_23] : memref<512x1280xbf16, #tpu.memory_space<vmem>>, vector<512x1280xbf16>
    %cst_24 = arith.constant dense<0.000000e+00> : vector<16x1280xf32>
    %33 = tpu.matmul %31, %32, %cst_24 {dimension_numbers = #tpu.dot_dimension_numbers<[1], [0], [0], [1], [0, 0, 1, 1], [], []>} : vector<16x512xbf16>, vector<512x1280xbf16>, vector<16x1280xf32> -> vector<16x1280xf32>
    %c0_25 = arith.constant 0 : index
    %c0_26 = arith.constant 0 : index
    %34 = vector.load %arg10[%c0_25, %c0_26] : memref<1x1280xf32, #tpu.memory_space<vmem>>, vector<1x1280xf32>
    %35 = vector.broadcast %34 : vector<1x1280xf32> to vector<16x1280xf32>
    %36 = arith.addf %33, %35 : vector<16x1280xf32>
    %cst_27 = arith.constant 5.000000e-01 : f32
    %37 = vector.broadcast %cst_27 : f32 to vector<16x1280xf32>
    %38 = arith.mulf %37, %36 : vector<16x1280xf32>
    %39 = math.tanh %38 : vector<16x1280xf32>
    %cst_28 = arith.constant 1.000000e+00 : f32
    %40 = vector.broadcast %cst_28 : f32 to vector<16x1280xf32>
    %41 = arith.addf %39, %40 : vector<16x1280xf32>
    %cst_29 = arith.constant 5.000000e-01 : f32
    %42 = vector.broadcast %cst_29 : f32 to vector<16x1280xf32>
    %43 = arith.mulf %42, %41 : vector<16x1280xf32>
    %44 = arith.truncf %43 : vector<16x1280xf32> to vector<16x1280xbf16>
    %c0_30 = arith.constant 0 : index
    %c0_31 = arith.constant 0 : index
    %45 = vector.load %arg11[%c0_30, %c0_31] : memref<16x1280xbf16, #tpu.memory_space<vmem>>, vector<16x1280xbf16>
    tpu.vector_store %arg11[%c0_30, %c0_31], %44 {strides = array<i32>} : memref<16x1280xbf16, #tpu.memory_space<vmem>>, vector<16x1280xbf16>,
    return
  }
  func.func @transform_0(%arg0: i32) -> (i32, i32) {
    %c0_i32 = arith.constant 0 : i32
    %c0_i32_0 = arith.constant 0 : i32
    return %arg0, %c0_i32 : i32, i32
  }
  func.func @transform_1(%arg0: i32) -> (i32, i32) {
    %c0_i32 = arith.constant 0 : i32
    %c0_i32_0 = arith.constant 0 : i32
    return %arg0, %c0_i32 : i32, i32
  }
  func.func @transform_2(%arg0: i32) -> (i32, i32) {
    %c0_i32 = arith.constant 0 : i32
    %c0_i32_0 = arith.constant 0 : i32
    %c0_i32_1 = arith.constant 0 : i32
    return %c0_i32, %c0_i32_0 : i32, i32
  }
  func.func @transform_3(%arg0: i32) -> (i32, i32) {
    %c0_i32 = arith.constant 0 : i32
    %c0_i32_0 = arith.constant 0 : i32
    %c0_i32_1 = arith.constant 0 : i32
    return %c0_i32, %c0_i32_0 : i32, i32
  }
  func.func @transform_4(%arg0: i32) -> (i32, i32) {
    %c0_i32 = arith.constant 0 : i32
    %c0_i32_0 = arith.constant 0 : i32
    %c0_i32_1 = arith.constant 0 : i32
    return %c0_i32, %c0_i32_0 : i32, i32
  }
  func.func @transform_5(%arg0: i32) -> (i32, i32) {
    %c0_i32 = arith.constant 0 : i32
    %c0_i32_0 = arith.constant 0 : i32
    %c0_i32_1 = arith.constant 0 : i32
    return %c0_i32, %c0_i32_0 : i32, i32
  }
  func.func @transform_6(%arg0: i32) -> (i32, i32) {
    %c0_i32 = arith.constant 0 : i32
    %c0_i32_0 = arith.constant 0 : i32
    %c0_i32_1 = arith.constant 0 : i32
    return %c0_i32, %c0_i32_0 : i32, i32
  }
  func.func @transform_7(%arg0: i32) -> (i32, i32) {
    %c0_i32 = arith.constant 0 : i32
    %c0_i32_0 = arith.constant 0 : i32
    %c0_i32_1 = arith.constant 0 : i32
    return %c0_i32, %c0_i32_0 : i32, i32
  }
  func.func @transform_8(%arg0: i32) -> (i32, i32) {
    %c0_i32 = arith.constant 0 : i32
    %c0_i32_0 = arith.constant 0 : i32
    %c0_i32_1 = arith.constant 0 : i32
    return %c0_i32, %c0_i32_0 : i32, i32
  }
  func.func @transform_9(%arg0: i32) -> (i32, i32) {
    %c0_i32 = arith.constant 0 : i32
    %c0_i32_0 = arith.constant 0 : i32
    %c0_i32_1 = arith.constant 0 : i32
    return %c0_i32, %c0_i32_0 : i32, i32
  }
  func.func @transform_10(%arg0: i32) -> (i32, i32) {
    %c0_i32 = arith.constant 0 : i32
    %c0_i32_0 = arith.constant 0 : i32
    return %arg0, %c0_i32 : i32, i32
  }
  func.func @transform_11(%arg0: i32) -> (i32, i32) {
    %c0_i32 = arith.constant 0 : i32
    %c0_i32_0 = arith.constant 0 : i32
    return %arg0, %c0_i32 : i32, i32
  }
}

</mosaic_0001>

<llo_original>
// kernel: vae_forward.1
$region0: #{vae_forward.1}
  #allocation0 [shape = 'u32[]', space=smem, size = 0x4, offset = 0x4, fixed_abs, tag = 'smem constant byte address 0x4 - core index']
  #allocation1 [shape = 'u32[144,128]{1,0:T(1,128)}', space=vmem, size = 0x12000, scoped, tag = 'internal scratch']
  %s0 = inlined_call_operand.vmem [shape: bf16[16,640], index: 0, kind: input, shape index: {}]
  %s1 = inlined_call_operand.vmem [shape: bf16[16,128], index: 1, kind: input, shape index: {}]
  %s2 = inlined_call_operand.hbm [shape: bf16[640,512], index: 2, kind: input, shape index: {}]
  %s3 = inlined_call_operand.hbm [shape: f32[1,512], index: 3, kind: input, shape index: {}]
  %s4 = inlined_call_operand.hbm [shape: bf16[512,128], index: 4, kind: input, shape index: {}]
  %s5 = inlined_call_operand.hbm [shape: f32[1,128], index: 5, kind: input, shape index: {}]
  %s6 = inlined_call_operand.hbm [shape: bf16[128,512], index: 6, kind: input, shape index: {}]
  %s7 = inlined_call_operand.hbm [shape: f32[1,512], index: 7, kind: input, shape index: {}]
  %s8 = inlined_call_operand.hbm [shape: bf16[512,1280], index: 8, kind: input, shape index: {}]
  %s9 = inlined_call_operand.hbm [shape: f32[1,1280], index: 9, kind: input, shape index: {}]
  %s10 = inlined_call_operand.vmem [shape: bf16[16,1280], index: 10, kind: output, shape index: {0}]
  %s11 = inlined_call_operand.vmem [shape: f32[16,128], index: 11, kind: output, shape index: {1}]
  %12 = xla_tuple %s10, %s11
  %s13 = sld [smem:[#allocation0]]
  $region90: #{vae_forward.1} parent=0
    _
  %s15 = ssub.s32 1, %s13
  %s16 = scalar_select 0, %s15, %s13
  $region1: #{vae_forward.1} parent=0
    #allocation2 [shape = 'u8[655360]{0}', space=vmem, size = 0xa0000, scoped, tag = 'input window, operand 2, single buffered']
    #allocation3 [shape = 's32[1]{0}', space=sflag, size = 0x4, scoped, tag = 'scoped memory for vae_forward.1']
    #allocation4 [shape = 'u8[2048]{0}', space=vmem, size = 0x800, scoped, tag = 'input window, operand 3, single buffered']
    #allocation5 [shape = 's32[1]{0}', space=sflag, size = 0x4, scoped, tag = 'scoped memory for vae_forward.1']
    #allocation6 [shape = 'u8[131072]{0}', space=vmem, size = 0x20000, scoped, tag = 'input window, operand 4, single buffered']
    #allocation7 [shape = 'u8[512]{0}', space=vmem, size = 0x400, scoped, tag = 'input window, operand 5, single buffered']
    #allocation8 [shape = 's32[1]{0}', space=sflag, size = 0x4, scoped, tag = 'scoped memory for vae_forward.1']
    #allocation9 [shape = 'u8[131072]{0}', space=vmem, size = 0x20000, scoped, tag = 'input window, operand 6, single buffered']
    #allocation10 [shape = 'u8[2048]{0}', space=vmem, size = 0x800, scoped, tag = 'input window, operand 7, single buffered']
    #allocation11 [shape = 's32[1]{0}', space=sflag, size = 0x4, scoped, tag = 'scoped memory for vae_forward.1']
    #allocation12 [shape = 'u8[1310720]{0}', space=vmem, size = 0x140000, scoped, tag = 'input window, operand 8, single buffered']
    #allocation13 [shape = 'u8[5120]{0}', space=vmem, size = 0x1400, scoped, tag = 'input window, operand 9, single buffered']
    #allocation14 [shape = 's32[1]{0}', space=sflag, size = 0x4, scoped, tag = 'scoped memory for vae_forward.1']
    %17 = vsyncpa [#allocation3], 0
    %18 = vsyncpa [#allocation5], 0
    %19 = vsyncpa [#allocation8], 0
    %20 = vsyncpa [#allocation11], 0
    %21 = vsyncpa [#allocation14], 0
    // Predicated region
    $region2: #{vae_forward.1} parent=1 // pred_check
      _
    $region3: #{vae_forward.1} parent=1 // pred_check_branch
      %23 = sbr.rel (0) target = $region5
    $region4: #{vae_forward.1} parent=1 // pred_region
      _
    $region5: #{vae_forward.1} parent=1 // pred_fallthru
      _
    // Predicated region
    $region6: #{vae_forward.1} parent=1 // pred_check
      _
    $region7: #{vae_forward.1} parent=1 // pred_check_branch
      %25 = sbr.rel (0) target = $region9
    $region8: #{vae_forward.1} parent=1 // pred_region
      _
    $region9: #{vae_forward.1} parent=1 // pred_fallthru
      _
    // Predicated region
    $region10: #{vae_forward.1} parent=1 // pred_check
      _
    $region11: #{vae_forward.1} parent=1 // pred_check_branch
      %27 = sbr.rel (0) target = $region13
    $region12: #{vae_forward.1} parent=1 // pred_region
      %s29 = ssub.s32 20480, 20480
      %30 = vsyncadd [#allocation3], %s29
      %s31 = sshll.u32 [#allocation2], 4
      %s32 = int_to_ptr.vmem [resolvable:$true] %s31
      %37 = dma.hbm_to_vmem [thread:$0]  %s2, 20480, %s32, [#allocation3], 256, 256, 16
    $region13: #{vae_forward.1} parent=1 // pred_fallthru
      _
    // Predicated region
    $region14: #{vae_forward.1} parent=1 // pred_check
      _
    $region15: #{vae_forward.1} parent=1 // pred_check_branch
      %39 = sbr.rel (0) target = $region17
    $region16: #{vae_forward.1} parent=1 // pred_region
      %s41 = ssub.s32 64, 64
      %42 = vsyncadd [#allocation5], %s41
      %s44 = sshll.u32 [#allocation4], 4
      %s45 = int_to_ptr.vmem [resolvable:$true] %s44
      %47 = dma.hbm_to_vmem [thread:$0]  %s3, 64, %s45, [#allocation5]
    $region17: #{vae_forward.1} parent=1 // pred_fallthru
      _
    // Predicated region
    $region18: #{vae_forward.1} parent=1 // pred_check
      _
    $region19: #{vae_forward.1} parent=1 // pred_check_branch
      %49 = sbr.rel (0) target = $region21
    $region20: #{vae_forward.1} parent=1 // pred_region
      %s51 = ssub.s32 4096, 4096
      %52 = vsyncadd [#allocation5], %s51
      %s53 = sshll.u32 [#allocation6], 4
      %s54 = int_to_ptr.vmem [resolvable:$true] %s53
      %59 = dma.hbm_to_vmem [thread:$0]  %s4, 4096, %s54, [#allocation5], 64, 64, 4
    $region21: #{vae_forward.1} parent=1 // pred_fallthru
      _
    // Predicated region
    $region22: #{vae_forward.1} parent=1 // pred_check
      _
    $region23: #{vae_forward.1} parent=1 // pred_check_branch
      %61 = sbr.rel (0) target = $region25
    $region24: #{vae_forward.1} parent=1 // pred_region
      %s63 = ssub.s32 16, 16
      %64 = vsyncadd [#allocation8], %s63
      %s66 = sshll.u32 [#allocation7], 4
      %s67 = int_to_ptr.vmem [resolvable:$true] %s66
      %69 = dma.hbm_to_vmem [thread:$0]  %s5, 16, %s67, [#allocation8]
    $region25: #{vae_forward.1} parent=1 // pred_fallthru
      _
    // Predicated region
    $region26: #{vae_forward.1} parent=1 // pred_check
      _
    $region27: #{vae_forward.1} parent=1 // pred_check_branch
      %71 = sbr.rel (0) target = $region29
    $region28: #{vae_forward.1} parent=1 // pred_region
      %s73 = ssub.s32 4096, 4096
      %74 = vsyncadd [#allocation8], %s73
      %s75 = sshll.u32 [#allocation9], 4
      %s76 = int_to_ptr.vmem [resolvable:$true] %s75
      %81 = dma.hbm_to_vmem [thread:$0]  %s6, 4096, %s76, [#allocation8], 256, 256, 16
    $region29: #{vae_forward.1} parent=1 // pred_fallthru
      _
    // Predicated region
    $region30: #{vae_forward.1} parent=1 // pred_check
      _
    $region31: #{vae_forward.1} parent=1 // pred_check_branch
      %83 = sbr.rel (0) target = $region33
    $region32: #{vae_forward.1} parent=1 // pred_region
      %s85 = ssub.s32 64, 64
      %86 = vsyncadd [#allocation11], %s85
      %s88 = sshll.u32 [#allocation10], 4
      %s89 = int_to_ptr.vmem [resolvable:$true] %s88
      %91 = dma.hbm_to_vmem [thread:$0]  %s7, 64, %s89, [#allocation11]
    $region33: #{vae_forward.1} parent=1 // pred_fallthru
      _
    // Predicated region
    $region34: #{vae_forward.1} parent=1 // pred_check
      _
    $region35: #{vae_forward.1} parent=1 // pred_check_branch
      %93 = sbr.rel (0) target = $region37
    $region36: #{vae_forward.1} parent=1 // pred_region
      %s95 = ssub.s32 40960, 40960
      %96 = vsyncadd [#allocation11], %s95
      %s97 = sshll.u32 [#allocation12], 4
      %s98 = int_to_ptr.vmem [resolvable:$true] %s97
      %103 = dma.hbm_to_vmem [thread:$0]  %s8, 40960, %s98, [#allocation11], 640, 640, 40
    $region37: #{vae_forward.1} parent=1 // pred_fallthru
      _
    // Predicated region
    $region38: #{vae_forward.1} parent=1 // pred_check
      _
    $region39: #{vae_forward.1} parent=1 // pred_check_branch
      %105 = sbr.rel (0) target = $region41
    $region40: #{vae_forward.1} parent=1 // pred_region
      %s107 = ssub.s32 160, 160
      %108 = vsyncadd [#allocation14], %s107
      %s110 = sshll.u32 [#allocation13], 4
      %s111 = int_to_ptr.vmem [resolvable:$true] %s110
      %113 = dma.hbm_to_vmem [thread:$0]  %s9, 160, %s111, [#allocation14]
    $region41: #{vae_forward.1} parent=1 // pred_fallthru
      _
    // Predicated region
    $region42: #{vae_forward.1} parent=1 // pred_check
      _
    $region43: #{vae_forward.1} parent=1 // pred_check_branch
      %115 = sbr.rel (0) target = $region45
    $region44: #{vae_forward.1} parent=1 // pred_region
      %116 = dma.done [#allocation3], 20480
    $region45: #{vae_forward.1} parent=1 // pred_fallthru
      _
    // Predicated region
    $region46: #{vae_forward.1} parent=1 // pred_check
      _
    $region47: #{vae_forward.1} parent=1 // pred_check_branch
      %118 = sbr.rel (0) target = $region49
    $region48: #{vae_forward.1} parent=1 // pred_region
      %119 = dma.done [#allocation5], 64
    $region49: #{vae_forward.1} parent=1 // pred_fallthru
      _
    // Predicated region
    $region50: #{vae_forward.1} parent=1 // pred_check
      _
    $region51: #{vae_forward.1} parent=1 // pred_check_branch
      %121 = sbr.rel (0) target = $region53
    $region52: #{vae_forward.1} parent=1 // pred_region
      %122 = dma.done [#allocation5], 4096
    $region53: #{vae_forward.1} parent=1 // pred_fallthru
      _
    // Predicated region
    $region54: #{vae_forward.1} parent=1 // pred_check
      _
    $region55: #{vae_forward.1} parent=1 // pred_check_branch
      %124 = sbr.rel (0) target = $region57
    $region56: #{vae_forward.1} parent=1 // pred_region
      %125 = dma.done [#allocation8], 16
    $region57: #{vae_forward.1} parent=1 // pred_fallthru
      _
    // Predicated region
    $region58: #{vae_forward.1} parent=1 // pred_check
      _
    $region59: #{vae_forward.1} parent=1 // pred_check_branch
      %127 = sbr.rel (0) target = $region61
    $region60: #{vae_forward.1} parent=1 // pred_region
      %128 = dma.done [#allocation8], 4096
    $region61: #{vae_forward.1} parent=1 // pred_fallthru
      _
    // Predicated region
    $region62: #{vae_forward.1} parent=1 // pred_check
      _
    $region63: #{vae_forward.1} parent=1 // pred_check_branch
      %130 = sbr.rel (0) target = $region65
    $region64: #{vae_forward.1} parent=1 // pred_region
      %131 = dma.done [#allocation11], 64
    $region65: #{vae_forward.1} parent=1 // pred_fallthru
      _
    // Predicated region
    $region66: #{vae_forward.1} parent=1 // pred_check
      _
    $region67: #{vae_forward.1} parent=1 // pred_check_branch
      %133 = sbr.rel (0) target = $region69
    $region68: #{vae_forward.1} parent=1 // pred_region
      %134 = dma.done [#allocation11], 40960
    $region69: #{vae_forward.1} parent=1 // pred_fallthru
      _
    // Predicated region
    $region70: #{vae_forward.1} parent=1 // pred_check
      _
    $region71: #{vae_forward.1} parent=1 // pred_check_branch
      %136 = sbr.rel (0) target = $region73
    $region72: #{vae_forward.1} parent=1 // pred_region
      %137 = dma.done [#allocation14], 160
    $region73: #{vae_forward.1} parent=1 // pred_fallthru
      _
    %v139 = vld [vmem:[%s0] sm:$0xff]
    %v140 = vld [vmem:[%s0 + $0x8] sm:$0xff]
    %v141 = vld [vmem:[%s0 + $0x10] sm:$0xf]
    %v142 = vld [vmem:[%s0 + $0x14] sm:$0xff]
    %v143 = vld [vmem:[%s0 + $0x1c] sm:$0xff]
    %v144 = vld [vmem:[%s0 + $0x24] sm:$0xf]
    %v145 = vld [vmem:[#allocation2] sm:$0xff]
    %v146 = vld [vmem:[#allocation2 + $0x8] sm:$0xff]
    %v147 = vld [vmem:[#allocation2 + $0x10] sm:$0xff]
    %v148 = vld [vmem:[#allocation2 + $0x18] sm:$0xff]
    %v149 = vld [vmem:[#allocation2 + $0x20] sm:$0xff]
    %v150 = vld [vmem:[#allocation2 + $0x28] sm:$0xff]
    %v151 = vld [vmem:[#allocation2 + $0x30] sm:$0xff]
    %v152 = vld [vmem:[#allocation2 + $0x38] sm:$0xff]
    %v153 = vld [vmem:[#allocation2 + $0x40] sm:$0xff]
    %v154 = vld [vmem:[#allocation2 + $0x48] sm:$0xff]
    %v155 = vld [vmem:[#allocation2 + $0x50] sm:$0xff]
    %v156 = vld [vmem:[#allocation2 + $0x58] sm:$0xff]
    %v157 = vld [vmem:[#allocation2 + $0x60] sm:$0xff]
    %v158 = vld [vmem:[#allocation2 + $0x68] sm:$0xff]
    %v159 = vld [vmem:[#allocation2 + $0x70] sm:$0xff]
    %v160 = vld [vmem:[#allocation2 + $0x78] sm:$0xff]
    %v161 = vld [vmem:[#allocation2 + $0x80] sm:$0xff]
    %v162 = vld [vmem:[#allocation2 + $0x88] sm:$0xff]
    %v163 = vld [vmem:[#allocation2 + $0x90] sm:$0xff]
    %v164 = vld [vmem:[#allocation2 + $0x98] sm:$0xff]
    %v165 = vld [vmem:[#allocation2 + $0xa0] sm:$0xff]
    %v166 = vld [vmem:[#allocation2 + $0xa8] sm:$0xff]
    %v167 = vld [vmem:[#allocation2 + $0xb0] sm:$0xff]
    %v168 = vld [vmem:[#allocation2 + $0xb8] sm:$0xff]
    %v169 = vld [vmem:[#allocation2 + $0xc0] sm:$0xff]
    %v170 = vld [vmem:[#allocation2 + $0xc8] sm:$0xff]
    %v171 = vld [vmem:[#allocation2 + $0xd0] sm:$0xff]
    %v172 = vld [vmem:[#allocation2 + $0xd8] sm:$0xff]
    %v173 = vld [vmem:[#allocation2 + $0xe0] sm:$0xff]
    %v174 = vld [vmem:[#allocation2 + $0xe8] sm:$0xff]
    %v175 = vld [vmem:[#allocation2 + $0xf0] sm:$0xff]
    %v176 = vld [vmem:[#allocation2 + $0xf8] sm:$0xff]
    %v177 = vld [vmem:[#allocation2 + $0x100] sm:$0xff]
    %v178 = vld [vmem:[#allocation2 + $0x108] sm:$0xff]
    %v179 = vld [vmem:[#allocation2 + $0x110] sm:$0xff]
    %v180 = vld [vmem:[#allocation2 + $0x118] sm:$0xff]
    %v181 = vld [vmem:[#allocation2 + $0x120] sm:$0xff]
    %v182 = vld [vmem:[#allocation2 + $0x128] sm:$0xff]
    %v183 = vld [vmem:[#allocation2 + $0x130] sm:$0xff]
    %v184 = vld [vmem:[#allocation2 + $0x138] sm:$0xff]
    %v185 = vld [vmem:[#allocation2 + $0x140] sm:$0xff]
    %v186 = vld [vmem:[#allocation2 + $0x148] sm:$0xff]
    %v187 = vld [vmem:[#allocation2 + $0x150] sm:$0xff]
    %v188 = vld [vmem:[#allocation2 + $0x158] sm:$0xff]
    %v189 = vld [vmem:[#allocation2 + $0x160] sm:$0xff]
    %v190 = vld [vmem:[#allocation2 + $0x168] sm:$0xff]
    %v191 = vld [vmem:[#allocation2 + $0x170] sm:$0xff]
    %v192 = vld [vmem:[#allocation2 + $0x178] sm:$0xff]
    %v193 = vld [vmem:[#allocation2 + $0x180] sm:$0xff]
    %v194 = vld [vmem:[#allocation2 + $0x188] sm:$0xff]
    %v195 = vld [vmem:[#allocation2 + $0x190] sm:$0xff]
    %v196 = vld [vmem:[#allocation2 + $0x198] sm:$0xff]
    %v197 = vld [vmem:[#allocation2 + $0x1a0] sm:$0xff]
    %v198 = vld [vmem:[#allocation2 + $0x1a8] sm:$0xff]
    %v199 = vld [vmem:[#allocation2 + $0x1b0] sm:$0xff]
    %v200 = vld [vmem:[#allocation2 + $0x1b8] sm:$0xff]
    %v201 = vld [vmem:[#allocation2 + $0x1c0] sm:$0xff]
    %v202 = vld [vmem:[#allocation2 + $0x1c8] sm:$0xff]
    %v203 = vld [vmem:[#allocation2 + $0x1d0] sm:$0xff]
    %v204 = vld [vmem:[#allocation2 + $0x1d8] sm:$0xff]
    %v205 = vld [vmem:[#allocation2 + $0x1e0] sm:$0xff]
    %v206 = vld [vmem:[#allocation2 + $0x1e8] sm:$0xff]
    %v207 = vld [vmem:[#allocation2 + $0x1f0] sm:$0xff]
    %v208 = vld [vmem:[#allocation2 + $0x1f8] sm:$0xff]
    %v209 = vld [vmem:[#allocation2 + $0x200] sm:$0xff]
    %v210 = vld [vmem:[#allocation2 + $0x208] sm:$0xff]
    %v211 = vld [vmem:[#allocation2 + $0x210] sm:$0xff]
    %v212 = vld [vmem:[#allocation2 + $0x218] sm:$0xff]
    %v213 = vld [vmem:[#allocation2 + $0x220] sm:$0xff]
    %v214 = vld [vmem:[#allocation2 + $0x228] sm:$0xff]
    %v215 = vld [vmem:[#allocation2 + $0x230] sm:$0xff]
    %v216 = vld [vmem:[#allocation2 + $0x238] sm:$0xff]
    %v217 = vld [vmem:[#allocation2 + $0x240] sm:$0xff]
    %v218 = vld [vmem:[#allocation2 + $0x248] sm:$0xff]
    %v219 = vld [vmem:[#allocation2 + $0x250] sm:$0xff]
    %v220 = vld [vmem:[#allocation2 + $0x258] sm:$0xff]
    %v221 = vld [vmem:[#allocation2 + $0x260] sm:$0xff]
    %v222 = vld [vmem:[#allocation2 + $0x268] sm:$0xff]
    %v223 = vld [vmem:[#allocation2 + $0x270] sm:$0xff]
    %v224 = vld [vmem:[#allocation2 + $0x278] sm:$0xff]
    %v225 = vld [vmem:[#allocation2 + $0x280] sm:$0xff]
    %v226 = vld [vmem:[#allocation2 + $0x288] sm:$0xff]
    %v227 = vld [vmem:[#allocation2 + $0x290] sm:$0xff]
    %v228 = vld [vmem:[#allocation2 + $0x298] sm:$0xff]
    %v229 = vld [vmem:[#allocation2 + $0x2a0] sm:$0xff]
    %v230 = vld [vmem:[#allocation2 + $0x2a8] sm:$0xff]
    %v231 = vld [vmem:[#allocation2 + $0x2b0] sm:$0xff]
    %v232 = vld [vmem:[#allocation2 + $0x2b8] sm:$0xff]
    %v233 = vld [vmem:[#allocation2 + $0x2c0] sm:$0xff]
    %v234 = vld [vmem:[#allocation2 + $0x2c8] sm:$0xff]
    %v235 = vld [vmem:[#allocation2 + $0x2d0] sm:$0xff]
    %v236 = vld [vmem:[#allocation2 + $0x2d8] sm:$0xff]
    %v237 = vld [vmem:[#allocation2 + $0x2e0] sm:$0xff]
    %v238 = vld [vmem:[#allocation2 + $0x2e8] sm:$0xff]
    %v239 = vld [vmem:[#allocation2 + $0x2f0] sm:$0xff]
    %v240 = vld [vmem:[#allocation2 + $0x2f8] sm:$0xff]
    %v241 = vld [vmem:[#allocation2 + $0x300] sm:$0xff]
    %v242 = vld [vmem:[#allocation2 + $0x308] sm:$0xff]
    %v243 = vld [vmem:[#allocation2 + $0x310] sm:$0xff]
    %v244 = vld [vmem:[#allocation2 + $0x318] sm:$0xff]
    %v245 = vld [vmem:[#allocation2 + $0x320] sm:$0xff]
    %v246 = vld [vmem:[#allocation2 + $0x328] sm:$0xff]
    %v247 = vld [vmem:[#allocation2 + $0x330] sm:$0xff]
    %v248 = vld [vmem:[#allocation2 + $0x338] sm:$0xff]
    %v249 = vld [vmem:[#allocation2 + $0x340] sm:$0xff]
    %v250 = vld [vmem:[#allocation2 + $0x348] sm:$0xff]
    %v251 = vld [vmem:[#allocation2 + $0x350] sm:$0xff]
    %v252 = vld [vmem:[#allocation2 + $0x358] sm:$0xff]
    %v253 = vld [vmem:[#allocation2 + $0x360] sm:$0xff]
    %v254 = vld [vmem:[#allocation2 + $0x368] sm:$0xff]
    %v255 = vld [vmem:[#allocation2 + $0x370] sm:$0xff]
    %v256 = vld [vmem:[#allocation2 + $0x378] sm:$0xff]
    %v257 = vld [vmem:[#allocation2 + $0x380] sm:$0xff]
    %v258 = vld [vmem:[#allocation2 + $0x388] sm:$0xff]
    %v259 = vld [vmem:[#allocation2 + $0x390] sm:$0xff]
    %v260 = vld [vmem:[#allocation2 + $0x398] sm:$0xff]
    %v261 = vld [vmem:[#allocation2 + $0x3a0] sm:$0xff]
    %v262 = vld [vmem:[#allocation2 + $0x3a8] sm:$0xff]
    %v263 = vld [vmem:[#allocation2 + $0x3b0] sm:$0xff]
    %v264 = vld [vmem:[#allocation2 + $0x3b8] sm:$0xff]
    %v265 = vld [vmem:[#allocation2 + $0x3c0] sm:$0xff]
    %v266 = vld [vmem:[#allocation2 + $0x3c8] sm:$0xff]
    %v267 = vld [vmem:[#allocation2 + $0x3d0] sm:$0xff]
    %v268 = vld [vmem:[#allocation2 + $0x3d8] sm:$0xff]
    %v269 = vld [vmem:[#allocation2 + $0x3e0] sm:$0xff]
    %v270 = vld [vmem:[#allocation2 + $0x3e8] sm:$0xff]
    %v271 = vld [vmem:[#allocation2 + $0x3f0] sm:$0xff]
    %v272 = vld [vmem:[#allocation2 + $0x3f8] sm:$0xff]
    %v273 = vld [vmem:[#allocation2 + $0x400] sm:$0xff]
    %v274 = vld [vmem:[#allocation2 + $0x408] sm:$0xff]
    %v275 = vld [vmem:[#allocation2 + $0x410] sm:$0xff]
    %v276 = vld [vmem:[#allocation2 + $0x418] sm:$0xff]
    %v277 = vld [vmem:[#allocation2 + $0x420] sm:$0xff]
    %v278 = vld [vmem:[#allocation2 + $0x428] sm:$0xff]
    %v279 = vld [vmem:[#allocation2 + $0x430] sm:$0xff]
    %v280 = vld [vmem:[#allocation2 + $0x438] sm:$0xff]
    %v281 = vld [vmem:[#allocation2 + $0x440] sm:$0xff]
    %v282 = vld [vmem:[#allocation2 + $0x448] sm:$0xff]
    %v283 = vld [vmem:[#allocation2 + $0x450] sm:$0xff]
    %v284 = vld [vmem:[#allocation2 + $0x458] sm:$0xff]
    %v285 = vld [vmem:[#allocation2 + $0x460] sm:$0xff]
    %v286 = vld [vmem:[#allocation2 + $0x468] sm:$0xff]
    %v287 = vld [vmem:[#allocation2 + $0x470] sm:$0xff]
    %v288 = vld [vmem:[#allocation2 + $0x478] sm:$0xff]
    %v289 = vld [vmem:[#allocation2 + $0x480] sm:$0xff]
    %v290 = vld [vmem:[#allocation2 + $0x488] sm:$0xff]
    %v291 = vld [vmem:[#allocation2 + $0x490] sm:$0xff]
    %v292 = vld [vmem:[#allocation2 + $0x498] sm:$0xff]
    %v293 = vld [vmem:[#allocation2 + $0x4a0] sm:$0xff]
    %v294 = vld [vmem:[#allocation2 + $0x4a8] sm:$0xff]
    %v295 = vld [vmem:[#allocation2 + $0x4b0] sm:$0xff]
    %v296 = vld [vmem:[#allocation2 + $0x4b8] sm:$0xff]
    %v297 = vld [vmem:[#allocation2 + $0x4c0] sm:$0xff]
    %v298 = vld [vmem:[#allocation2 + $0x4c8] sm:$0xff]
    %v299 = vld [vmem:[#allocation2 + $0x4d0] sm:$0xff]
    %v300 = vld [vmem:[#allocation2 + $0x4d8] sm:$0xff]
    %v301 = vld [vmem:[#allocation2 + $0x4e0] sm:$0xff]
    %v302 = vld [vmem:[#allocation2 + $0x4e8] sm:$0xff]
    %v303 = vld [vmem:[#allocation2 + $0x4f0] sm:$0xff]
    %v304 = vld [vmem:[#allocation2 + $0x4f8] sm:$0xff]
    %v305 = vld [vmem:[#allocation4] sm:$0xf]
    %v307 = vlaneseq
    %v308 = vshrl.u32 %v307, 7
    %v309 = vsub.s32 0, %v308
    %v310 = vrot.slane %v305, %v309
    %v311 = vlaneseq
    %v312 = vshrl.u32 %v311, 7
    %v313 = vsub.s32 1, %v312
    %v314 = vrot.slane %v305, %v313
    %v315 = vlaneseq
    %v316 = vshrl.u32 %v315, 7
    %v317 = vsub.s32 2, %v316
    %v318 = vrot.slane %v305, %v317
    %v319 = vlaneseq
    %v320 = vshrl.u32 %v319, 7
    %v321 = vsub.s32 3, %v320
    %v322 = vrot.slane %v305, %v321
    %v333 = vunpack.c.l.b16 %v139
    %v334 = vunpack.c.h.b16 %v139
    %v335 = vunpack.c.l.b16 %v140
    %v336 = vunpack.c.h.b16 %v140
    %v337 = vunpack.c.l.b16 %v141
    %v338 = vunpack.c.l.b16 %v142
    %v339 = vunpack.c.h.b16 %v142
    %v340 = vunpack.c.l.b16 %v143
    %v341 = vunpack.c.h.b16 %v143
    %v342 = vunpack.c.l.b16 %v144
    %v343 = vpack.c.b16 %v338, %v333
    %v344 = vpack.c.b16 %v339, %v334
    %v345 = vpack.c.b16 %v340, %v335
    %v346 = vpack.c.b16 %v341, %v336
    %v347 = vpack.c.b16 %v342, %v337
    %v513 = vunpack.c.l.b16 %v145
    %v514 = vunpack.c.h.b16 %v145
    %v515 = vunpack.c.l.b16 %v146
    %v516 = vunpack.c.h.b16 %v146
    %v517 = vunpack.c.l.b16 %v147
    %v518 = vunpack.c.h.b16 %v147
    %v519 = vunpack.c.l.b16 %v148
    %v520 = vunpack.c.h.b16 %v148
    %v521 = vunpack.c.l.b16 %v149
    %v522 = vunpack.c.h.b16 %v149
    %v523 = vunpack.c.l.b16 %v150
    %v524 = vunpack.c.h.b16 %v150
    %v525 = vunpack.c.l.b16 %v151
    %v526 = vunpack.c.h.b16 %v151
    %v527 = vunpack.c.l.b16 %v152
    %v528 = vunpack.c.h.b16 %v152
    %v529 = vunpack.c.l.b16 %v153
    %v530 = vunpack.c.h.b16 %v153
    %v531 = vunpack.c.l.b16 %v154
    %v532 = vunpack.c.h.b16 %v154
    %v533 = vunpack.c.l.b16 %v155
    %v534 = vunpack.c.h.b16 %v155
    %v535 = vunpack.c.l.b16 %v156
    %v536 = vunpack.c.h.b16 %v156
    %v537 = vunpack.c.l.b16 %v157
    %v538 = vunpack.c.h.b16 %v157
    %v539 = vunpack.c.l.b16 %v158
    %v540 = vunpack.c.h.b16 %v158
    %v541 = vunpack.c.l.b16 %v159
    %v542 = vunpack.c.h.b16 %v159
    %v543 = vunpack.c.l.b16 %v160
    %v544 = vunpack.c.h.b16 %v160
    %v545 = vunpack.c.l.b16 %v161
    %v546 = vunpack.c.h.b16 %v161
    %v547 = vunpack.c.l.b16 %v162
    %v548 = vunpack.c.h.b16 %v162
    %v549 = vunpack.c.l.b16 %v163
    %v550 = vunpack.c.h.b16 %v163
    %v551 = vunpack.c.l.b16 %v164
    %v552 = vunpack.c.h.b16 %v164
    %v553 = vunpack.c.l.b16 %v165
    %v554 = vunpack.c.h.b16 %v165
    %v555 = vunpack.c.l.b16 %v166
    %v556 = vunpack.c.h.b16 %v166
    %v557 = vunpack.c.l.b16 %v167
    %v558 = vunpack.c.h.b16 %v167
    %v559 = vunpack.c.l.b16 %v168
    %v560 = vunpack.c.h.b16 %v168
    %v561 = vunpack.c.l.b16 %v169
    %v562 = vunpack.c.h.b16 %v169
    %v563 = vunpack.c.l.b16 %v170
    %v564 = vunpack.c.h.b16 %v170
    %v565 = vunpack.c.l.b16 %v171
    %v566 = vunpack.c.h.b16 %v171
    %v567 = vunpack.c.l.b16 %v172
    %v568 = vunpack.c.h.b16 %v172
    %v569 = vunpack.c.l.b16 %v173
    %v570 = vunpack.c.h.b16 %v173
    %v571 = vunpack.c.l.b16 %v174
    %v572 = vunpack.c.h.b16 %v174
    %v573 = vunpack.c.l.b16 %v175
    %v574 = vunpack.c.h.b16 %v175
    %v575 = vunpack.c.l.b16 %v176
    %v576 = vunpack.c.h.b16 %v176
    %v577 = vunpack.c.l.b16 %v177
    %v578 = vunpack.c.h.b16 %v177
    %v579 = vunpack.c.l.b16 %v178
    %v580 = vunpack.c.h.b16 %v178
    %v581 = vunpack.c.l.b16 %v179
    %v582 = vunpack.c.h.b16 %v179
    %v583 = vunpack.c.l.b16 %v180
    %v584 = vunpack.c.h.b16 %v180
    %v585 = vunpack.c.l.b16 %v181
    %v586 = vunpack.c.h.b16 %v181
    %v587 = vunpack.c.l.b16 %v182
    %v588 = vunpack.c.h.b16 %v182
    %v589 = vunpack.c.l.b16 %v183
    %v590 = vunpack.c.h.b16 %v183
    %v591 = vunpack.c.l.b16 %v184
    %v592 = vunpack.c.h.b16 %v184
    %v593 = vunpack.c.l.b16 %v185
    %v594 = vunpack.c.h.b16 %v185
    %v595 = vunpack.c.l.b16 %v186
    %v596 = vunpack.c.h.b16 %v186
    %v597 = vunpack.c.l.b16 %v187
    %v598 = vunpack.c.h.b16 %v187
    %v599 = vunpack.c.l.b16 %v188
    %v600 = vunpack.c.h.b16 %v188
    %v601 = vunpack.c.l.b16 %v189
    %v602 = vunpack.c.h.b16 %v189
    %v603 = vunpack.c.l.b16 %v190
    %v604 = vunpack.c.h.b16 %v190
    %v605 = vunpack.c.l.b16 %v191
    %v606 = vunpack.c.h.b16 %v191
    %v607 = vunpack.c.l.b16 %v192
    %v608 = vunpack.c.h.b16 %v192
    %v609 = vunpack.c.l.b16 %v193
    %v610 = vunpack.c.h.b16 %v193
    %v611 = vunpack.c.l.b16 %v194
    %v612 = vunpack.c.h.b16 %v194
    %v613 = vunpack.c.l.b16 %v195
    %v614 = vunpack.c.h.b16 %v195
    %v615 = vunpack.c.l.b16 %v196
    %v616 = vunpack.c.h.b16 %v196
    %v617 = vunpack.c.l.b16 %v197
    %v618 = vunpack.c.h.b16 %v197
    %v619 = vunpack.c.l.b16 %v198
    %v620 = vunpack.c.h.b16 %v198
    %v621 = vunpack.c.l.b16 %v199
    %v622 = vunpack.c.h.b16 %v199
    %v623 = vunpack.c.l.b16 %v200
    %v624 = vunpack.c.h.b16 %v200
    %v625 = vunpack.c.l.b16 %v201
    %v626 = vunpack.c.h.b16 %v201
    %v627 = vunpack.c.l.b16 %v202
    %v628 = vunpack.c.h.b16 %v202
    %v629 = vunpack.c.l.b16 %v203
    %v630 = vunpack.c.h.b16 %v203
    %v631 = vunpack.c.l.b16 %v204
    %v632 = vunpack.c.h.b16 %v204
    %v633 = vunpack.c.l.b16 %v205
    %v634 = vunpack.c.h.b16 %v205
    %v635 = vunpack.c.l.b16 %v206
    %v636 = vunpack.c.h.b16 %v206
    %v637 = vunpack.c.l.b16 %v207
    %v638 = vunpack.c.h.b16 %v207
    %v639 = vunpack.c.l.b16 %v208
    %v640 = vunpack.c.h.b16 %v208
    %v641 = vunpack.c.l.b16 %v209
    %v642 = vunpack.c.h.b16 %v209
    %v643 = vunpack.c.l.b16 %v210
    %v644 = vunpack.c.h.b16 %v210
    %v645 = vunpack.c.l.b16 %v211
    %v646 = vunpack.c.h.b16 %v211
    %v647 = vunpack.c.l.b16 %v212
    %v648 = vunpack.c.h.b16 %v212
    %v649 = vunpack.c.l.b16 %v213
    %v650 = vunpack.c.h.b16 %v213
    %v651 = vunpack.c.l.b16 %v214
    %v652 = vunpack.c.h.b16 %v214
    %v653 = vunpack.c.l.b16 %v215
    %v654 = vunpack.c.h.b16 %v215
    %v655 = vunpack.c.l.b16 %v216
    %v656 = vunpack.c.h.b16 %v216
    %v657 = vunpack.c.l.b16 %v217
    %v658 = vunpack.c.h.b16 %v217
    %v659 = vunpack.c.l.b16 %v218
    %v660 = vunpack.c.h.b16 %v218
    %v661 = vunpack.c.l.b16 %v219
    %v662 = vunpack.c.h.b16 %v219
    %v663 = vunpack.c.l.b16 %v220
    %v664 = vunpack.c.h.b16 %v220
    %v665 = vunpack.c.l.b16 %v221
    %v666 = vunpack.c.h.b16 %v221
    %v667 = vunpack.c.l.b16 %v222
    %v668 = vunpack.c.h.b16 %v222
    %v669 = vunpack.c.l.b16 %v223
    %v670 = vunpack.c.h.b16 %v223
    %v671 = vunpack.c.l.b16 %v224
    %v672 = vunpack.c.h.b16 %v224
    %v673 = vunpack.c.l.b16 %v225
    %v674 = vunpack.c.h.b16 %v225
    %v675 = vunpack.c.l.b16 %v226
    %v676 = vunpack.c.h.b16 %v226
    %v677 = vunpack.c.l.b16 %v227
    %v678 = vunpack.c.h.b16 %v227
    %v679 = vunpack.c.l.b16 %v228
    %v680 = vunpack.c.h.b16 %v228
    %v681 = vunpack.c.l.b16 %v229
    %v682 = vunpack.c.h.b16 %v229
    %v683 = vunpack.c.l.b16 %v230
    %v684 = vunpack.c.h.b16 %v230
    %v685 = vunpack.c.l.b16 %v231
    %v686 = vunpack.c.h.b16 %v231
    %v687 = vunpack.c.l.b16 %v232
    %v688 = vunpack.c.h.b16 %v232
    %v689 = vunpack.c.l.b16 %v233
    %v690 = vunpack.c.h.b16 %v233
    %v691 = vunpack.c.l.b16 %v234
    %v692 = vunpack.c.h.b16 %v234
    %v693 = vunpack.c.l.b16 %v235
    %v694 = vunpack.c.h.b16 %v235
    %v695 = vunpack.c.l.b16 %v236
    %v696 = vunpack.c.h.b16 %v236
    %v697 = vunpack.c.l.b16 %v237
    %v698 = vunpack.c.h.b16 %v237
    %v699 = vunpack.c.l.b16 %v238
    %v700 = vunpack.c.h.b16 %v238
    %v701 = vunpack.c.l.b16 %v239
    %v702 = vunpack.c.h.b16 %v239
    %v703 = vunpack.c.l.b16 %v240
    %v704 = vunpack.c.h.b16 %v240
    %v705 = vunpack.c.l.b16 %v241
    %v706 = vunpack.c.h.b16 %v241
    %v707 = vunpack.c.l.b16 %v242
    %v708 = vunpack.c.h.b16 %v242
    %v709 = vunpack.c.l.b16 %v243
    %v710 = vunpack.c.h.b16 %v243
    %v711 = vunpack.c.l.b16 %v244
    %v712 = vunpack.c.h.b16 %v244
    %v713 = vunpack.c.l.b16 %v245
    %v714 = vunpack.c.h.b16 %v245
    %v715 = vunpack.c.l.b16 %v246
    %v716 = vunpack.c.h.b16 %v246
    %v717 = vunpack.c.l.b16 %v247
    %v718 = vunpack.c.h.b16 %v247
    %v719 = vunpack.c.l.b16 %v248
    %v720 = vunpack.c.h.b16 %v248
    %v721 = vunpack.c.l.b16 %v249
    %v722 = vunpack.c.h.b16 %v249
    %v723 = vunpack.c.l.b16 %v250
    %v724 = vunpack.c.h.b16 %v250
    %v725 = vunpack.c.l.b16 %v251
    %v726 = vunpack.c.h.b16 %v251
    %v727 = vunpack.c.l.b16 %v252
    %v728 = vunpack.c.h.b16 %v252
    %v729 = vunpack.c.l.b16 %v253
    %v730 = vunpack.c.h.b16 %v253
    %v731 = vunpack.c.l.b16 %v254
    %v732 = vunpack.c.h.b16 %v254
    %v733 = vunpack.c.l.b16 %v255
    %v734 = vunpack.c.h.b16 %v255
    %v735 = vunpack.c.l.b16 %v256
    %v736 = vunpack.c.h.b16 %v256
    %v737 = vunpack.c.l.b16 %v257
    %v738 = vunpack.c.h.b16 %v257
    %v739 = vunpack.c.l.b16 %v258
    %v740 = vunpack.c.h.b16 %v258
    %v741 = vunpack.c.l.b16 %v259
    %v742 = vunpack.c.h.b16 %v259
    %v743 = vunpack.c.l.b16 %v260
    %v744 = vunpack.c.h.b16 %v260
    %v745 = vunpack.c.l.b16 %v261
    %v746 = vunpack.c.h.b16 %v261
    %v747 = vunpack.c.l.b16 %v262
    %v748 = vunpack.c.h.b16 %v262
    %v749 = vunpack.c.l.b16 %v263
    %v750 = vunpack.c.h.b16 %v263
    %v751 = vunpack.c.l.b16 %v264
    %v752 = vunpack.c.h.b16 %v264
    %v753 = vunpack.c.l.b16 %v265
    %v754 = vunpack.c.h.b16 %v265
    %v755 = vunpack.c.l.b16 %v266
    %v756 = vunpack.c.h.b16 %v266
    %v757 = vunpack.c.l.b16 %v267
    %v758 = vunpack.c.h.b16 %v267
    %v759 = vunpack.c.l.b16 %v268
    %v760 = vunpack.c.h.b16 %v268
    %v761 = vunpack.c.l.b16 %v269
    %v762 = vunpack.c.h.b16 %v269
    %v763 = vunpack.c.l.b16 %v270
    %v764 = vunpack.c.h.b16 %v270
    %v765 = vunpack.c.l.b16 %v271
    %v766 = vunpack.c.h.b16 %v271
    %v767 = vunpack.c.l.b16 %v272
    %v768 = vunpack.c.h.b16 %v272
    %v769 = vunpack.c.l.b16 %v273
    %v770 = vunpack.c.h.b16 %v273
    %v771 = vunpack.c.l.b16 %v274
    %v772 = vunpack.c.h.b16 %v274
    %v773 = vunpack.c.l.b16 %v275
    %v774 = vunpack.c.h.b16 %v275
    %v775 = vunpack.c.l.b16 %v276
    %v776 = vunpack.c.h.b16 %v276
    %v777 = vunpack.c.l.b16 %v277
    %v778 = vunpack.c.h.b16 %v277
    %v779 = vunpack.c.l.b16 %v278
    %v780 = vunpack.c.h.b16 %v278
    %v781 = vunpack.c.l.b16 %v279
    %v782 = vunpack.c.h.b16 %v279
    %v783 = vunpack.c.l.b16 %v280
    %v784 = vunpack.c.h.b16 %v280
    %v785 = vunpack.c.l.b16 %v281
    %v786 = vunpack.c.h.b16 %v281
    %v787 = vunpack.c.l.b16 %v282
    %v788 = vunpack.c.h.b16 %v282
    %v789 = vunpack.c.l.b16 %v283
    %v790 = vunpack.c.h.b16 %v283
    %v791 = vunpack.c.l.b16 %v284
    %v792 = vunpack.c.h.b16 %v284
    %v793 = vunpack.c.l.b16 %v285
    %v794 = vunpack.c.h.b16 %v285
    %v795 = vunpack.c.l.b16 %v286
    %v796 = vunpack.c.h.b16 %v286
    %v797 = vunpack.c.l.b16 %v287
    %v798 = vunpack.c.h.b16 %v287
    %v799 = vunpack.c.l.b16 %v288
    %v800 = vunpack.c.h.b16 %v288
    %v801 = vunpack.c.l.b16 %v289
    %v802 = vunpack.c.h.b16 %v289
    %v803 = vunpack.c.l.b16 %v290
    %v804 = vunpack.c.h.b16 %v290
    %v805 = vunpack.c.l.b16 %v291
    %v806 = vunpack.c.h.b16 %v291
    %v807 = vunpack.c.l.b16 %v292
    %v808 = vunpack.c.h.b16 %v292
    %v809 = vunpack.c.l.b16 %v293
    %v810 = vunpack.c.h.b16 %v293
    %v811 = vunpack.c.l.b16 %v294
    %v812 = vunpack.c.h.b16 %v294
    %v813 = vunpack.c.l.b16 %v295
    %v814 = vunpack.c.h.b16 %v295
    %v815 = vunpack.c.l.b16 %v296
    %v816 = vunpack.c.h.b16 %v296
    %v817 = vunpack.c.l.b16 %v297
    %v818 = vunpack.c.h.b16 %v297
    %v819 = vunpack.c.l.b16 %v298
    %v820 = vunpack.c.h.b16 %v298
    %v821 = vunpack.c.l.b16 %v299
    %v822 = vunpack.c.h.b16 %v299
    %v823 = vunpack.c.l.b16 %v300
    %v824 = vunpack.c.h.b16 %v300
    %v825 = vunpack.c.l.b16 %v301
    %v826 = vunpack.c.h.b16 %v301
    %v827 = vunpack.c.l.b16 %v302
    %v828 = vunpack.c.h.b16 %v302
    %v829 = vunpack.c.l.b16 %v303
    %v830 = vunpack.c.h.b16 %v303
    %v831 = vunpack.c.l.b16 %v304
    %v832 = vunpack.c.h.b16 %v304
    %v833 = vpack.c.b16 %v517, %v513
    %v834 = vpack.c.b16 %v518, %v514
    %v835 = vpack.c.b16 %v519, %v515
    %v836 = vpack.c.b16 %v520, %v516
    %v837 = vpack.c.b16 %v525, %v521
    %v838 = vpack.c.b16 %v526, %v522
    %v839 = vpack.c.b16 %v527, %v523
    %v840 = vpack.c.b16 %v528, %v524
    %v841 = vpack.c.b16 %v533, %v529
    %v842 = vpack.c.b16 %v534, %v530
    %v843 = vpack.c.b16 %v535, %v531
    %v844 = vpack.c.b16 %v536, %v532
    %v845 = vpack.c.b16 %v541, %v537
    %v846 = vpack.c.b16 %v542, %v538
    %v847 = vpack.c.b16 %v543, %v539
    %v848 = vpack.c.b16 %v544, %v540
    %v849 = vpack.c.b16 %v549, %v545
    %v850 = vpack.c.b16 %v550, %v546
    %v851 = vpack.c.b16 %v551, %v547
    %v852 = vpack.c.b16 %v552, %v548
    %v853 = vpack.c.b16 %v557, %v553
    %v854 = vpack.c.b16 %v558, %v554
    %v855 = vpack.c.b16 %v559, %v555
    %v856 = vpack.c.b16 %v560, %v556
    %v857 = vpack.c.b16 %v565, %v561
    %v858 = vpack.c.b16 %v566, %v562
    %v859 = vpack.c.b16 %v567, %v563
    %v860 = vpack.c.b16 %v568, %v564
    %v861 = vpack.c.b16 %v573, %v569
    %v862 = vpack.c.b16 %v574, %v570
    %v863 = vpack.c.b16 %v575, %v571
    %v864 = vpack.c.b16 %v576, %v572
    %v865 = vpack.c.b16 %v581, %v577
    %v866 = vpack.c.b16 %v582, %v578
    %v867 = vpack.c.b16 %v583, %v579
    %v868 = vpack.c.b16 %v584, %v580
    %v869 = vpack.c.b16 %v589, %v585
    %v870 = vpack.c.b16 %v590, %v586
    %v871 = vpack.c.b16 %v591, %v587
    %v872 = vpack.c.b16 %v592, %v588
    %v873 = vpack.c.b16 %v597, %v593
    %v874 = vpack.c.b16 %v598, %v594
    %v875 = vpack.c.b16 %v599, %v595
    %v876 = vpack.c.b16 %v600, %v596
    %v877 = vpack.c.b16 %v605, %v601
    %v878 = vpack.c.b16 %v606, %v602
    %v879 = vpack.c.b16 %v607, %v603
    %v880 = vpack.c.b16 %v608, %v604
    %v881 = vpack.c.b16 %v613, %v609
    %v882 = vpack.c.b16 %v614, %v610
    %v883 = vpack.c.b16 %v615, %v611
    %v884 = vpack.c.b16 %v616, %v612
    %v885 = vpack.c.b16 %v621, %v617
    %v886 = vpack.c.b16 %v622, %v618
    %v887 = vpack.c.b16 %v623, %v619
    %v888 = vpack.c.b16 %v624, %v620
    %v889 = vpack.c.b16 %v629, %v625
    %v890 = vpack.c.b16 %v630, %v626
    %v891 = vpack.c.b16 %v631, %v627
    %v892 = vpack.c.b16 %v632, %v628
    %v893 = vpack.c.b16 %v637, %v633
    %v894 = vpack.c.b16 %v638, %v634
    %v895 = vpack.c.b16 %v639, %v635
    %v896 = vpack.c.b16 %v640, %v636
    %v897 = vpack.c.b16 %v645, %v641
    %v898 = vpack.c.b16 %v646, %v642
    %v899 = vpack.c.b16 %v647, %v643
    %v900 = vpack.c.b16 %v648, %v644
    %v901 = vpack.c.b16 %v653, %v649
    %v902 = vpack.c.b16 %v654, %v650
    %v903 = vpack.c.b16 %v655, %v651
    %v904 = vpack.c.b16 %v656, %v652
    %v905 = vpack.c.b16 %v661, %v657
    %v906 = vpack.c.b16 %v662, %v658
    %v907 = vpack.c.b16 %v663, %v659
    %v908 = vpack.c.b16 %v664, %v660
    %v909 = vpack.c.b16 %v669, %v665
    %v910 = vpack.c.b16 %v670, %v666
    %v911 = vpack.c.b16 %v671, %v667
    %v912 = vpack.c.b16 %v672, %v668
    %v913 = vpack.c.b16 %v677, %v673
    %v914 = vpack.c.b16 %v678, %v674
    %v915 = vpack.c.b16 %v679, %v675
    %v916 = vpack.c.b16 %v680, %v676
    %v917 = vpack.c.b16 %v685, %v681
    %v918 = vpack.c.b16 %v686, %v682
    %v919 = vpack.c.b16 %v687, %v683
    %v920 = vpack.c.b16 %v688, %v684
    %v921 = vpack.c.b16 %v693, %v689
    %v922 = vpack.c.b16 %v694, %v690
    %v923 = vpack.c.b16 %v695, %v691
    %v924 = vpack.c.b16 %v696, %v692
    %v925 = vpack.c.b16 %v701, %v697
    %v926 = vpack.c.b16 %v702, %v698
    %v927 = vpack.c.b16 %v703, %v699
    %v928 = vpack.c.b16 %v704, %v700
    %v929 = vpack.c.b16 %v709, %v705
    %v930 = vpack.c.b16 %v710, %v706
    %v931 = vpack.c.b16 %v711, %v707
    %v932 = vpack.c.b16 %v712, %v708
    %v933 = vpack.c.b16 %v717, %v713
    %v934 = vpack.c.b16 %v718, %v714
    %v935 = vpack.c.b16 %v719, %v715
    %v936 = vpack.c.b16 %v720, %v716
    %v937 = vpack.c.b16 %v725, %v721
    %v938 = vpack.c.b16 %v726, %v722
    %v939 = vpack.c.b16 %v727, %v723
    %v940 = vpack.c.b16 %v728, %v724
    %v941 = vpack.c.b16 %v733, %v729
    %v942 = vpack.c.b16 %v734, %v730
    %v943 = vpack.c.b16 %v735, %v731
    %v944 = vpack.c.b16 %v736, %v732
    %v945 = vpack.c.b16 %v741, %v737
    %v946 = vpack.c.b16 %v742, %v738
    %v947 = vpack.c.b16 %v743, %v739
    %v948 = vpack.c.b16 %v744, %v740
    %v949 = vpack.c.b16 %v749, %v745
    %v950 = vpack.c.b16 %v750, %v746
    %v951 = vpack.c.b16 %v751, %v747
    %v952 = vpack.c.b16 %v752, %v748
    %v953 = vpack.c.b16 %v757, %v753
    %v954 = vpack.c.b16 %v758, %v754
    %v955 = vpack.c.b16 %v759, %v755
    %v956 = vpack.c.b16 %v760, %v756
    %v957 = vpack.c.b16 %v765, %v761
    %v958 = vpack.c.b16 %v766, %v762
    %v959 = vpack.c.b16 %v767, %v763
    %v960 = vpack.c.b16 %v768, %v764
    %v961 = vpack.c.b16 %v773, %v769
    %v962 = vpack.c.b16 %v774, %v770
    %v963 = vpack.c.b16 %v775, %v771
    %v964 = vpack.c.b16 %v776, %v772
    %v965 = vpack.c.b16 %v781, %v777
    %v966 = vpack.c.b16 %v782, %v778
    %v967 = vpack.c.b16 %v783, %v779
    %v968 = vpack.c.b16 %v784, %v780
    %v969 = vpack.c.b16 %v789, %v785
    %v970 = vpack.c.b16 %v790, %v786
    %v971 = vpack.c.b16 %v791, %v787
    %v972 = vpack.c.b16 %v792, %v788
    %v973 = vpack.c.b16 %v797, %v793
    %v974 = vpack.c.b16 %v798, %v794
    %v975 = vpack.c.b16 %v799, %v795
    %v976 = vpack.c.b16 %v800, %v796
    %v977 = vpack.c.b16 %v805, %v801
    %v978 = vpack.c.b16 %v806, %v802
    %v979 = vpack.c.b16 %v807, %v803
    %v980 = vpack.c.b16 %v808, %v804
    %v981 = vpack.c.b16 %v813, %v809
    %v982 = vpack.c.b16 %v814, %v810
    %v983 = vpack.c.b16 %v815, %v811
    %v984 = vpack.c.b16 %v816, %v812
    %v985 = vpack.c.b16 %v821, %v817
    %v986 = vpack.c.b16 %v822, %v818
    %v987 = vpack.c.b16 %v823, %v819
    %v988 = vpack.c.b16 %v824, %v820
    %v989 = vpack.c.b16 %v829, %v825
    %v990 = vpack.c.b16 %v830, %v826
    %v991 = vpack.c.b16 %v831, %v827
    %v992 = vpack.c.b16 %v832, %v828
    %1153 = vmatprep.subr.bf16.mxu0 %v862
    %1154 = vmatpush1.bf16.msra.mxu0 %v861
    %1155 = vmatprep.subr.bf16.mxu0 %v858
    %1156 = vmatpush1.bf16.msra.mxu0 %v857
    %1157 = vmatprep.subr.bf16.mxu0 %v854
    %1158 = vmatpush1.bf16.msra.mxu0 %v853
    %1159 = vmatprep.subr.bf16.mxu0 %v850
    %1160 = vmatpush1.bf16.msra.mxu0 %v849
    %1161 = vmatprep.subr.bf16.mxu0 %v846
    %1162 = vmatpush1.bf16.msra.mxu0 %v845
    %1163 = vmatprep.subr.bf16.mxu0 %v842
    %1164 = vmatpush1.bf16.msra.mxu0 %v841
    %1165 = vmatprep.subr.bf16.mxu0 %v838
    %1166 = vmatpush1.bf16.msra.mxu0 %v837
    %1167 = vmatprep.subr.bf16.mxu0 %v834
    %1168 = vmatpush1.bf16.msra.mxu0 %v833
    %1169 = vmatprep.subr.bf16.mxu0 %v894
    %1170 = vmatpush2.bf16.msra.mxu0 %v893
    %1171 = vmatprep.subr.bf16.mxu0 %v890
    %1172 = vmatpush2.bf16.msra.mxu0 %v889
    %1173 = vmatprep.subr.bf16.mxu0 %v886
    %1174 = vmatpush2.bf16.msra.mxu0 %v885
    %1175 = vmatprep.subr.bf16.mxu0 %v882
    %1176 = vmatpush2.bf16.msra.mxu0 %v881
    %1177 = vmatprep.subr.bf16.mxu0 %v878
    %1178 = vmatpush2.bf16.msra.mxu0 %v877
    %1179 = vmatprep.subr.bf16.mxu0 %v874
    %1180 = vmatpush2.bf16.msra.mxu0 %v873
    %1181 = vmatprep.subr.bf16.mxu0 %v870
    %1182 = vmatpush2.bf16.msra.mxu0 %v869
    %1183 = vmatprep.subr.bf16.mxu0 %v866
    %1184 = vmatpush2.bf16.msra.mxu0 %v865
    %1185 = vmatprep.mubr.bf16.mxu0 %v344
    %1186 = vmatmul.mubr.bf16.gmra.mxu0 %v343
    %v1187 = vpop.f32.mrf.mxu0
    %v1188 = vadd.f32 %v310, %v1187
    %v1189 = vpop.f32.mrf.mxu0
    %v1190 = vadd.f32 %v314, %v1189
    %v1191 = vpop.f32.mrf.mxu0
    %v1192 = vadd.f32 %v310, %v1191
    %v1193 = vpop.f32.mrf.mxu0
    %v1194 = vadd.f32 %v314, %v1193
    %1195 = vdwg.mxu0
    %1196 = vmatprep.subr.bf16.mxu0 %v926
    %1197 = vmatpush1.bf16.msra.mxu0 %v925
    %1198 = vmatprep.subr.bf16.mxu0 %v922
    %1199 = vmatpush1.bf16.msra.mxu0 %v921
    %1200 = vmatprep.subr.bf16.mxu0 %v918
    %1201 = vmatpush1.bf16.msra.mxu0 %v917
    %1202 = vmatprep.subr.bf16.mxu0 %v914
    %1203 = vmatpush1.bf16.msra.mxu0 %v913
    %1204 = vmatprep.subr.bf16.mxu0 %v910
    %1205 = vmatpush1.bf16.msra.mxu0 %v909
    %1206 = vmatprep.subr.bf16.mxu0 %v906
    %1207 = vmatpush1.bf16.msra.mxu0 %v905
    %1208 = vmatprep.subr.bf16.mxu0 %v902
    %1209 = vmatpush1.bf16.msra.mxu0 %v901
    %1210 = vmatprep.subr.bf16.mxu0 %v898
    %1211 = vmatpush1.bf16.msra.mxu0 %v897
    %1212 = vmatprep.subr.bf16.mxu0 %v958
    %1213 = vmatpush2.bf16.msra.mxu0 %v957
    %1214 = vmatprep.subr.bf16.mxu0 %v954
    %1215 = vmatpush2.bf16.msra.mxu0 %v953
    %1216 = vmatprep.subr.bf16.mxu0 %v950
    %1217 = vmatpush2.bf16.msra.mxu0 %v949
    %1218 = vmatprep.subr.bf16.mxu0 %v946
    %1219 = vmatpush2.bf16.msra.mxu0 %v945
    %1220 = vmatprep.subr.bf16.mxu0 %v942
    %1221 = vmatpush2.bf16.msra.mxu0 %v941
    %1222 = vmatprep.subr.bf16.mxu0 %v938
    %1223 = vmatpush2.bf16.msra.mxu0 %v937
    %1224 = vmatprep.subr.bf16.mxu0 %v934
    %1225 = vmatpush2.bf16.msra.mxu0 %v933
    %1226 = vmatprep.subr.bf16.mxu0 %v930
    %1227 = vmatpush2.bf16.msra.mxu0 %v929
    %1228 = vmatprep.mubr.bf16.mxu0 %v346
    %1229 = vmatmul.mubr.bf16.gmra.mxu0 %v345
    %v1230 = vpop.f32.mrf.mxu0
    %v1231 = vadd.f32 %v1188, %v1230
    %v1232 = vpop.f32.mrf.mxu0
    %v1233 = vadd.f32 %v1190, %v1232
    %v1234 = vpop.f32.mrf.mxu0
    %v1235 = vadd.f32 %v1192, %v1234
    %v1236 = vpop.f32.mrf.mxu0
    %v1237 = vadd.f32 %v1194, %v1236
    %1238 = vdwg.mxu0
    %1239 = vmatprep.subr.bf16.mxu0 %v990
    %1240 = vmatpush1.bf16.msra.mxu0 %v989
    %1241 = vmatprep.subr.bf16.mxu0 %v986
    %1242 = vmatpush1.bf16.msra.mxu0 %v985
    %1243 = vmatprep.subr.bf16.mxu0 %v982
    %1244 = vmatpush1.bf16.msra.mxu0 %v981
    %1245 = vmatprep.subr.bf16.mxu0 %v978
    %1246 = vmatpush1.bf16.msra.mxu0 %v977
    %1247 = vmatprep.subr.bf16.mxu0 %v974
    %1248 = vmatpush1.bf16.msra.mxu0 %v973
    %1249 = vmatprep.subr.bf16.mxu0 %v970
    %1250 = vmatpush1.bf16.msra.mxu0 %v969
    %1251 = vmatprep.subr.bf16.mxu0 %v966
    %1252 = vmatpush1.bf16.msra.mxu0 %v965
    %1253 = vmatprep.subr.bf16.mxu0 %v962
    %1254 = vmatpush1.bf16.msra.mxu0 %v961
    %1255 = vmatprep.subr.bf16.mxu0 0
    %1256 = vmatpush2.bf16.msra.mxu0 0
    %1257 = vmatprep.subr.bf16.mxu0 0
    %1258 = vmatpush2.bf16.msra.mxu0 0
    %1259 = vmatprep.subr.bf16.mxu0 0
    %1260 = vmatpush2.bf16.msra.mxu0 0
    %1261 = vmatprep.subr.bf16.mxu0 0
    %1262 = vmatpush2.bf16.msra.mxu0 0
    %1263 = vmatprep.subr.bf16.mxu0 0
    %1264 = vmatpush2.bf16.msra.mxu0 0
    %1265 = vmatprep.subr.bf16.mxu0 0
    %1266 = vmatpush2.bf16.msra.mxu0 0
    %1267 = vmatprep.subr.bf16.mxu0 0
    %1268 = vmatpush2.bf16.msra.mxu0 0
    %1269 = vmatprep.subr.bf16.mxu0 0
    %1270 = vmatpush2.bf16.msra.mxu0 0
    %1271 = vmatprep.mubr.bf16.mxu0 0
    %1272 = vmatmul.mubr.bf16.gmra.mxu0 %v347
    %v1273 = vpop.f32.mrf.mxu0
    %v1274 = vadd.f32 %v1231, %v1273
    %v1275 = vpop.f32.mrf.mxu0
    %v1276 = vadd.f32 %v1233, %v1275
    %v1277 = vpop.f32.mrf.mxu0
    %v1278 = vadd.f32 %v1235, %v1277
    %v1279 = vpop.f32.mrf.mxu0
    %v1280 = vadd.f32 %v1237, %v1279
    %1281 = vdwg.mxu0
    %1282 = vmatprep.subr.bf16.mxu0 %v864
    %1283 = vmatpush1.bf16.msra.mxu0 %v863
    %1284 = vmatprep.subr.bf16.mxu0 %v860
    %1285 = vmatpush1.bf16.msra.mxu0 %v859
    %1286 = vmatprep.subr.bf16.mxu0 %v856
    %1287 = vmatpush1.bf16.msra.mxu0 %v855
    %1288 = vmatprep.subr.bf16.mxu0 %v852
    %1289 = vmatpush1.bf16.msra.mxu0 %v851
    %1290 = vmatprep.subr.bf16.mxu0 %v848
    %1291 = vmatpush1.bf16.msra.mxu0 %v847
    %1292 = vmatprep.subr.bf16.mxu0 %v844
    %1293 = vmatpush1.bf16.msra.mxu0 %v843
    %1294 = vmatprep.subr.bf16.mxu0 %v840
    %1295 = vmatpush1.bf16.msra.mxu0 %v839
    %1296 = vmatprep.subr.bf16.mxu0 %v836
    %1297 = vmatpush1.bf16.msra.mxu0 %v835
    %1298 = vmatprep.subr.bf16.mxu0 %v896
    %1299 = vmatpush2.bf16.msra.mxu0 %v895
    %1300 = vmatprep.subr.bf16.mxu0 %v892
    %1301 = vmatpush2.bf16.msra.mxu0 %v891
    %1302 = vmatprep.subr.bf16.mxu0 %v888
    %1303 = vmatpush2.bf16.msra.mxu0 %v887
    %1304 = vmatprep.subr.bf16.mxu0 %v884
    %1305 = vmatpush2.bf16.msra.mxu0 %v883
    %1306 = vmatprep.subr.bf16.mxu0 %v880
    %1307 = vmatpush2.bf16.msra.mxu0 %v879
    %1308 = vmatprep.subr.bf16.mxu0 %v876
    %1309 = vmatpush2.bf16.msra.mxu0 %v875
    %1310 = vmatprep.subr.bf16.mxu0 %v872
    %1311 = vmatpush2.bf16.msra.mxu0 %v871
    %1312 = vmatprep.subr.bf16.mxu0 %v868
    %1313 = vmatpush2.bf16.msra.mxu0 %v867
    %1314 = vmatprep.mubr.bf16.mxu0 %v344
    %1315 = vmatmul.mubr.bf16.gmra.mxu0 %v343
    %v1316 = vpop.f32.mrf.mxu0
    %v1317 = vadd.f32 %v318, %v1316
    %v1318 = vpop.f32.mrf.mxu0
    %v1319 = vadd.f32 %v322, %v1318
    %v1320 = vpop.f32.mrf.mxu0
    %v1321 = vadd.f32 %v318, %v1320
    %v1322 = vpop.f32.mrf.mxu0
    %v1323 = vadd.f32 %v322, %v1322
    %1324 = vdwg.mxu0
    %1325 = vmatprep.subr.bf16.mxu0 %v928
    %1326 = vmatpush1.bf16.msra.mxu0 %v927
    %1327 = vmatprep.subr.bf16.mxu0 %v924
    %1328 = vmatpush1.bf16.msra.mxu0 %v923
    %1329 = vmatprep.subr.bf16.mxu0 %v920
    %1330 = vmatpush1.bf16.msra.mxu0 %v919
    %1331 = vmatprep.subr.bf16.mxu0 %v916
    %1332 = vmatpush1.bf16.msra.mxu0 %v915
    %1333 = vmatprep.subr.bf16.mxu0 %v912
    %1334 = vmatpush1.bf16.msra.mxu0 %v911
    %1335 = vmatprep.subr.bf16.mxu0 %v908
    %1336 = vmatpush1.bf16.msra.mxu0 %v907
    %1337 = vmatprep.subr.bf16.mxu0 %v904
    %1338 = vmatpush1.bf16.msra.mxu0 %v903
    %1339 = vmatprep.subr.bf16.mxu0 %v900
    %1340 = vmatpush1.bf16.msra.mxu0 %v899
    %1341 = vmatprep.subr.bf16.mxu0 %v960
    %1342 = vmatpush2.bf16.msra.mxu0 %v959
    %1343 = vmatprep.subr.bf16.mxu0 %v956
    %1344 = vmatpush2.bf16.msra.mxu0 %v955
    %1345 = vmatprep.subr.bf16.mxu0 %v952
    %1346 = vmatpush2.bf16.msra.mxu0 %v951
    %1347 = vmatprep.subr.bf16.mxu0 %v948
    %1348 = vmatpush2.bf16.msra.mxu0 %v947
    %1349 = vmatprep.subr.bf16.mxu0 %v944
    %1350 = vmatpush2.bf16.msra.mxu0 %v943
    %1351 = vmatprep.subr.bf16.mxu0 %v940
    %1352 = vmatpush2.bf16.msra.mxu0 %v939
    %1353 = vmatprep.subr.bf16.mxu0 %v936
    %1354 = vmatpush2.bf16.msra.mxu0 %v935
    %1355 = vmatprep.subr.bf16.mxu0 %v932
    %1356 = vmatpush2.bf16.msra.mxu0 %v931
    %1357 = vmatprep.mubr.bf16.mxu0 %v346
    %1358 = vmatmul.mubr.bf16.gmra.mxu0 %v345
    %v1359 = vpop.f32.mrf.mxu0
    %v1360 = vadd.f32 %v1317, %v1359
    %v1361 = vpop.f32.mrf.mxu0
    %v1362 = vadd.f32 %v1319, %v1361
    %v1363 = vpop.f32.mrf.mxu0
    %v1364 = vadd.f32 %v1321, %v1363
    %v1365 = vpop.f32.mrf.mxu0
    %v1366 = vadd.f32 %v1323, %v1365
    %1367 = vdwg.mxu0
    %1368 = vmatprep.subr.bf16.mxu0 %v992
    %1369 = vmatpush1.bf16.msra.mxu0 %v991
    %1370 = vmatprep.subr.bf16.mxu0 %v988
    %1371 = vmatpush1.bf16.msra.mxu0 %v987
    %1372 = vmatprep.subr.bf16.mxu0 %v984
    %1373 = vmatpush1.bf16.msra.mxu0 %v983
    %1374 = vmatprep.subr.bf16.mxu0 %v980
    %1375 = vmatpush1.bf16.msra.mxu0 %v979
    %1376 = vmatprep.subr.bf16.mxu0 %v976
    %1377 = vmatpush1.bf16.msra.mxu0 %v975
    %1378 = vmatprep.subr.bf16.mxu0 %v972
    %1379 = vmatpush1.bf16.msra.mxu0 %v971
    %1380 = vmatprep.subr.bf16.mxu0 %v968
    %1381 = vmatpush1.bf16.msra.mxu0 %v967
    %1382 = vmatprep.subr.bf16.mxu0 %v964
    %1383 = vmatpush1.bf16.msra.mxu0 %v963
    %1384 = vmatprep.subr.bf16.mxu0 0
    %1385 = vmatpush2.bf16.msra.mxu0 0
    %1386 = vmatprep.subr.bf16.mxu0 0
    %1387 = vmatpush2.bf16.msra.mxu0 0
    %1388 = vmatprep.subr.bf16.mxu0 0
    %1389 = vmatpush2.bf16.msra.mxu0 0
    %1390 = vmatprep.subr.bf16.mxu0 0
    %1391 = vmatpush2.bf16.msra.mxu0 0
    %1392 = vmatprep.subr.bf16.mxu0 0
    %1393 = vmatpush2.bf16.msra.mxu0 0
    %1394 = vmatprep.subr.bf16.mxu0 0
    %1395 = vmatpush2.bf16.msra.mxu0 0
    %1396 = vmatprep.subr.bf16.mxu0 0
    %1397 = vmatpush2.bf16.msra.mxu0 0
    %1398 = vmatprep.subr.bf16.mxu0 0
    %1399 = vmatpush2.bf16.msra.mxu0 0
    %1400 = vmatprep.mubr.bf16.mxu0 0
    %1401 = vmatmul.mubr.bf16.gmra.mxu0 %v347
    %v1402 = vpop.f32.mrf.mxu0
    %v1403 = vadd.f32 %v1360, %v1402
    %v1404 = vpop.f32.mrf.mxu0
    %v1405 = vadd.f32 %v1362, %v1404
    %v1406 = vpop.f32.mrf.mxu0
    %v1407 = vadd.f32 %v1364, %v1406
    %v1408 = vpop.f32.mrf.mxu0
    %v1409 = vadd.f32 %v1366, %v1408
    %1410 = vdwg.mxu0
    %v1411 = vmax.f32 %v1274, 0.0
    %v1412 = vmax.f32 %v1276, 0.0
    %v1413 = vmax.f32 %v1403, 0.0
    %v1414 = vmax.f32 %v1405, 0.0
    %v1415 = vmax.f32 %v1278, 0.0
    %v1416 = vmax.f32 %v1280, 0.0
    %v1417 = vmax.f32 %v1407, 0.0
    %v1418 = vmax.f32 %v1409, 0.0
    %v1419 = vpack.c.bf16 %v1415, %v1411
    %v1420 = vpack.c.bf16 %v1416, %v1412
    %v1421 = vpack.c.bf16 %v1417, %v1413
    %v1422 = vpack.c.bf16 %v1418, %v1414
    %v1423 = vld [vmem:[#allocation6] sm:$0xf]
    %v1424 = vld [vmem:[#allocation6 + $0x4] sm:$0xf]
    %v1425 = vld [vmem:[#allocation6 + $0x8] sm:$0xf]
    %v1426 = vld [vmem:[#allocation6 + $0xc] sm:$0xf]
    %v1427 = vld [vmem:[#allocation6 + $0x10] sm:$0xf]
    %v1428 = vld [vmem:[#allocation6 + $0x14] sm:$0xf]
    %v1429 = vld [vmem:[#allocation6 + $0x18] sm:$0xf]
    %v1430 = vld [vmem:[#allocation6 + $0x1c] sm:$0xf]
    %v1431 = vld [vmem:[#allocation6 + $0x20] sm:$0xf]
    %v1432 = vld [vmem:[#allocation6 + $0x24] sm:$0xf]
    %v1433 = vld [vmem:[#allocation6 + $0x28] sm:$0xf]
    %v1434 = vld [vmem:[#allocation6 + $0x2c] sm:$0xf]
    %v1435 = vld [vmem:[#allocation6 + $0x30] sm:$0xf]
    %v1436 = vld [vmem:[#allocation6 + $0x34] sm:$0xf]
    %v1437 = vld [vmem:[#allocation6 + $0x38] sm:$0xf]
    %v1438 = vld [vmem:[#allocation6 + $0x3c] sm:$0xf]
    %v1439 = vld [vmem:[#allocation6 + $0x40] sm:$0xf]
    %v1440 = vld [vmem:[#allocation6 + $0x44] sm:$0xf]
    %v1441 = vld [vmem:[#allocation6 + $0x48] sm:$0xf]
    %v1442 = vld [vmem:[#allocation6 + $0x4c] sm:$0xf]
    %v1443 = vld [vmem:[#allocation6 + $0x50] sm:$0xf]
    %v1444 = vld [vmem:[#allocation6 + $0x54] sm:$0xf]
    %v1445 = vld [vmem:[#allocation6 + $0x58] sm:$0xf]
    %v1446 = vld [vmem:[#allocation6 + $0x5c] sm:$0xf]
    %v1447 = vld [vmem:[#allocation6 + $0x60] sm:$0xf]
    %v1448 = vld [vmem:[#allocation6 + $0x64] sm:$0xf]
    %v1449 = vld [vmem:[#allocation6 + $0x68] sm:$0xf]
    %v1450 = vld [vmem:[#allocation6 + $0x6c] sm:$0xf]
    %v1451 = vld [vmem:[#allocation6 + $0x70] sm:$0xf]
    %v1452 = vld [vmem:[#allocation6 + $0x74] sm:$0xf]
    %v1453 = vld [vmem:[#allocation6 + $0x78] sm:$0xf]
    %v1454 = vld [vmem:[#allocation6 + $0x7c] sm:$0xf]
    %v1455 = vld [vmem:[#allocation6 + $0x80] sm:$0xf]
    %v1456 = vld [vmem:[#allocation6 + $0x84] sm:$0xf]
    %v1457 = vld [vmem:[#allocation6 + $0x88] sm:$0xf]
    %v1458 = vld [vmem:[#allocation6 + $0x8c] sm:$0xf]
    %v1459 = vld [vmem:[#allocation6 + $0x90] sm:$0xf]
    %v1460 = vld [vmem:[#allocation6 + $0x94] sm:$0xf]
    %v1461 = vld [vmem:[#allocation6 + $0x98] sm:$0xf]
    %v1462 = vld [vmem:[#allocation6 + $0x9c] sm:$0xf]
    %v1463 = vld [vmem:[#allocation6 + $0xa0] sm:$0xf]
    %v1464 = vld [vmem:[#allocation6 + $0xa4] sm:$0xf]
    %v1465 = vld [vmem:[#allocation6 + $0xa8] sm:$0xf]
    %v1466 = vld [vmem:[#allocation6 + $0xac] sm:$0xf]
    %v1467 = vld [vmem:[#allocation6 + $0xb0] sm:$0xf]
    %v1468 = vld [vmem:[#allocation6 + $0xb4] sm:$0xf]
    %v1469 = vld [vmem:[#allocation6 + $0xb8] sm:$0xf]
    %v1470 = vld [vmem:[#allocation6 + $0xbc] sm:$0xf]
    %v1471 = vld [vmem:[#allocation6 + $0xc0] sm:$0xf]
    %v1472 = vld [vmem:[#allocation6 + $0xc4] sm:$0xf]
    %v1473 = vld [vmem:[#allocation6 + $0xc8] sm:$0xf]
    %v1474 = vld [vmem:[#allocation6 + $0xcc] sm:$0xf]
    %v1475 = vld [vmem:[#allocation6 + $0xd0] sm:$0xf]
    %v1476 = vld [vmem:[#allocation6 + $0xd4] sm:$0xf]
    %v1477 = vld [vmem:[#allocation6 + $0xd8] sm:$0xf]
    %v1478 = vld [vmem:[#allocation6 + $0xdc] sm:$0xf]
    %v1479 = vld [vmem:[#allocation6 + $0xe0] sm:$0xf]
    %v1480 = vld [vmem:[#allocation6 + $0xe4] sm:$0xf]
    %v1481 = vld [vmem:[#allocation6 + $0xe8] sm:$0xf]
    %v1482 = vld [vmem:[#allocation6 + $0xec] sm:$0xf]
    %v1483 = vld [vmem:[#allocation6 + $0xf0] sm:$0xf]
    %v1484 = vld [vmem:[#allocation6 + $0xf4] sm:$0xf]
    %v1485 = vld [vmem:[#allocation6 + $0xf8] sm:$0xf]
    %v1486 = vld [vmem:[#allocation6 + $0xfc] sm:$0xf]
    %v1487 = vld [vmem:[#allocation7] sm:$0x1]
    %v1489 = vlaneseq
    %v1490 = vshrl.u32 %v1489, 7
    %v1491 = vsub.s32 0, %v1490
    %v1492 = vrot.slane %v1487, %v1491
    %v1558 = vunpack.c.l.b16 %v1423
    %v1559 = vunpack.c.l.b16 %v1424
    %v1560 = vunpack.c.l.b16 %v1425
    %v1561 = vunpack.c.l.b16 %v1426
    %v1562 = vunpack.c.l.b16 %v1427
    %v1563 = vunpack.c.l.b16 %v1428
    %v1564 = vunpack.c.l.b16 %v1429
    %v1565 = vunpack.c.l.b16 %v1430
    %v1566 = vunpack.c.l.b16 %v1431
    %v1567 = vunpack.c.l.b16 %v1432
    %v1568 = vunpack.c.l.b16 %v1433
    %v1569 = vunpack.c.l.b16 %v1434
    %v1570 = vunpack.c.l.b16 %v1435
    %v1571 = vunpack.c.l.b16 %v1436
    %v1572 = vunpack.c.l.b16 %v1437
    %v1573 = vunpack.c.l.b16 %v1438
    %v1574 = vunpack.c.l.b16 %v1439
    %v1575 = vunpack.c.l.b16 %v1440
    %v1576 = vunpack.c.l.b16 %v1441
    %v1577 = vunpack.c.l.b16 %v1442
    %v1578 = vunpack.c.l.b16 %v1443
    %v1579 = vunpack.c.l.b16 %v1444
    %v1580 = vunpack.c.l.b16 %v1445
    %v1581 = vunpack.c.l.b16 %v1446
    %v1582 = vunpack.c.l.b16 %v1447
    %v1583 = vunpack.c.l.b16 %v1448
    %v1584 = vunpack.c.l.b16 %v1449
    %v1585 = vunpack.c.l.b16 %v1450
    %v1586 = vunpack.c.l.b16 %v1451
    %v1587 = vunpack.c.l.b16 %v1452
    %v1588 = vunpack.c.l.b16 %v1453
    %v1589 = vunpack.c.l.b16 %v1454
    %v1590 = vunpack.c.l.b16 %v1455
    %v1591 = vunpack.c.l.b16 %v1456
    %v1592 = vunpack.c.l.b16 %v1457
    %v1593 = vunpack.c.l.b16 %v1458
    %v1594 = vunpack.c.l.b16 %v1459
    %v1595 = vunpack.c.l.b16 %v1460
    %v1596 = vunpack.c.l.b16 %v1461
    %v1597 = vunpack.c.l.b16 %v1462
    %v1598 = vunpack.c.l.b16 %v1463
    %v1599 = vunpack.c.l.b16 %v1464
    %v1600 = vunpack.c.l.b16 %v1465
    %v1601 = vunpack.c.l.b16 %v1466
    %v1602 = vunpack.c.l.b16 %v1467
    %v1603 = vunpack.c.l.b16 %v1468
    %v1604 = vunpack.c.l.b16 %v1469
    %v1605 = vunpack.c.l.b16 %v1470
    %v1606 = vunpack.c.l.b16 %v1471
    %v1607 = vunpack.c.l.b16 %v1472
    %v1608 = vunpack.c.l.b16 %v1473
    %v1609 = vunpack.c.l.b16 %v1474
    %v1610 = vunpack.c.l.b16 %v1475
    %v1611 = vunpack.c.l.b16 %v1476
    %v1612 = vunpack.c.l.b16 %v1477
    %v1613 = vunpack.c.l.b16 %v1478
    %v1614 = vunpack.c.l.b16 %v1479
    %v1615 = vunpack.c.l.b16 %v1480
    %v1616 = vunpack.c.l.b16 %v1481
    %v1617 = vunpack.c.l.b16 %v1482
    %v1618 = vunpack.c.l.b16 %v1483
    %v1619 = vunpack.c.l.b16 %v1484
    %v1620 = vunpack.c.l.b16 %v1485
    %v1621 = vunpack.c.l.b16 %v1486
    %v1622 = vpack.c.b16 %v1559, %v1558
    %v1623 = vpack.c.b16 %v1561, %v1560
    %v1624 = vpack.c.b16 %v1563, %v1562
    %v1625 = vpack.c.b16 %v1565, %v1564
    %v1626 = vpack.c.b16 %v1567, %v1566
    %v1627 = vpack.c.b16 %v1569, %v1568
    %v1628 = vpack.c.b16 %v1571, %v1570
    %v1629 = vpack.c.b16 %v1573, %v1572
    %v1630 = vpack.c.b16 %v1575, %v1574
    %v1631 = vpack.c.b16 %v1577, %v1576
    %v1632 = vpack.c.b16 %v1579, %v1578
    %v1633 = vpack.c.b16 %v1581, %v1580
    %v1634 = vpack.c.b16 %v1583, %v1582
    %v1635 = vpack.c.b16 %v1585, %v1584
    %v1636 = vpack.c.b16 %v1587, %v1586
    %v1637 = vpack.c.b16 %v1589, %v1588
    %v1638 = vpack.c.b16 %v1591, %v1590
    %v1639 = vpack.c.b16 %v1593, %v1592
    %v1640 = vpack.c.b16 %v1595, %v1594
    %v1641 = vpack.c.b16 %v1597, %v1596
    %v1642 = vpack.c.b16 %v1599, %v1598
    %v1643 = vpack.c.b16 %v1601, %v1600
    %v1644 = vpack.c.b16 %v1603, %v1602
    %v1645 = vpack.c.b16 %v1605, %v1604
    %v1646 = vpack.c.b16 %v1607, %v1606
    %v1647 = vpack.c.b16 %v1609, %v1608
    %v1648 = vpack.c.b16 %v1611, %v1610
    %v1649 = vpack.c.b16 %v1613, %v1612
    %v1650 = vpack.c.b16 %v1615, %v1614
    %v1651 = vpack.c.b16 %v1617, %v1616
    %v1652 = vpack.c.b16 %v1619, %v1618
    %v1653 = vpack.c.b16 %v1621, %v1620
    %1686 = vmatprep.subr.bf16.mxu0 0
    %1687 = vmatpush1.bf16.msra.mxu0 %v1629
    %1688 = vmatprep.subr.bf16.mxu0 0
    %1689 = vmatpush1.bf16.msra.mxu0 %v1628
    %1690 = vmatprep.subr.bf16.mxu0 0
    %1691 = vmatpush1.bf16.msra.mxu0 %v1627
    %1692 = vmatprep.subr.bf16.mxu0 0
    %1693 = vmatpush1.bf16.msra.mxu0 %v1626
    %1694 = vmatprep.subr.bf16.mxu0 0
    %1695 = vmatpush1.bf16.msra.mxu0 %v1625
    %1696 = vmatprep.subr.bf16.mxu0 0
    %1697 = vmatpush1.bf16.msra.mxu0 %v1624
    %1698 = vmatprep.subr.bf16.mxu0 0
    %1699 = vmatpush1.bf16.msra.mxu0 %v1623
    %1700 = vmatprep.subr.bf16.mxu0 0
    %1701 = vmatpush1.bf16.msra.mxu0 %v1622
    %1702 = vmatprep.subr.bf16.mxu0 0
    %1703 = vmatpush2.bf16.msra.mxu0 %v1637
    %1704 = vmatprep.subr.bf16.mxu0 0
    %1705 = vmatpush2.bf16.msra.mxu0 %v1636
    %1706 = vmatprep.subr.bf16.mxu0 0
    %1707 = vmatpush2.bf16.msra.mxu0 %v1635
    %1708 = vmatprep.subr.bf16.mxu0 0
    %1709 = vmatpush2.bf16.msra.mxu0 %v1634
    %1710 = vmatprep.subr.bf16.mxu0 0
    %1711 = vmatpush2.bf16.msra.mxu0 %v1633
    %1712 = vmatprep.subr.bf16.mxu0 0
    %1713 = vmatpush2.bf16.msra.mxu0 %v1632
    %1714 = vmatprep.subr.bf16.mxu0 0
    %1715 = vmatpush2.bf16.msra.mxu0 %v1631
    %1716 = vmatprep.subr.bf16.mxu0 0
    %1717 = vmatpush2.bf16.msra.mxu0 %v1630
    %1718 = vmatprep.mubr.bf16.mxu0 %v1420
    %1719 = vmatmul.mubr.bf16.gmra.mxu0 %v1419
    %v1720 = vpop.f32.mrf.mxu0
    %v1721 = vadd.f32 %v1492, %v1720
    %v1722 = vpop.f32.mrf.mxu0
    %v1723 = vpop.f32.mrf.mxu0
    %v1724 = vadd.f32 %v1492, %v1723
    %v1725 = vpop.f32.mrf.mxu0
    %1726 = vdwg.mxu0
    %1727 = vmatprep.subr.bf16.mxu0 0
    %1728 = vmatpush1.bf16.msra.mxu0 %v1645
    %1729 = vmatprep.subr.bf16.mxu0 0
    %1730 = vmatpush1.bf16.msra.mxu0 %v1644
    %1731 = vmatprep.subr.bf16.mxu0 0
    %1732 = vmatpush1.bf16.msra.mxu0 %v1643
    %1733 = vmatprep.subr.bf16.mxu0 0
    %1734 = vmatpush1.bf16.msra.mxu0 %v1642
    %1735 = vmatprep.subr.bf16.mxu0 0
    %1736 = vmatpush1.bf16.msra.mxu0 %v1641
    %1737 = vmatprep.subr.bf16.mxu0 0
    %1738 = vmatpush1.bf16.msra.mxu0 %v1640
    %1739 = vmatprep.subr.bf16.mxu0 0
    %1740 = vmatpush1.bf16.msra.mxu0 %v1639
    %1741 = vmatprep.subr.bf16.mxu0 0
    %1742 = vmatpush1.bf16.msra.mxu0 %v1638
    %1743 = vmatprep.subr.bf16.mxu0 0
    %1744 = vmatpush2.bf16.msra.mxu0 %v1653
    %1745 = vmatprep.subr.bf16.mxu0 0
    %1746 = vmatpush2.bf16.msra.mxu0 %v1652
    %1747 = vmatprep.subr.bf16.mxu0 0
    %1748 = vmatpush2.bf16.msra.mxu0 %v1651
    %1749 = vmatprep.subr.bf16.mxu0 0
    %1750 = vmatpush2.bf16.msra.mxu0 %v1650
    %1751 = vmatprep.subr.bf16.mxu0 0
    %1752 = vmatpush2.bf16.msra.mxu0 %v1649
    %1753 = vmatprep.subr.bf16.mxu0 0
    %1754 = vmatpush2.bf16.msra.mxu0 %v1648
    %1755 = vmatprep.subr.bf16.mxu0 0
    %1756 = vmatpush2.bf16.msra.mxu0 %v1647
    %1757 = vmatprep.subr.bf16.mxu0 0
    %1758 = vmatpush2.bf16.msra.mxu0 %v1646
    %1759 = vmatprep.mubr.bf16.mxu0 %v1422
    %1760 = vmatmul.mubr.bf16.gmra.mxu0 %v1421
    %v1761 = vpop.f32.mrf.mxu0
    %v1762 = vadd.f32 %v1721, %v1761
    %v1763 = vpop.f32.mrf.mxu0
    %v1764 = vpop.f32.mrf.mxu0
    %v1765 = vadd.f32 %v1724, %v1764
    %v1766 = vpop.f32.mrf.mxu0
    %1767 = vdwg.mxu0
    %1768 = vst [vmem:[%s11] sm:$0xff] %v1762
    %1769 = vst [vmem:[%s11 + $0x8] sm:$0xff] %v1765
    %1770 = vrot.lane.b32.xlu0 %v1762, 64
    %v1771 = vpop.permute.xlu0 %1770
    %1772 = vrot.lane.b32.xlu0 %v1765, 64
    %v1773 = vpop.permute.xlu0 %1772
    %v1774 = vld [vmem:[%s1] sm:$0xf]
    %v1775 = vld [vmem:[%s1 + $0x4] sm:$0xf]
    %v1776 = vmul.f32 %v1771, 0.5
    %v1777 = vmul.f32 %v1773, 0.5
    %v1778 = vmul.f32 %v1776, 1.442695
    %v1779 = vpow.pop %v1778
    %v1780 = vmul.f32 %v1777, 1.442695
    %v1781 = vpow.pop %v1780
    %v1782 = vunpack.c.l.bf16 %v1774
    %v1783 = vunpack.c.l.bf16 %v1775
    %v1784 = vmul.f32 %v1782, %v1779
    %v1785 = vmul.f32 %v1783, %v1781
    %v1786 = vadd.f32 %v1784, %v1762
    %v1787 = vadd.f32 %v1785, %v1765
    %v1788 = vpack.c.bf16 %v1787, %v1786
    %v1789 = vld [vmem:[#allocation9] sm:$0xff]
    %v1790 = vld [vmem:[#allocation9 + $0x8] sm:$0xff]
    %v1791 = vld [vmem:[#allocation9 + $0x10] sm:$0xff]
    %v1792 = vld [vmem:[#allocation9 + $0x18] sm:$0xff]
    %v1793 = vld [vmem:[#allocation9 + $0x20] sm:$0xff]
    %v1794 = vld [vmem:[#allocation9 + $0x28] sm:$0xff]
    %v1795 = vld [vmem:[#allocation9 + $0x30] sm:$0xff]
    %v1796 = vld [vmem:[#allocation9 + $0x38] sm:$0xff]
    %v1797 = vld [vmem:[#allocation9 + $0x40] sm:$0xff]
    %v1798 = vld [vmem:[#allocation9 + $0x48] sm:$0xff]
    %v1799 = vld [vmem:[#allocation9 + $0x50] sm:$0xff]
    %v1800 = vld [vmem:[#allocation9 + $0x58] sm:$0xff]
    %v1801 = vld [vmem:[#allocation9 + $0x60] sm:$0xff]
    %v1802 = vld [vmem:[#allocation9 + $0x68] sm:$0xff]
    %v1803 = vld [vmem:[#allocation9 + $0x70] sm:$0xff]
    %v1804 = vld [vmem:[#allocation9 + $0x78] sm:$0xff]
    %v1805 = vld [vmem:[#allocation9 + $0x80] sm:$0xff]
    %v1806 = vld [vmem:[#allocation9 + $0x88] sm:$0xff]
    %v1807 = vld [vmem:[#allocation9 + $0x90] sm:$0xff]
    %v1808 = vld [vmem:[#allocation9 + $0x98] sm:$0xff]
    %v1809 = vld [vmem:[#allocation9 + $0xa0] sm:$0xff]
    %v1810 = vld [vmem:[#allocation9 + $0xa8] sm:$0xff]
    %v1811 = vld [vmem:[#allocation9 + $0xb0] sm:$0xff]
    %v1812 = vld [vmem:[#allocation9 + $0xb8] sm:$0xff]
    %v1813 = vld [vmem:[#allocation9 + $0xc0] sm:$0xff]
    %v1814 = vld [vmem:[#allocation9 + $0xc8] sm:$0xff]
    %v1815 = vld [vmem:[#allocation9 + $0xd0] sm:$0xff]
    %v1816 = vld [vmem:[#allocation9 + $0xd8] sm:$0xff]
    %v1817 = vld [vmem:[#allocation9 + $0xe0] sm:$0xff]
    %v1818 = vld [vmem:[#allocation9 + $0xe8] sm:$0xff]
    %v1819 = vld [vmem:[#allocation9 + $0xf0] sm:$0xff]
    %v1820 = vld [vmem:[#allocation9 + $0xf8] sm:$0xff]
    %v1821 = vld [vmem:[#allocation10] sm:$0xf]
    %v1823 = vlaneseq
    %v1824 = vshrl.u32 %v1823, 7
    %v1825 = vsub.s32 0, %v1824
    %v1826 = vrot.slane %v1821, %v1825
    %v1827 = vlaneseq
    %v1828 = vshrl.u32 %v1827, 7
    %v1829 = vsub.s32 1, %v1828
    %v1830 = vrot.slane %v1821, %v1829
    %v1831 = vlaneseq
    %v1832 = vshrl.u32 %v1831, 7
    %v1833 = vsub.s32 2, %v1832
    %v1834 = vrot.slane %v1821, %v1833
    %v1835 = vlaneseq
    %v1836 = vshrl.u32 %v1835, 7
    %v1837 = vsub.s32 3, %v1836
    %v1838 = vrot.slane %v1821, %v1837
    %v1875 = vunpack.c.l.b16 %v1789
    %v1876 = vunpack.c.h.b16 %v1789
    %v1877 = vunpack.c.l.b16 %v1790
    %v1878 = vunpack.c.h.b16 %v1790
    %v1879 = vunpack.c.l.b16 %v1791
    %v1880 = vunpack.c.h.b16 %v1791
    %v1881 = vunpack.c.l.b16 %v1792
    %v1882 = vunpack.c.h.b16 %v1792
    %v1883 = vunpack.c.l.b16 %v1793
    %v1884 = vunpack.c.h.b16 %v1793
    %v1885 = vunpack.c.l.b16 %v1794
    %v1886 = vunpack.c.h.b16 %v1794
    %v1887 = vunpack.c.l.b16 %v1795
    %v1888 = vunpack.c.h.b16 %v1795
    %v1889 = vunpack.c.l.b16 %v1796
    %v1890 = vunpack.c.h.b16 %v1796
    %v1891 = vunpack.c.l.b16 %v1797
    %v1892 = vunpack.c.h.b16 %v1797
    %v1893 = vunpack.c.l.b16 %v1798
    %v1894 = vunpack.c.h.b16 %v1798
    %v1895 = vunpack.c.l.b16 %v1799
    %v1896 = vunpack.c.h.b16 %v1799
    %v1897 = vunpack.c.l.b16 %v1800
    %v1898 = vunpack.c.h.b16 %v1800
    %v1899 = vunpack.c.l.b16 %v1801
    %v1900 = vunpack.c.h.b16 %v1801
    %v1901 = vunpack.c.l.b16 %v1802
    %v1902 = vunpack.c.h.b16 %v1802
    %v1903 = vunpack.c.l.b16 %v1803
    %v1904 = vunpack.c.h.b16 %v1803
    %v1905 = vunpack.c.l.b16 %v1804
    %v1906 = vunpack.c.h.b16 %v1804
    %v1907 = vunpack.c.l.b16 %v1805
    %v1908 = vunpack.c.h.b16 %v1805
    %v1909 = vunpack.c.l.b16 %v1806
    %v1910 = vunpack.c.h.b16 %v1806
    %v1911 = vunpack.c.l.b16 %v1807
    %v1912 = vunpack.c.h.b16 %v1807
    %v1913 = vunpack.c.l.b16 %v1808
    %v1914 = vunpack.c.h.b16 %v1808
    %v1915 = vunpack.c.l.b16 %v1809
    %v1916 = vunpack.c.h.b16 %v1809
    %v1917 = vunpack.c.l.b16 %v1810
    %v1918 = vunpack.c.h.b16 %v1810
    %v1919 = vunpack.c.l.b16 %v1811
    %v1920 = vunpack.c.h.b16 %v1811
    %v1921 = vunpack.c.l.b16 %v1812
    %v1922 = vunpack.c.h.b16 %v1812
    %v1923 = vunpack.c.l.b16 %v1813
    %v1924 = vunpack.c.h.b16 %v1813
    %v1925 = vunpack.c.l.b16 %v1814
    %v1926 = vunpack.c.h.b16 %v1814
    %v1927 = vunpack.c.l.b16 %v1815
    %v1928 = vunpack.c.h.b16 %v1815
    %v1929 = vunpack.c.l.b16 %v1816
    %v1930 = vunpack.c.h.b16 %v1816
    %v1931 = vunpack.c.l.b16 %v1817
    %v1932 = vunpack.c.h.b16 %v1817
    %v1933 = vunpack.c.l.b16 %v1818
    %v1934 = vunpack.c.h.b16 %v1818
    %v1935 = vunpack.c.l.b16 %v1819
    %v1936 = vunpack.c.h.b16 %v1819
    %v1937 = vunpack.c.l.b16 %v1820
    %v1938 = vunpack.c.h.b16 %v1820
    %v1939 = vpack.c.b16 %v1879, %v1875
    %v1940 = vpack.c.b16 %v1880, %v1876
    %v1941 = vpack.c.b16 %v1881, %v1877
    %v1942 = vpack.c.b16 %v1882, %v1878
    %v1943 = vpack.c.b16 %v1887, %v1883
    %v1944 = vpack.c.b16 %v1888, %v1884
    %v1945 = vpack.c.b16 %v1889, %v1885
    %v1946 = vpack.c.b16 %v1890, %v1886
    %v1947 = vpack.c.b16 %v1895, %v1891
    %v1948 = vpack.c.b16 %v1896, %v1892
    %v1949 = vpack.c.b16 %v1897, %v1893
    %v1950 = vpack.c.b16 %v1898, %v1894
    %v1951 = vpack.c.b16 %v1903, %v1899
    %v1952 = vpack.c.b16 %v1904, %v1900
    %v1953 = vpack.c.b16 %v1905, %v1901
    %v1954 = vpack.c.b16 %v1906, %v1902
    %v1955 = vpack.c.b16 %v1911, %v1907
    %v1956 = vpack.c.b16 %v1912, %v1908
    %v1957 = vpack.c.b16 %v1913, %v1909
    %v1958 = vpack.c.b16 %v1914, %v1910
    %v1959 = vpack.c.b16 %v1919, %v1915
    %v1960 = vpack.c.b16 %v1920, %v1916
    %v1961 = vpack.c.b16 %v1921, %v1917
    %v1962 = vpack.c.b16 %v1922, %v1918
    %v1963 = vpack.c.b16 %v1927, %v1923
    %v1964 = vpack.c.b16 %v1928, %v1924
    %v1965 = vpack.c.b16 %v1929, %v1925
    %v1966 = vpack.c.b16 %v1930, %v1926
    %v1967 = vpack.c.b16 %v1935, %v1931
    %v1968 = vpack.c.b16 %v1936, %v1932
    %v1969 = vpack.c.b16 %v1937, %v1933
    %v1970 = vpack.c.b16 %v1938, %v1934
    %2003 = vmatprep.subr.bf16.mxu0 %v1968
    %2004 = vmatpush1.bf16.msra.mxu0 %v1967
    %2005 = vmatprep.subr.bf16.mxu0 %v1964
    %2006 = vmatpush1.bf16.msra.mxu0 %v1963
    %2007 = vmatprep.subr.bf16.mxu0 %v1960
    %2008 = vmatpush1.bf16.msra.mxu0 %v1959
    %2009 = vmatprep.subr.bf16.mxu0 %v1956
    %2010 = vmatpush1.bf16.msra.mxu0 %v1955
    %2011 = vmatprep.subr.bf16.mxu0 %v1952
    %2012 = vmatpush1.bf16.msra.mxu0 %v1951
    %2013 = vmatprep.subr.bf16.mxu0 %v1948
    %2014 = vmatpush1.bf16.msra.mxu0 %v1947
    %2015 = vmatprep.subr.bf16.mxu0 %v1944
    %2016 = vmatpush1.bf16.msra.mxu0 %v1943
    %2017 = vmatprep.subr.bf16.mxu0 %v1940
    %2018 = vmatpush1.bf16.msra.mxu0 %v1939
    %2019 = vmatprep.subr.bf16.mxu0 0
    %2020 = vmatpush2.bf16.msra.mxu0 0
    %2021 = vmatprep.subr.bf16.mxu0 0
    %2022 = vmatpush2.bf16.msra.mxu0 0
    %2023 = vmatprep.subr.bf16.mxu0 0
    %2024 = vmatpush2.bf16.msra.mxu0 0
    %2025 = vmatprep.subr.bf16.mxu0 0
    %2026 = vmatpush2.bf16.msra.mxu0 0
    %2027 = vmatprep.subr.bf16.mxu0 0
    %2028 = vmatpush2.bf16.msra.mxu0 0
    %2029 = vmatprep.subr.bf16.mxu0 0
    %2030 = vmatpush2.bf16.msra.mxu0 0
    %2031 = vmatprep.subr.bf16.mxu0 0
    %2032 = vmatpush2.bf16.msra.mxu0 0
    %2033 = vmatprep.subr.bf16.mxu0 0
    %2034 = vmatpush2.bf16.msra.mxu0 0
    %2035 = vmatprep.mubr.bf16.mxu0 0
    %2036 = vmatmul.mubr.bf16.gmra.mxu0 %v1788
    %v2037 = vpop.f32.mrf.mxu0
    %v2038 = vadd.f32 %v1826, %v2037
    %v2039 = vpop.f32.mrf.mxu0
    %v2040 = vadd.f32 %v1830, %v2039
    %v2041 = vpop.f32.mrf.mxu0
    %v2042 = vadd.f32 %v1826, %v2041
    %v2043 = vpop.f32.mrf.mxu0
    %v2044 = vadd.f32 %v1830, %v2043
    %2045 = vdwg.mxu0
    %2046 = vmatprep.subr.bf16.mxu0 %v1970
    %2047 = vmatpush1.bf16.msra.mxu0 %v1969
    %2048 = vmatprep.subr.bf16.mxu0 %v1966
    %2049 = vmatpush1.bf16.msra.mxu0 %v1965
    %2050 = vmatprep.subr.bf16.mxu0 %v1962
    %2051 = vmatpush1.bf16.msra.mxu0 %v1961
    %2052 = vmatprep.subr.bf16.mxu0 %v1958
    %2053 = vmatpush1.bf16.msra.mxu0 %v1957
    %2054 = vmatprep.subr.bf16.mxu0 %v1954
    %2055 = vmatpush1.bf16.msra.mxu0 %v1953
    %2056 = vmatprep.subr.bf16.mxu0 %v1950
    %2057 = vmatpush1.bf16.msra.mxu0 %v1949
    %2058 = vmatprep.subr.bf16.mxu0 %v1946
    %2059 = vmatpush1.bf16.msra.mxu0 %v1945
    %2060 = vmatprep.subr.bf16.mxu0 %v1942
    %2061 = vmatpush1.bf16.msra.mxu0 %v1941
    %2062 = vmatprep.subr.bf16.mxu0 0
    %2063 = vmatpush2.bf16.msra.mxu0 0
    %2064 = vmatprep.subr.bf16.mxu0 0
    %2065 = vmatpush2.bf16.msra.mxu0 0
    %2066 = vmatprep.subr.bf16.mxu0 0
    %2067 = vmatpush2.bf16.msra.mxu0 0
    %2068 = vmatprep.subr.bf16.mxu0 0
    %2069 = vmatpush2.bf16.msra.mxu0 0
    %2070 = vmatprep.subr.bf16.mxu0 0
    %2071 = vmatpush2.bf16.msra.mxu0 0
    %2072 = vmatprep.subr.bf16.mxu0 0
    %2073 = vmatpush2.bf16.msra.mxu0 0
    %2074 = vmatprep.subr.bf16.mxu0 0
    %2075 = vmatpush2.bf16.msra.mxu0 0
    %2076 = vmatprep.subr.bf16.mxu0 0
    %2077 = vmatpush2.bf16.msra.mxu0 0
    %2078 = vmatprep.mubr.bf16.mxu0 0
    %2079 = vmatmul.mubr.bf16.gmra.mxu0 %v1788
    %v2080 = vpop.f32.mrf.mxu0
    %v2081 = vadd.f32 %v1834, %v2080
    %v2082 = vpop.f32.mrf.mxu0
    %v2083 = vadd.f32 %v1838, %v2082
    %v2084 = vpop.f32.mrf.mxu0
    %v2085 = vadd.f32 %v1834, %v2084
    %v2086 = vpop.f32.mrf.mxu0
    %v2087 = vadd.f32 %v1838, %v2086
    %2088 = vdwg.mxu0
    %v2089 = vmax.f32 %v2038, 0.0
    %v2090 = vmax.f32 %v2040, 0.0
    %v2091 = vmax.f32 %v2081, 0.0
    %v2092 = vmax.f32 %v2083, 0.0
    %v2093 = vmax.f32 %v2042, 0.0
    %v2094 = vmax.f32 %v2044, 0.0
    %v2095 = vmax.f32 %v2085, 0.0
    %v2096 = vmax.f32 %v2087, 0.0
    %v2097 = vpack.c.bf16 %v2093, %v2089
    %v2098 = vpack.c.bf16 %v2094, %v2090
    %v2099 = vpack.c.bf16 %v2095, %v2091
    %v2100 = vpack.c.bf16 %v2096, %v2092
    %v2101 = vld [vmem:[#allocation12] sm:$0xff]
    %v2102 = vld [vmem:[#allocation12 + $0x8] sm:$0xff]
    %v2103 = vld [vmem:[#allocation12 + $0x10] sm:$0xff]
    %v2104 = vld [vmem:[#allocation12 + $0x18] sm:$0xff]
    %v2105 = vld [vmem:[#allocation12 + $0x20] sm:$0xff]
    %v2106 = vld [vmem:[#allocation12 + $0x28] sm:$0xff]
    %v2107 = vld [vmem:[#allocation12 + $0x30] sm:$0xff]
    %v2108 = vld [vmem:[#allocation12 + $0x38] sm:$0xff]
    %v2109 = vld [vmem:[#allocation12 + $0x40] sm:$0xff]
    %v2110 = vld [vmem:[#allocation12 + $0x48] sm:$0xff]
    %v2111 = vld [vmem:[#allocation12 + $0x50] sm:$0xff]
    %v2112 = vld [vmem:[#allocation12 + $0x58] sm:$0xff]
    %v2113 = vld [vmem:[#allocation12 + $0x60] sm:$0xff]
    %v2114 = vld [vmem:[#allocation12 + $0x68] sm:$0xff]
    %v2115 = vld [vmem:[#allocation12 + $0x70] sm:$0xff]
    %v2116 = vld [vmem:[#allocation12 + $0x78] sm:$0xff]
    %v2117 = vld [vmem:[#allocation12 + $0x80] sm:$0xff]
    %v2118 = vld [vmem:[#allocation12 + $0x88] sm:$0xff]
    %v2119 = vld [vmem:[#allocation12 + $0x90] sm:$0xff]
    %v2120 = vld [vmem:[#allocation12 + $0x98] sm:$0xff]
    %v2121 = vld [vmem:[#allocation12 + $0xa0] sm:$0xff]
    %v2122 = vld [vmem:[#allocation12 + $0xa8] sm:$0xff]
    %v2123 = vld [vmem:[#allocation12 + $0xb0] sm:$0xff]
    %v2124 = vld [vmem:[#allocation12 + $0xb8] sm:$0xff]
    %v2125 = vld [vmem:[#allocation12 + $0xc0] sm:$0xff]
    %v2126 = vld [vmem:[#allocation12 + $0xc8] sm:$0xff]
    %v2127 = vld [vmem:[#allocation12 + $0xd0] sm:$0xff]
    %v2128 = vld [vmem:[#allocation12 + $0xd8] sm:$0xff]
    %v2129 = vld [vmem:[#allocation12 + $0xe0] sm:$0xff]
    %v2130 = vld [vmem:[#allocation12 + $0xe8] sm:$0xff]
    %v2131 = vld [vmem:[#allocation12 + $0xf0] sm:$0xff]
    %v2132 = vld [vmem:[#allocation12 + $0xf8] sm:$0xff]
    %v2133 = vld [vmem:[#allocation12 + $0x100] sm:$0xff]
    %v2134 = vld [vmem:[#allocation12 + $0x108] sm:$0xff]
    %v2135 = vld [vmem:[#allocation12 + $0x110] sm:$0xff]
    %v2136 = vld [vmem:[#allocation12 + $0x118] sm:$0xff]
    %v2137 = vld [vmem:[#allocation12 + $0x120] sm:$0xff]
    %v2138 = vld [vmem:[#allocation12 + $0x128] sm:$0xff]
    %v2139 = vld [vmem:[#allocation12 + $0x130] sm:$0xff]
    %v2140 = vld [vmem:[#allocation12 + $0x138] sm:$0xff]
    %v2141 = vld [vmem:[#allocation12 + $0x140] sm:$0xff]
    %v2142 = vld [vmem:[#allocation12 + $0x148] sm:$0xff]
    %v2143 = vld [vmem:[#allocation12 + $0x150] sm:$0xff]
    %v2144 = vld [vmem:[#allocation12 + $0x158] sm:$0xff]
    %v2145 = vld [vmem:[#allocation12 + $0x160] sm:$0xff]
    %v2146 = vld [vmem:[#allocation12 + $0x168] sm:$0xff]
    %v2147 = vld [vmem:[#allocation12 + $0x170] sm:$0xff]
    %v2148 = vld [vmem:[#allocation12 + $0x178] sm:$0xff]
    %v2149 = vld [vmem:[#allocation12 + $0x180] sm:$0xff]
    %v2150 = vld [vmem:[#allocation12 + $0x188] sm:$0xff]
    %v2151 = vld [vmem:[#allocation12 + $0x190] sm:$0xff]
    %v2152 = vld [vmem:[#allocation12 + $0x198] sm:$0xff]
    %v2153 = vld [vmem:[#allocation12 + $0x1a0] sm:$0xff]
    %v2154 = vld [vmem:[#allocation12 + $0x1a8] sm:$0xff]
    %v2155 = vld [vmem:[#allocation12 + $0x1b0] sm:$0xff]
    %v2156 = vld [vmem:[#allocation12 + $0x1b8] sm:$0xff]
    %v2157 = vld [vmem:[#allocation12 + $0x1c0] sm:$0xff]
    %v2158 = vld [vmem:[#allocation12 + $0x1c8] sm:$0xff]
    %v2159 = vld [vmem:[#allocation12 + $0x1d0] sm:$0xff]
    %v2160 = vld [vmem:[#allocation12 + $0x1d8] sm:$0xff]
    %v2161 = vld [vmem:[#allocation12 + $0x1e0] sm:$0xff]
    %v2162 = vld [vmem:[#allocation12 + $0x1e8] sm:$0xff]
    %v2163 = vld [vmem:[#allocation12 + $0x1f0] sm:$0xff]
    %v2164 = vld [vmem:[#allocation12 + $0x1f8] sm:$0xff]
    %v2165 = vld [vmem:[#allocation12 + $0x200] sm:$0xff]
    %v2166 = vld [vmem:[#allocation12 + $0x208] sm:$0xff]
    %v2167 = vld [vmem:[#allocation12 + $0x210] sm:$0xff]
    %v2168 = vld [vmem:[#allocation12 + $0x218] sm:$0xff]
    %v2169 = vld [vmem:[#allocation12 + $0x220] sm:$0xff]
    %v2170 = vld [vmem:[#allocation12 + $0x228] sm:$0xff]
    %v2171 = vld [vmem:[#allocation12 + $0x230] sm:$0xff]
    %v2172 = vld [vmem:[#allocation12 + $0x238] sm:$0xff]
    %v2173 = vld [vmem:[#allocation12 + $0x240] sm:$0xff]
    %v2174 = vld [vmem:[#allocation12 + $0x248] sm:$0xff]
    %v2175 = vld [vmem:[#allocation12 + $0x250] sm:$0xff]
    %v2176 = vld [vmem:[#allocation12 + $0x258] sm:$0xff]
    %v2177 = vld [vmem:[#allocation12 + $0x260] sm:$0xff]
    %v2178 = vld [vmem:[#allocation12 + $0x268] sm:$0xff]
    %v2179 = vld [vmem:[#allocation12 + $0x270] sm:$0xff]
    %v2180 = vld [vmem:[#allocation12 + $0x278] sm:$0xff]
    %v2181 = vld [vmem:[#allocation12 + $0x280] sm:$0xff]
    %v2182 = vld [vmem:[#allocation12 + $0x288] sm:$0xff]
    %v2183 = vld [vmem:[#allocation12 + $0x290] sm:$0xff]
    %v2184 = vld [vmem:[#allocation12 + $0x298] sm:$0xff]
    %v2185 = vld [vmem:[#allocation12 + $0x2a0] sm:$0xff]
    %v2186 = vld [vmem:[#allocation12 + $0x2a8] sm:$0xff]
    %v2187 = vld [vmem:[#allocation12 + $0x2b0] sm:$0xff]
    %v2188 = vld [vmem:[#allocation12 + $0x2b8] sm:$0xff]
    %v2189 = vld [vmem:[#allocation12 + $0x2c0] sm:$0xff]
    %v2190 = vld [vmem:[#allocation12 + $0x2c8] sm:$0xff]
    %v2191 = vld [vmem:[#allocation12 + $0x2d0] sm:$0xff]
    %v2192 = vld [vmem:[#allocation12 + $0x2d8] sm:$0xff]
    %v2193 = vld [vmem:[#allocation12 + $0x2e0] sm:$0xff]
    %v2194 = vld [vmem:[#allocation12 + $0x2e8] sm:$0xff]
    %v2195 = vld [vmem:[#allocation12 + $0x2f0] sm:$0xff]
    %v2196 = vld [vmem:[#allocation12 + $0x2f8] sm:$0xff]
    %v2197 = vld [vmem:[#allocation12 + $0x300] sm:$0xff]
    %v2198 = vld [vmem:[#allocation12 + $0x308] sm:$0xff]
    %v2199 = vld [vmem:[#allocation12 + $0x310] sm:$0xff]
    %v2200 = vld [vmem:[#allocation12 + $0x318] sm:$0xff]
    %v2201 = vld [vmem:[#allocation12 + $0x320] sm:$0xff]
    %v2202 = vld [vmem:[#allocation12 + $0x328] sm:$0xff]
    %v2203 = vld [vmem:[#allocation12 + $0x330] sm:$0xff]
    %v2204 = vld [vmem:[#allocation12 + $0x338] sm:$0xff]
    %v2205 = vld [vmem:[#allocation12 + $0x340] sm:$0xff]
    %v2206 = vld [vmem:[#allocation12 + $0x348] sm:$0xff]
    %v2207 = vld [vmem:[#allocation12 + $0x350] sm:$0xff]
    %v2208 = vld [vmem:[#allocation12 + $0x358] sm:$0xff]
    %v2209 = vld [vmem:[#allocation12 + $0x360] sm:$0xff]
    %v2210 = vld [vmem:[#allocation12 + $0x368] sm:$0xff]
    %v2211 = vld [vmem:[#allocation12 + $0x370] sm:$0xff]
    %v2212 = vld [vmem:[#allocation12 + $0x378] sm:$0xff]
    %v2213 = vld [vmem:[#allocation12 + $0x380] sm:$0xff]
    %v2214 = vld [vmem:[#allocation12 + $0x388] sm:$0xff]
    %v2215 = vld [vmem:[#allocation12 + $0x390] sm:$0xff]
    %v2216 = vld [vmem:[#allocation12 + $0x398] sm:$0xff]
    %v2217 = vld [vmem:[#allocation12 + $0x3a0] sm:$0xff]
    %v2218 = vld [vmem:[#allocation12 + $0x3a8] sm:$0xff]
    %v2219 = vld [vmem:[#allocation12 + $0x3b0] sm:$0xff]
    %v2220 = vld [vmem:[#allocation12 + $0x3b8] sm:$0xff]
    %v2221 = vld [vmem:[#allocation12 + $0x3c0] sm:$0xff]
    %v2222 = vld [vmem:[#allocation12 + $0x3c8] sm:$0xff]
    %v2223 = vld [vmem:[#allocation12 + $0x3d0] sm:$0xff]
    %v2224 = vld [vmem:[#allocation12 + $0x3d8] sm:$0xff]
    %v2225 = vld [vmem:[#allocation12 + $0x3e0] sm:$0xff]
    %v2226 = vld [vmem:[#allocation12 + $0x3e8] sm:$0xff]
    %v2227 = vld [vmem:[#allocation12 + $0x3f0] sm:$0xff]
    %v2228 = vld [vmem:[#allocation12 + $0x3f8] sm:$0xff]
    %v2229 = vld [vmem:[#allocation12 + $0x400] sm:$0xff]
    %v2230 = vld [vmem:[#allocation12 + $0x408] sm:$0xff]
    %v2231 = vld [vmem:[#allocation12 + $0x410] sm:$0xff]
    %v2232 = vld [vmem:[#allocation12 + $0x418] sm:$0xff]
    %v2233 = vld [vmem:[#allocation12 + $0x420] sm:$0xff]
    %v2234 = vld [vmem:[#allocation12 + $0x428] sm:$0xff]
    %v2235 = vld [vmem:[#allocation12 + $0x430] sm:$0xff]
    %v2236 = vld [vmem:[#allocation12 + $0x438] sm:$0xff]
    %v2237 = vld [vmem:[#allocation12 + $0x440] sm:$0xff]
    %v2238 = vld [vmem:[#allocation12 + $0x448] sm:$0xff]
    %v2239 = vld [vmem:[#allocation12 + $0x450] sm:$0xff]
    %v2240 = vld [vmem:[#allocation12 + $0x458] sm:$0xff]
    %v2241 = vld [vmem:[#allocation12 + $0x460] sm:$0xff]
    %v2242 = vld [vmem:[#allocation12 + $0x468] sm:$0xff]
    %v2243 = vld [vmem:[#allocation12 + $0x470] sm:$0xff]
    %v2244 = vld [vmem:[#allocation12 + $0x478] sm:$0xff]
    %v2245 = vld [vmem:[#allocation12 + $0x480] sm:$0xff]
    %v2246 = vld [vmem:[#allocation12 + $0x488] sm:$0xff]
    %v2247 = vld [vmem:[#allocation12 + $0x490] sm:$0xff]
    %v2248 = vld [vmem:[#allocation12 + $0x498] sm:$0xff]
    %v2249 = vld [vmem:[#allocation12 + $0x4a0] sm:$0xff]
    %v2250 = vld [vmem:[#allocation12 + $0x4a8] sm:$0xff]
    %v2251 = vld [vmem:[#allocation12 + $0x4b0] sm:$0xff]
    %v2252 = vld [vmem:[#allocation12 + $0x4b8] sm:$0xff]
    %v2253 = vld [vmem:[#allocation12 + $0x4c0] sm:$0xff]
    %v2254 = vld [vmem:[#allocation12 + $0x4c8] sm:$0xff]
    %v2255 = vld [vmem:[#allocation12 + $0x4d0] sm:$0xff]
    %v2256 = vld [vmem:[#allocation12 + $0x4d8] sm:$0xff]
    %v2257 = vld [vmem:[#allocation12 + $0x4e0] sm:$0xff]
    %v2258 = vld [vmem:[#allocation12 + $0x4e8] sm:$0xff]
    %v2259 = vld [vmem:[#allocation12 + $0x4f0] sm:$0xff]
    %v2260 = vld [vmem:[#allocation12 + $0x4f8] sm:$0xff]
    %v2261 = vld [vmem:[#allocation12 + $0x500] sm:$0xff]
    %v2262 = vld [vmem:[#allocation12 + $0x508] sm:$0xff]
    %v2263 = vld [vmem:[#allocation12 + $0x510] sm:$0xff]
    %v2264 = vld [vmem:[#allocation12 + $0x518] sm:$0xff]
    %v2265 = vld [vmem:[#allocation12 + $0x520] sm:$0xff]
    %v2266 = vld [vmem:[#allocation12 + $0x528] sm:$0xff]
    %v2267 = vld [vmem:[#allocation12 + $0x530] sm:$0xff]
    %v2268 = vld [vmem:[#allocation12 + $0x538] sm:$0xff]
    %v2269 = vld [vmem:[#allocation12 + $0x540] sm:$0xff]
    %v2270 = vld [vmem:[#allocation12 + $0x548] sm:$0xff]
    %v2271 = vld [vmem:[#allocation12 + $0x550] sm:$0xff]
    %v2272 = vld [vmem:[#allocation12 + $0x558] sm:$0xff]
    %v2273 = vld [vmem:[#allocation12 + $0x560] sm:$0xff]
    %v2274 = vld [vmem:[#allocation12 + $0x568] sm:$0xff]
    %v2275 = vld [vmem:[#allocation12 + $0x570] sm:$0xff]
    %v2276 = vld [vmem:[#allocation12 + $0x578] sm:$0xff]
    %v2277 = vld [vmem:[#allocation12 + $0x580] sm:$0xff]
    %v2278 = vld [vmem:[#allocation12 + $0x588] sm:$0xff]
    %v2279 = vld [vmem:[#allocation12 + $0x590] sm:$0xff]
    %v2280 = vld [vmem:[#allocation12 + $0x598] sm:$0xff]
    %v2281 = vld [vmem:[#allocation12 + $0x5a0] sm:$0xff]
    %v2282 = vld [vmem:[#allocation12 + $0x5a8] sm:$0xff]
    %v2283 = vld [vmem:[#allocation12 + $0x5b0] sm:$0xff]
    %v2284 = vld [vmem:[#allocation12 + $0x5b8] sm:$0xff]
    %v2285 = vld [vmem:[#allocation12 + $0x5c0] sm:$0xff]
    %v2286 = vld [vmem:[#allocation12 + $0x5c8] sm:$0xff]
    %v2287 = vld [vmem:[#allocation12 + $0x5d0] sm:$0xff]
    %v2288 = vld [vmem:[#allocation12 + $0x5d8] sm:$0xff]
    %v2289 = vld [vmem:[#allocation12 + $0x5e0] sm:$0xff]
    %v2290 = vld [vmem:[#allocation12 + $0x5e8] sm:$0xff]
    %v2291 = vld [vmem:[#allocation12 + $0x5f0] sm:$0xff]
    %v2292 = vld [vmem:[#allocation12 + $0x5f8] sm:$0xff]
    %v2293 = vld [vmem:[#allocation12 + $0x600] sm:$0xff]
    %v2294 = vld [vmem:[#allocation12 + $0x608] sm:$0xff]
    %v2295 = vld [vmem:[#allocation12 + $0x610] sm:$0xff]
    %v2296 = vld [vmem:[#allocation12 + $0x618] sm:$0xff]
    %v2297 = vld [vmem:[#allocation12 + $0x620] sm:$0xff]
    %v2298 = vld [vmem:[#allocation12 + $0x628] sm:$0xff]
    %v2299 = vld [vmem:[#allocation12 + $0x630] sm:$0xff]
    %v2300 = vld [vmem:[#allocation12 + $0x638] sm:$0xff]
    %v2301 = vld [vmem:[#allocation12 + $0x640] sm:$0xff]
    %v2302 = vld [vmem:[#allocation12 + $0x648] sm:$0xff]
    %v2303 = vld [vmem:[#allocation12 + $0x650] sm:$0xff]
    %v2304 = vld [vmem:[#allocation12 + $0x658] sm:$0xff]
    %v2305 = vld [vmem:[#allocation12 + $0x660] sm:$0xff]
    %v2306 = vld [vmem:[#allocation12 + $0x668] sm:$0xff]
    %v2307 = vld [vmem:[#allocation12 + $0x670] sm:$0xff]
    %v2308 = vld [vmem:[#allocation12 + $0x678] sm:$0xff]
    %v2309 = vld [vmem:[#allocation12 + $0x680] sm:$0xff]
    %v2310 = vld [vmem:[#allocation12 + $0x688] sm:$0xff]
    %v2311 = vld [vmem:[#allocation12 + $0x690] sm:$0xff]
    %v2312 = vld [vmem:[#allocation12 + $0x698] sm:$0xff]
    %v2313 = vld [vmem:[#allocation12 + $0x6a0] sm:$0xff]
    %v2314 = vld [vmem:[#allocation12 + $0x6a8] sm:$0xff]
    %v2315 = vld [vmem:[#allocation12 + $0x6b0] sm:$0xff]
    %v2316 = vld [vmem:[#allocation12 + $0x6b8] sm:$0xff]
    %v2317 = vld [vmem:[#allocation12 + $0x6c0] sm:$0xff]
    %v2318 = vld [vmem:[#allocation12 + $0x6c8] sm:$0xff]
    %v2319 = vld [vmem:[#allocation12 + $0x6d0] sm:$0xff]
    %v2320 = vld [vmem:[#allocation12 + $0x6d8] sm:$0xff]
    %v2321 = vld [vmem:[#allocation12 + $0x6e0] sm:$0xff]
    %v2322 = vld [vmem:[#allocation12 + $0x6e8] sm:$0xff]
    %v2323 = vld [vmem:[#allocation12 + $0x6f0] sm:$0xff]
    %v2324 = vld [vmem:[#allocation12 + $0x6f8] sm:$0xff]
    %v2325 = vld [vmem:[#allocation12 + $0x700] sm:$0xff]
    %v2326 = vld [vmem:[#allocation12 + $0x708] sm:$0xff]
    %v2327 = vld [vmem:[#allocation12 + $0x710] sm:$0xff]
    %v2328 = vld [vmem:[#allocation12 + $0x718] sm:$0xff]
    %v2329 = vld [vmem:[#allocation12 + $0x720] sm:$0xff]
    %v2330 = vld [vmem:[#allocation12 + $0x728] sm:$0xff]
    %v2331 = vld [vmem:[#allocation12 + $0x730] sm:$0xff]
    %v2332 = vld [vmem:[#allocation12 + $0x738] sm:$0xff]
    %v2333 = vld [vmem:[#allocation12 + $0x740] sm:$0xff]
    %v2334 = vld [vmem:[#allocation12 + $0x748] sm:$0xff]
    %v2335 = vld [vmem:[#allocation12 + $0x750] sm:$0xff]
    %v2336 = vld [vmem:[#allocation12 + $0x758] sm:$0xff]
    %v2337 = vld [vmem:[#allocation12 + $0x760] sm:$0xff]
    %v2338 = vld [vmem:[#allocation12 + $0x768] sm:$0xff]
    %v2339 = vld [vmem:[#allocation12 + $0x770] sm:$0xff]
    %v2340 = vld [vmem:[#allocation12 + $0x778] sm:$0xff]
    %v2341 = vld [vmem:[#allocation12 + $0x780] sm:$0xff]
    %v2342 = vld [vmem:[#allocation12 + $0x788] sm:$0xff]
    %v2343 = vld [vmem:[#allocation12 + $0x790] sm:$0xff]
    %v2344 = vld [vmem:[#allocation12 + $0x798] sm:$0xff]
    %v2345 = vld [vmem:[#allocation12 + $0x7a0] sm:$0xff]
    %v2346 = vld [vmem:[#allocation12 + $0x7a8] sm:$0xff]
    %v2347 = vld [vmem:[#allocation12 + $0x7b0] sm:$0xff]
    %v2348 = vld [vmem:[#allocation12 + $0x7b8] sm:$0xff]
    %v2349 = vld [vmem:[#allocation12 + $0x7c0] sm:$0xff]
    %v2350 = vld [vmem:[#allocation12 + $0x7c8] sm:$0xff]
    %v2351 = vld [vmem:[#allocation12 + $0x7d0] sm:$0xff]
    %v2352 = vld [vmem:[#allocation12 + $0x7d8] sm:$0xff]
    %v2353 = vld [vmem:[#allocation12 + $0x7e0] sm:$0xff]
    %v2354 = vld [vmem:[#allocation12 + $0x7e8] sm:$0xff]
    %v2355 = vld [vmem:[#allocation12 + $0x7f0] sm:$0xff]
    %v2356 = vld [vmem:[#allocation12 + $0x7f8] sm:$0xff]
    %v2357 = vld [vmem:[#allocation12 + $0x800] sm:$0xff]
    %v2358 = vld [vmem:[#allocation12 + $0x808] sm:$0xff]
    %v2359 = vld [vmem:[#allocation12 + $0x810] sm:$0xff]
    %v2360 = vld [vmem:[#allocation12 + $0x818] sm:$0xff]
    %v2361 = vld [vmem:[#allocation12 + $0x820] sm:$0xff]
    %v2362 = vld [vmem:[#allocation12 + $0x828] sm:$0xff]
    %v2363 = vld [vmem:[#allocation12 + $0x830] sm:$0xff]
    %v2364 = vld [vmem:[#allocation12 + $0x838] sm:$0xff]
    %v2365 = vld [vmem:[#allocation12 + $0x840] sm:$0xff]
    %v2366 = vld [vmem:[#allocation12 + $0x848] sm:$0xff]
    %v2367 = vld [vmem:[#allocation12 + $0x850] sm:$0xff]
    %v2368 = vld [vmem:[#allocation12 + $0x858] sm:$0xff]
    %v2369 = vld [vmem:[#allocation12 + $0x860] sm:$0xff]
    %v2370 = vld [vmem:[#allocation12 + $0x868] sm:$0xff]
    %v2371 = vld [vmem:[#allocation12 + $0x870] sm:$0xff]
    %v2372 = vld [vmem:[#allocation12 + $0x878] sm:$0xff]
    %v2373 = vld [vmem:[#allocation12 + $0x880] sm:$0xff]
    %v2374 = vld [vmem:[#allocation12 + $0x888] sm:$0xff]
    %v2375 = vld [vmem:[#allocation12 + $0x890] sm:$0xff]
    %v2376 = vld [vmem:[#allocation12 + $0x898] sm:$0xff]
    %v2377 = vld [vmem:[#allocation12 + $0x8a0] sm:$0xff]
    %v2378 = vld [vmem:[#allocation12 + $0x8a8] sm:$0xff]
    %v2379 = vld [vmem:[#allocation12 + $0x8b0] sm:$0xff]
    %v2380 = vld [vmem:[#allocation12 + $0x8b8] sm:$0xff]
    %v2381 = vld [vmem:[#allocation12 + $0x8c0] sm:$0xff]
    %v2382 = vld [vmem:[#allocation12 + $0x8c8] sm:$0xff]
    %v2383 = vld [vmem:[#allocation12 + $0x8d0] sm:$0xff]
    %v2384 = vld [vmem:[#allocation12 + $0x8d8] sm:$0xff]
    %v2385 = vld [vmem:[#allocation12 + $0x8e0] sm:$0xff]
    %v2386 = vld [vmem:[#allocation12 + $0x8e8] sm:$0xff]
    %v2387 = vld [vmem:[#allocation12 + $0x8f0] sm:$0xff]
    %v2388 = vld [vmem:[#allocation12 + $0x8f8] sm:$0xff]
    %v2389 = vld [vmem:[#allocation12 + $0x900] sm:$0xff]
    %v2390 = vld [vmem:[#allocation12 + $0x908] sm:$0xff]
    %v2391 = vld [vmem:[#allocation12 + $0x910] sm:$0xff]
    %v2392 = vld [vmem:[#allocation12 + $0x918] sm:$0xff]
    %v2393 = vld [vmem:[#allocation12 + $0x920] sm:$0xff]
    %v2394 = vld [vmem:[#allocation12 + $0x928] sm:$0xff]
    %v2395 = vld [vmem:[#allocation12 + $0x930] sm:$0xff]
    %v2396 = vld [vmem:[#allocation12 + $0x938] sm:$0xff]
    %v2397 = vld [vmem:[#allocation12 + $0x940] sm:$0xff]
    %v2398 = vld [vmem:[#allocation12 + $0x948] sm:$0xff]
    %v2399 = vld [vmem:[#allocation12 + $0x950] sm:$0xff]
    %v2400 = vld [vmem:[#allocation12 + $0x958] sm:$0xff]
    %v2401 = vld [vmem:[#allocation12 + $0x960] sm:$0xff]
    %v2402 = vld [vmem:[#allocation12 + $0x968] sm:$0xff]
    %v2403 = vld [vmem:[#allocation12 + $0x970] sm:$0xff]
    %v2404 = vld [vmem:[#allocation12 + $0x978] sm:$0xff]
    %v2405 = vld [vmem:[#allocation12 + $0x980] sm:$0xff]
    %v2406 = vld [vmem:[#allocation12 + $0x988] sm:$0xff]
    %v2407 = vld [vmem:[#allocation12 + $0x990] sm:$0xff]
    %v2408 = vld [vmem:[#allocation12 + $0x998] sm:$0xff]
    %v2409 = vld [vmem:[#allocation12 + $0x9a0] sm:$0xff]
    %v2410 = vld [vmem:[#allocation12 + $0x9a8] sm:$0xff]
    %v2411 = vld [vmem:[#allocation12 + $0x9b0] sm:$0xff]
    %v2412 = vld [vmem:[#allocation12 + $0x9b8] sm:$0xff]
    %v2413 = vld [vmem:[#allocation12 + $0x9c0] sm:$0xff]
    %v2414 = vld [vmem:[#allocation12 + $0x9c8] sm:$0xff]
    %v2415 = vld [vmem:[#allocation12 + $0x9d0] sm:$0xff]
    %v2416 = vld [vmem:[#allocation12 + $0x9d8] sm:$0xff]
    %v2417 = vld [vmem:[#allocation12 + $0x9e0] sm:$0xff]
    %v2418 = vld [vmem:[#allocation12 + $0x9e8] sm:$0xff]
    %v2419 = vld [vmem:[#allocation12 + $0x9f0] sm:$0xff]
    %v2420 = vld [vmem:[#allocation12 + $0x9f8] sm:$0xff]
    %v2421 = vld [vmem:[#allocation13] sm:$0xff]
    %v2422 = vld [vmem:[#allocation13 + $0x8] sm:$0x3]
    %v2425 = vlaneseq
    %v2426 = vshrl.u32 %v2425, 7
    %v2427 = vsub.s32 0, %v2426
    %v2428 = vrot.slane %v2421, %v2427
    %v2429 = vlaneseq
    %v2430 = vshrl.u32 %v2429, 7
    %v2431 = vsub.s32 1, %v2430
    %v2432 = vrot.slane %v2421, %v2431
    %v2433 = vlaneseq
    %v2434 = vshrl.u32 %v2433, 7
    %v2435 = vsub.s32 2, %v2434
    %v2436 = vrot.slane %v2421, %v2435
    %v2437 = vlaneseq
    %v2438 = vshrl.u32 %v2437, 7
    %v2439 = vsub.s32 3, %v2438
    %v2440 = vrot.slane %v2421, %v2439
    %v2441 = vlaneseq
    %v2442 = vshrl.u32 %v2441, 7
    %v2443 = vsub.s32 4, %v2442
    %v2444 = vrot.slane %v2421, %v2443
    %v2445 = vlaneseq
    %v2446 = vshrl.u32 %v2445, 7
    %v2447 = vsub.s32 5, %v2446
    %v2448 = vrot.slane %v2421, %v2447
    %v2449 = vlaneseq
    %v2450 = vshrl.u32 %v2449, 7
    %v2451 = vsub.s32 6, %v2450
    %v2452 = vrot.slane %v2421, %v2451
    %v2453 = vlaneseq
    %v2454 = vshrl.u32 %v2453, 7
    %v2455 = vsub.s32 7, %v2454
    %v2456 = vrot.slane %v2421, %v2455
    %v2457 = vlaneseq
    %v2458 = vshrl.u32 %v2457, 7
    %v2459 = vsub.s32 0, %v2458
    %v2460 = vrot.slane %v2422, %v2459
    %v2461 = vlaneseq
    %v2462 = vshrl.u32 %v2461, 7
    %v2463 = vsub.s32 1, %v2462
    %v2464 = vrot.slane %v2422, %v2463
    %v2795 = vunpack.c.l.b16 %v2101
    %v2796 = vunpack.c.h.b16 %v2101
    %v2797 = vunpack.c.l.b16 %v2102
    %v2798 = vunpack.c.h.b16 %v2102
    %v2799 = vunpack.c.l.b16 %v2103
    %v2800 = vunpack.c.h.b16 %v2103
    %v2801 = vunpack.c.l.b16 %v2104
    %v2802 = vunpack.c.h.b16 %v2104
    %v2803 = vunpack.c.l.b16 %v2105
    %v2804 = vunpack.c.h.b16 %v2105
    %v2805 = vunpack.c.l.b16 %v2106
    %v2806 = vunpack.c.h.b16 %v2106
    %v2807 = vunpack.c.l.b16 %v2107
    %v2808 = vunpack.c.h.b16 %v2107
    %v2809 = vunpack.c.l.b16 %v2108
    %v2810 = vunpack.c.h.b16 %v2108
    %v2811 = vunpack.c.l.b16 %v2109
    %v2812 = vunpack.c.h.b16 %v2109
    %v2813 = vunpack.c.l.b16 %v2110
    %v2814 = vunpack.c.h.b16 %v2110
    %v2815 = vunpack.c.l.b16 %v2111
    %v2816 = vunpack.c.h.b16 %v2111
    %v2817 = vunpack.c.l.b16 %v2112
    %v2818 = vunpack.c.h.b16 %v2112
    %v2819 = vunpack.c.l.b16 %v2113
    %v2820 = vunpack.c.h.b16 %v2113
    %v2821 = vunpack.c.l.b16 %v2114
    %v2822 = vunpack.c.h.b16 %v2114
    %v2823 = vunpack.c.l.b16 %v2115
    %v2824 = vunpack.c.h.b16 %v2115
    %v2825 = vunpack.c.l.b16 %v2116
    %v2826 = vunpack.c.h.b16 %v2116
    %v2827 = vunpack.c.l.b16 %v2117
    %v2828 = vunpack.c.h.b16 %v2117
    %v2829 = vunpack.c.l.b16 %v2118
    %v2830 = vunpack.c.h.b16 %v2118
    %v2831 = vunpack.c.l.b16 %v2119
    %v2832 = vunpack.c.h.b16 %v2119
    %v2833 = vunpack.c.l.b16 %v2120
    %v2834 = vunpack.c.h.b16 %v2120
    %v2835 = vunpack.c.l.b16 %v2121
    %v2836 = vunpack.c.h.b16 %v2121
    %v2837 = vunpack.c.l.b16 %v2122
    %v2838 = vunpack.c.h.b16 %v2122
    %v2839 = vunpack.c.l.b16 %v2123
    %v2840 = vunpack.c.h.b16 %v2123
    %v2841 = vunpack.c.l.b16 %v2124
    %v2842 = vunpack.c.h.b16 %v2124
    %v2843 = vunpack.c.l.b16 %v2125
    %v2844 = vunpack.c.h.b16 %v2125
    %v2845 = vunpack.c.l.b16 %v2126
    %v2846 = vunpack.c.h.b16 %v2126
    %v2847 = vunpack.c.l.b16 %v2127
    %v2848 = vunpack.c.h.b16 %v2127
    %v2849 = vunpack.c.l.b16 %v2128
    %v2850 = vunpack.c.h.b16 %v2128
    %v2851 = vunpack.c.l.b16 %v2129
    %v2852 = vunpack.c.h.b16 %v2129
    %v2853 = vunpack.c.l.b16 %v2130
    %v2854 = vunpack.c.h.b16 %v2130
    %v2855 = vunpack.c.l.b16 %v2131
    %v2856 = vunpack.c.h.b16 %v2131
    %v2857 = vunpack.c.l.b16 %v2132
    %v2858 = vunpack.c.h.b16 %v2132
    %v2859 = vunpack.c.l.b16 %v2133
    %v2860 = vunpack.c.h.b16 %v2133
    %v2861 = vunpack.c.l.b16 %v2134
    %v2862 = vunpack.c.h.b16 %v2134
    %v2863 = vunpack.c.l.b16 %v2135
    %v2864 = vunpack.c.h.b16 %v2135
    %v2865 = vunpack.c.l.b16 %v2136
    %v2866 = vunpack.c.h.b16 %v2136
    %v2867 = vunpack.c.l.b16 %v2137
    %v2868 = vunpack.c.h.b16 %v2137
    %v2869 = vunpack.c.l.b16 %v2138
    %v2870 = vunpack.c.h.b16 %v2138
    %v2871 = vunpack.c.l.b16 %v2139
    %v2872 = vunpack.c.h.b16 %v2139
    %v2873 = vunpack.c.l.b16 %v2140
    %v2874 = vunpack.c.h.b16 %v2140
    %v2875 = vunpack.c.l.b16 %v2141
    %v2876 = vunpack.c.h.b16 %v2141
    %v2877 = vunpack.c.l.b16 %v2142
    %v2878 = vunpack.c.h.b16 %v2142
    %v2879 = vunpack.c.l.b16 %v2143
    %v2880 = vunpack.c.h.b16 %v2143
    %v2881 = vunpack.c.l.b16 %v2144
    %v2882 = vunpack.c.h.b16 %v2144
    %v2883 = vunpack.c.l.b16 %v2145
    %v2884 = vunpack.c.h.b16 %v2145
    %v2885 = vunpack.c.l.b16 %v2146
    %v2886 = vunpack.c.h.b16 %v2146
    %v2887 = vunpack.c.l.b16 %v2147
    %v2888 = vunpack.c.h.b16 %v2147
    %v2889 = vunpack.c.l.b16 %v2148
    %v2890 = vunpack.c.h.b16 %v2148
    %v2891 = vunpack.c.l.b16 %v2149
    %v2892 = vunpack.c.h.b16 %v2149
    %v2893 = vunpack.c.l.b16 %v2150
    %v2894 = vunpack.c.h.b16 %v2150
    %v2895 = vunpack.c.l.b16 %v2151
    %v2896 = vunpack.c.h.b16 %v2151
    %v2897 = vunpack.c.l.b16 %v2152
    %v2898 = vunpack.c.h.b16 %v2152
    %v2899 = vunpack.c.l.b16 %v2153
    %v2900 = vunpack.c.h.b16 %v2153
    %v2901 = vunpack.c.l.b16 %v2154
    %v2902 = vunpack.c.h.b16 %v2154
    %v2903 = vunpack.c.l.b16 %v2155
    %v2904 = vunpack.c.h.b16 %v2155
    %v2905 = vunpack.c.l.b16 %v2156
    %v2906 = vunpack.c.h.b16 %v2156
    %v2907 = vunpack.c.l.b16 %v2157
    %v2908 = vunpack.c.h.b16 %v2157
    %v2909 = vunpack.c.l.b16 %v2158
    %v2910 = vunpack.c.h.b16 %v2158
    %v2911 = vunpack.c.l.b16 %v2159
    %v2912 = vunpack.c.h.b16 %v2159
    %v2913 = vunpack.c.l.b16 %v2160
    %v2914 = vunpack.c.h.b16 %v2160
    %v2915 = vunpack.c.l.b16 %v2161
    %v2916 = vunpack.c.h.b16 %v2161
    %v2917 = vunpack.c.l.b16 %v2162
    %v2918 = vunpack.c.h.b16 %v2162
    %v2919 = vunpack.c.l.b16 %v2163
    %v2920 = vunpack.c.h.b16 %v2163
    %v2921 = vunpack.c.l.b16 %v2164
    %v2922 = vunpack.c.h.b16 %v2164
    %v2923 = vunpack.c.l.b16 %v2165
    %v2924 = vunpack.c.h.b16 %v2165
    %v2925 = vunpack.c.l.b16 %v2166
    %v2926 = vunpack.c.h.b16 %v2166
    %v2927 = vunpack.c.l.b16 %v2167
    %v2928 = vunpack.c.h.b16 %v2167
    %v2929 = vunpack.c.l.b16 %v2168
    %v2930 = vunpack.c.h.b16 %v2168
    %v2931 = vunpack.c.l.b16 %v2169
    %v2932 = vunpack.c.h.b16 %v2169
    %v2933 = vunpack.c.l.b16 %v2170
    %v2934 = vunpack.c.h.b16 %v2170
    %v2935 = vunpack.c.l.b16 %v2171
    %v2936 = vunpack.c.h.b16 %v2171
    %v2937 = vunpack.c.l.b16 %v2172
    %v2938 = vunpack.c.h.b16 %v2172
    %v2939 = vunpack.c.l.b16 %v2173
    %v2940 = vunpack.c.h.b16 %v2173
    %v2941 = vunpack.c.l.b16 %v2174
    %v2942 = vunpack.c.h.b16 %v2174
    %v2943 = vunpack.c.l.b16 %v2175
    %v2944 = vunpack.c.h.b16 %v2175
    %v2945 = vunpack.c.l.b16 %v2176
    %v2946 = vunpack.c.h.b16 %v2176
    %v2947 = vunpack.c.l.b16 %v2177
    %v2948 = vunpack.c.h.b16 %v2177
    %v2949 = vunpack.c.l.b16 %v2178
    %v2950 = vunpack.c.h.b16 %v2178
    %v2951 = vunpack.c.l.b16 %v2179
    %v2952 = vunpack.c.h.b16 %v2179
    %v2953 = vunpack.c.l.b16 %v2180
    %v2954 = vunpack.c.h.b16 %v2180
    %v2955 = vunpack.c.l.b16 %v2181
    %v2956 = vunpack.c.h.b16 %v2181
    %v2957 = vunpack.c.l.b16 %v2182
    %v2958 = vunpack.c.h.b16 %v2182
    %v2959 = vunpack.c.l.b16 %v2183
    %v2960 = vunpack.c.h.b16 %v2183
    %v2961 = vunpack.c.l.b16 %v2184
    %v2962 = vunpack.c.h.b16 %v2184
    %v2963 = vunpack.c.l.b16 %v2185
    %v2964 = vunpack.c.h.b16 %v2185
    %v2965 = vunpack.c.l.b16 %v2186
    %v2966 = vunpack.c.h.b16 %v2186
    %v2967 = vunpack.c.l.b16 %v2187
    %v2968 = vunpack.c.h.b16 %v2187
    %v2969 = vunpack.c.l.b16 %v2188
    %v2970 = vunpack.c.h.b16 %v2188
    %v2971 = vunpack.c.l.b16 %v2189
    %v2972 = vunpack.c.h.b16 %v2189
    %v2973 = vunpack.c.l.b16 %v2190
    %v2974 = vunpack.c.h.b16 %v2190
    %v2975 = vunpack.c.l.b16 %v2191
    %v2976 = vunpack.c.h.b16 %v2191
    %v2977 = vunpack.c.l.b16 %v2192
    %v2978 = vunpack.c.h.b16 %v2192
    %v2979 = vunpack.c.l.b16 %v2193
    %v2980 = vunpack.c.h.b16 %v2193
    %v2981 = vunpack.c.l.b16 %v2194
    %v2982 = vunpack.c.h.b16 %v2194
    %v2983 = vunpack.c.l.b16 %v2195
    %v2984 = vunpack.c.h.b16 %v2195
    %v2985 = vunpack.c.l.b16 %v2196
    %v2986 = vunpack.c.h.b16 %v2196
    %v2987 = vunpack.c.l.b16 %v2197
    %v2988 = vunpack.c.h.b16 %v2197
    %v2989 = vunpack.c.l.b16 %v2198
    %v2990 = vunpack.c.h.b16 %v2198
    %v2991 = vunpack.c.l.b16 %v2199
    %v2992 = vunpack.c.h.b16 %v2199
    %v2993 = vunpack.c.l.b16 %v2200
    %v2994 = vunpack.c.h.b16 %v2200
    %v2995 = vunpack.c.l.b16 %v2201
    %v2996 = vunpack.c.h.b16 %v2201
    %v2997 = vunpack.c.l.b16 %v2202
    %v2998 = vunpack.c.h.b16 %v2202
    %v2999 = vunpack.c.l.b16 %v2203
    %v3000 = vunpack.c.h.b16 %v2203
    %v3001 = vunpack.c.l.b16 %v2204
    %v3002 = vunpack.c.h.b16 %v2204
    %v3003 = vunpack.c.l.b16 %v2205
    %v3004 = vunpack.c.h.b16 %v2205
    %v3005 = vunpack.c.l.b16 %v2206
    %v3006 = vunpack.c.h.b16 %v2206
    %v3007 = vunpack.c.l.b16 %v2207
    %v3008 = vunpack.c.h.b16 %v2207
    %v3009 = vunpack.c.l.b16 %v2208
    %v3010 = vunpack.c.h.b16 %v2208
    %v3011 = vunpack.c.l.b16 %v2209
    %v3012 = vunpack.c.h.b16 %v2209
    %v3013 = vunpack.c.l.b16 %v2210
    %v3014 = vunpack.c.h.b16 %v2210
    %v3015 = vunpack.c.l.b16 %v2211
    %v3016 = vunpack.c.h.b16 %v2211
    %v3017 = vunpack.c.l.b16 %v2212
    %v3018 = vunpack.c.h.b16 %v2212
    %v3019 = vunpack.c.l.b16 %v2213
    %v3020 = vunpack.c.h.b16 %v2213
    %v3021 = vunpack.c.l.b16 %v2214
    %v3022 = vunpack.c.h.b16 %v2214
    %v3023 = vunpack.c.l.b16 %v2215
    %v3024 = vunpack.c.h.b16 %v2215
    %v3025 = vunpack.c.l.b16 %v2216
    %v3026 = vunpack.c.h.b16 %v2216
    %v3027 = vunpack.c.l.b16 %v2217
    %v3028 = vunpack.c.h.b16 %v2217
    %v3029 = vunpack.c.l.b16 %v2218
    %v3030 = vunpack.c.h.b16 %v2218
    %v3031 = vunpack.c.l.b16 %v2219
    %v3032 = vunpack.c.h.b16 %v2219
    %v3033 = vunpack.c.l.b16 %v2220
    %v3034 = vunpack.c.h.b16 %v2220
    %v3035 = vunpack.c.l.b16 %v2221
    %v3036 = vunpack.c.h.b16 %v2221
    %v3037 = vunpack.c.l.b16 %v2222
    %v3038 = vunpack.c.h.b16 %v2222
    %v3039 = vunpack.c.l.b16 %v2223
    %v3040 = vunpack.c.h.b16 %v2223
    %v3041 = vunpack.c.l.b16 %v2224
    %v3042 = vunpack.c.h.b16 %v2224
    %v3043 = vunpack.c.l.b16 %v2225
    %v3044 = vunpack.c.h.b16 %v2225
    %v3045 = vunpack.c.l.b16 %v2226
    %v3046 = vunpack.c.h.b16 %v2226
    %v3047 = vunpack.c.l.b16 %v2227
    %v3048 = vunpack.c.h.b16 %v2227
    %v3049 = vunpack.c.l.b16 %v2228
    %v3050 = vunpack.c.h.b16 %v2228
    %v3051 = vunpack.c.l.b16 %v2229
    %v3052 = vunpack.c.h.b16 %v2229
    %v3053 = vunpack.c.l.b16 %v2230
    %v3054 = vunpack.c.h.b16 %v2230
    %v3055 = vunpack.c.l.b16 %v2231
    %v3056 = vunpack.c.h.b16 %v2231
    %v3057 = vunpack.c.l.b16 %v2232
    %v3058 = vunpack.c.h.b16 %v2232
    %v3059 = vunpack.c.l.b16 %v2233
    %v3060 = vunpack.c.h.b16 %v2233
    %v3061 = vunpack.c.l.b16 %v2234
    %v3062 = vunpack.c.h.b16 %v2234
    %v3063 = vunpack.c.l.b16 %v2235
    %v3064 = vunpack.c.h.b16 %v2235
    %v3065 = vunpack.c.l.b16 %v2236
    %v3066 = vunpack.c.h.b16 %v2236
    %v3067 = vunpack.c.l.b16 %v2237
    %v3068 = vunpack.c.h.b16 %v2237
    %v3069 = vunpack.c.l.b16 %v2238
    %v3070 = vunpack.c.h.b16 %v2238
    %v3071 = vunpack.c.l.b16 %v2239
    %v3072 = vunpack.c.h.b16 %v2239
    %v3073 = vunpack.c.l.b16 %v2240
    %v3074 = vunpack.c.h.b16 %v2240
    %v3075 = vunpack.c.l.b16 %v2241
    %v3076 = vunpack.c.h.b16 %v2241
    %v3077 = vunpack.c.l.b16 %v2242
    %v3078 = vunpack.c.h.b16 %v2242
    %v3079 = vunpack.c.l.b16 %v2243
    %v3080 = vunpack.c.h.b16 %v2243
    %v3081 = vunpack.c.l.b16 %v2244
    %v3082 = vunpack.c.h.b16 %v2244
    %v3083 = vunpack.c.l.b16 %v2245
    %v3084 = vunpack.c.h.b16 %v2245
    %v3085 = vunpack.c.l.b16 %v2246
    %v3086 = vunpack.c.h.b16 %v2246
    %v3087 = vunpack.c.l.b16 %v2247
    %v3088 = vunpack.c.h.b16 %v2247
    %v3089 = vunpack.c.l.b16 %v2248
    %v3090 = vunpack.c.h.b16 %v2248
    %v3091 = vunpack.c.l.b16 %v2249
    %v3092 = vunpack.c.h.b16 %v2249
    %v3093 = vunpack.c.l.b16 %v2250
    %v3094 = vunpack.c.h.b16 %v2250
    %v3095 = vunpack.c.l.b16 %v2251
    %v3096 = vunpack.c.h.b16 %v2251
    %v3097 = vunpack.c.l.b16 %v2252
    %v3098 = vunpack.c.h.b16 %v2252
    %v3099 = vunpack.c.l.b16 %v2253
    %v3100 = vunpack.c.h.b16 %v2253
    %v3101 = vunpack.c.l.b16 %v2254
    %v3102 = vunpack.c.h.b16 %v2254
    %v3103 = vunpack.c.l.b16 %v2255
    %v3104 = vunpack.c.h.b16 %v2255
    %v3105 = vunpack.c.l.b16 %v2256
    %v3106 = vunpack.c.h.b16 %v2256
    %v3107 = vunpack.c.l.b16 %v2257
    %v3108 = vunpack.c.h.b16 %v2257
    %v3109 = vunpack.c.l.b16 %v2258
    %v3110 = vunpack.c.h.b16 %v2258
    %v3111 = vunpack.c.l.b16 %v2259
    %v3112 = vunpack.c.h.b16 %v2259
    %v3113 = vunpack.c.l.b16 %v2260
    %v3114 = vunpack.c.h.b16 %v2260
    %v3115 = vunpack.c.l.b16 %v2261
    %v3116 = vunpack.c.h.b16 %v2261
    %v3117 = vunpack.c.l.b16 %v2262
    %v3118 = vunpack.c.h.b16 %v2262
    %v3119 = vunpack.c.l.b16 %v2263
    %v3120 = vunpack.c.h.b16 %v2263
    %v3121 = vunpack.c.l.b16 %v2264
    %v3122 = vunpack.c.h.b16 %v2264
    %v3123 = vunpack.c.l.b16 %v2265
    %v3124 = vunpack.c.h.b16 %v2265
    %v3125 = vunpack.c.l.b16 %v2266
    %v3126 = vunpack.c.h.b16 %v2266
    %v3127 = vunpack.c.l.b16 %v2267
    %v3128 = vunpack.c.h.b16 %v2267
    %v3129 = vunpack.c.l.b16 %v2268
    %v3130 = vunpack.c.h.b16 %v2268
    %v3131 = vunpack.c.l.b16 %v2269
    %v3132 = vunpack.c.h.b16 %v2269
    %v3133 = vunpack.c.l.b16 %v2270
    %v3134 = vunpack.c.h.b16 %v2270
    %v3135 = vunpack.c.l.b16 %v2271
    %v3136 = vunpack.c.h.b16 %v2271
    %v3137 = vunpack.c.l.b16 %v2272
    %v3138 = vunpack.c.h.b16 %v2272
    %v3139 = vunpack.c.l.b16 %v2273
    %v3140 = vunpack.c.h.b16 %v2273
    %v3141 = vunpack.c.l.b16 %v2274
    %v3142 = vunpack.c.h.b16 %v2274
    %v3143 = vunpack.c.l.b16 %v2275
    %v3144 = vunpack.c.h.b16 %v2275
    %v3145 = vunpack.c.l.b16 %v2276
    %v3146 = vunpack.c.h.b16 %v2276
    %v3147 = vunpack.c.l.b16 %v2277
    %v3148 = vunpack.c.h.b16 %v2277
    %v3149 = vunpack.c.l.b16 %v2278
    %v3150 = vunpack.c.h.b16 %v2278
    %v3151 = vunpack.c.l.b16 %v2279
    %v3152 = vunpack.c.h.b16 %v2279
    %v3153 = vunpack.c.l.b16 %v2280
    %v3154 = vunpack.c.h.b16 %v2280
    %v3155 = vunpack.c.l.b16 %v2281
    %v3156 = vunpack.c.h.b16 %v2281
    %v3157 = vunpack.c.l.b16 %v2282
    %v3158 = vunpack.c.h.b16 %v2282
    %v3159 = vunpack.c.l.b16 %v2283
    %v3160 = vunpack.c.h.b16 %v2283
    %v3161 = vunpack.c.l.b16 %v2284
    %v3162 = vunpack.c.h.b16 %v2284
    %v3163 = vunpack.c.l.b16 %v2285
    %v3164 = vunpack.c.h.b16 %v2285
    %v3165 = vunpack.c.l.b16 %v2286
    %v3166 = vunpack.c.h.b16 %v2286
    %v3167 = vunpack.c.l.b16 %v2287
    %v3168 = vunpack.c.h.b16 %v2287
    %v3169 = vunpack.c.l.b16 %v2288
    %v3170 = vunpack.c.h.b16 %v2288
    %v3171 = vunpack.c.l.b16 %v2289
    %v3172 = vunpack.c.h.b16 %v2289
    %v3173 = vunpack.c.l.b16 %v2290
    %v3174 = vunpack.c.h.b16 %v2290
    %v3175 = vunpack.c.l.b16 %v2291
    %v3176 = vunpack.c.h.b16 %v2291
    %v3177 = vunpack.c.l.b16 %v2292
    %v3178 = vunpack.c.h.b16 %v2292
    %v3179 = vunpack.c.l.b16 %v2293
    %v3180 = vunpack.c.h.b16 %v2293
    %v3181 = vunpack.c.l.b16 %v2294
    %v3182 = vunpack.c.h.b16 %v2294
    %v3183 = vunpack.c.l.b16 %v2295
    %v3184 = vunpack.c.h.b16 %v2295
    %v3185 = vunpack.c.l.b16 %v2296
    %v3186 = vunpack.c.h.b16 %v2296
    %v3187 = vunpack.c.l.b16 %v2297
    %v3188 = vunpack.c.h.b16 %v2297
    %v3189 = vunpack.c.l.b16 %v2298
    %v3190 = vunpack.c.h.b16 %v2298
    %v3191 = vunpack.c.l.b16 %v2299
    %v3192 = vunpack.c.h.b16 %v2299
    %v3193 = vunpack.c.l.b16 %v2300
    %v3194 = vunpack.c.h.b16 %v2300
    %v3195 = vunpack.c.l.b16 %v2301
    %v3196 = vunpack.c.h.b16 %v2301
    %v3197 = vunpack.c.l.b16 %v2302
    %v3198 = vunpack.c.h.b16 %v2302
    %v3199 = vunpack.c.l.b16 %v2303
    %v3200 = vunpack.c.h.b16 %v2303
    %v3201 = vunpack.c.l.b16 %v2304
    %v3202 = vunpack.c.h.b16 %v2304
    %v3203 = vunpack.c.l.b16 %v2305
    %v3204 = vunpack.c.h.b16 %v2305
    %v3205 = vunpack.c.l.b16 %v2306
    %v3206 = vunpack.c.h.b16 %v2306
    %v3207 = vunpack.c.l.b16 %v2307
    %v3208 = vunpack.c.h.b16 %v2307
    %v3209 = vunpack.c.l.b16 %v2308
    %v3210 = vunpack.c.h.b16 %v2308
    %v3211 = vunpack.c.l.b16 %v2309
    %v3212 = vunpack.c.h.b16 %v2309
    %v3213 = vunpack.c.l.b16 %v2310
    %v3214 = vunpack.c.h.b16 %v2310
    %v3215 = vunpack.c.l.b16 %v2311
    %v3216 = vunpack.c.h.b16 %v2311
    %v3217 = vunpack.c.l.b16 %v2312
    %v3218 = vunpack.c.h.b16 %v2312
    %v3219 = vunpack.c.l.b16 %v2313
    %v3220 = vunpack.c.h.b16 %v2313
    %v3221 = vunpack.c.l.b16 %v2314
    %v3222 = vunpack.c.h.b16 %v2314
    %v3223 = vunpack.c.l.b16 %v2315
    %v3224 = vunpack.c.h.b16 %v2315
    %v3225 = vunpack.c.l.b16 %v2316
    %v3226 = vunpack.c.h.b16 %v2316
    %v3227 = vunpack.c.l.b16 %v2317
    %v3228 = vunpack.c.h.b16 %v2317
    %v3229 = vunpack.c.l.b16 %v2318
    %v3230 = vunpack.c.h.b16 %v2318
    %v3231 = vunpack.c.l.b16 %v2319
    %v3232 = vunpack.c.h.b16 %v2319
    %v3233 = vunpack.c.l.b16 %v2320
    %v3234 = vunpack.c.h.b16 %v2320
    %v3235 = vunpack.c.l.b16 %v2321
    %v3236 = vunpack.c.h.b16 %v2321
    %v3237 = vunpack.c.l.b16 %v2322
    %v3238 = vunpack.c.h.b16 %v2322
    %v3239 = vunpack.c.l.b16 %v2323
    %v3240 = vunpack.c.h.b16 %v2323
    %v3241 = vunpack.c.l.b16 %v2324
    %v3242 = vunpack.c.h.b16 %v2324
    %v3243 = vunpack.c.l.b16 %v2325
    %v3244 = vunpack.c.h.b16 %v2325
    %v3245 = vunpack.c.l.b16 %v2326
    %v3246 = vunpack.c.h.b16 %v2326
    %v3247 = vunpack.c.l.b16 %v2327
    %v3248 = vunpack.c.h.b16 %v2327
    %v3249 = vunpack.c.l.b16 %v2328
    %v3250 = vunpack.c.h.b16 %v2328
    %v3251 = vunpack.c.l.b16 %v2329
    %v3252 = vunpack.c.h.b16 %v2329
    %v3253 = vunpack.c.l.b16 %v2330
    %v3254 = vunpack.c.h.b16 %v2330
    %v3255 = vunpack.c.l.b16 %v2331
    %v3256 = vunpack.c.h.b16 %v2331
    %v3257 = vunpack.c.l.b16 %v2332
    %v3258 = vunpack.c.h.b16 %v2332
    %v3259 = vunpack.c.l.b16 %v2333
    %v3260 = vunpack.c.h.b16 %v2333
    %v3261 = vunpack.c.l.b16 %v2334
    %v3262 = vunpack.c.h.b16 %v2334
    %v3263 = vunpack.c.l.b16 %v2335
    %v3264 = vunpack.c.h.b16 %v2335
    %v3265 = vunpack.c.l.b16 %v2336
    %v3266 = vunpack.c.h.b16 %v2336
    %v3267 = vunpack.c.l.b16 %v2337
    %v3268 = vunpack.c.h.b16 %v2337
    %v3269 = vunpack.c.l.b16 %v2338
    %v3270 = vunpack.c.h.b16 %v2338
    %v3271 = vunpack.c.l.b16 %v2339
    %v3272 = vunpack.c.h.b16 %v2339
    %v3273 = vunpack.c.l.b16 %v2340
    %v3274 = vunpack.c.h.b16 %v2340
    %v3275 = vunpack.c.l.b16 %v2341
    %v3276 = vunpack.c.h.b16 %v2341
    %v3277 = vunpack.c.l.b16 %v2342
    %v3278 = vunpack.c.h.b16 %v2342
    %v3279 = vunpack.c.l.b16 %v2343
    %v3280 = vunpack.c.h.b16 %v2343
    %v3281 = vunpack.c.l.b16 %v2344
    %v3282 = vunpack.c.h.b16 %v2344
    %v3283 = vunpack.c.l.b16 %v2345
    %v3284 = vunpack.c.h.b16 %v2345
    %v3285 = vunpack.c.l.b16 %v2346
    %v3286 = vunpack.c.h.b16 %v2346
    %v3287 = vunpack.c.l.b16 %v2347
    %v3288 = vunpack.c.h.b16 %v2347
    %v3289 = vunpack.c.l.b16 %v2348
    %v3290 = vunpack.c.h.b16 %v2348
    %v3291 = vunpack.c.l.b16 %v2349
    %v3292 = vunpack.c.h.b16 %v2349
    %v3293 = vunpack.c.l.b16 %v2350
    %v3294 = vunpack.c.h.b16 %v2350
    %v3295 = vunpack.c.l.b16 %v2351
    %v3296 = vunpack.c.h.b16 %v2351
    %v3297 = vunpack.c.l.b16 %v2352
    %v3298 = vunpack.c.h.b16 %v2352
    %v3299 = vunpack.c.l.b16 %v2353
    %v3300 = vunpack.c.h.b16 %v2353
    %v3301 = vunpack.c.l.b16 %v2354
    %v3302 = vunpack.c.h.b16 %v2354
    %v3303 = vunpack.c.l.b16 %v2355
    %v3304 = vunpack.c.h.b16 %v2355
    %v3305 = vunpack.c.l.b16 %v2356
    %v3306 = vunpack.c.h.b16 %v2356
    %v3307 = vunpack.c.l.b16 %v2357
    %v3308 = vunpack.c.h.b16 %v2357
    %v3309 = vunpack.c.l.b16 %v2358
    %v3310 = vunpack.c.h.b16 %v2358
    %v3311 = vunpack.c.l.b16 %v2359
    %v3312 = vunpack.c.h.b16 %v2359
    %v3313 = vunpack.c.l.b16 %v2360
    %v3314 = vunpack.c.h.b16 %v2360
    %v3315 = vunpack.c.l.b16 %v2361
    %v3316 = vunpack.c.h.b16 %v2361
    %v3317 = vunpack.c.l.b16 %v2362
    %v3318 = vunpack.c.h.b16 %v2362
    %v3319 = vunpack.c.l.b16 %v2363
    %v3320 = vunpack.c.h.b16 %v2363
    %v3321 = vunpack.c.l.b16 %v2364
    %v3322 = vunpack.c.h.b16 %v2364
    %v3323 = vunpack.c.l.b16 %v2365
    %v3324 = vunpack.c.h.b16 %v2365
    %v3325 = vunpack.c.l.b16 %v2366
    %v3326 = vunpack.c.h.b16 %v2366
    %v3327 = vunpack.c.l.b16 %v2367
    %v3328 = vunpack.c.h.b16 %v2367
    %v3329 = vunpack.c.l.b16 %v2368
    %v3330 = vunpack.c.h.b16 %v2368
    %v3331 = vunpack.c.l.b16 %v2369
    %v3332 = vunpack.c.h.b16 %v2369
    %v3333 = vunpack.c.l.b16 %v2370
    %v3334 = vunpack.c.h.b16 %v2370
    %v3335 = vunpack.c.l.b16 %v2371
    %v3336 = vunpack.c.h.b16 %v2371
    %v3337 = vunpack.c.l.b16 %v2372
    %v3338 = vunpack.c.h.b16 %v2372
    %v3339 = vunpack.c.l.b16 %v2373
    %v3340 = vunpack.c.h.b16 %v2373
    %v3341 = vunpack.c.l.b16 %v2374
    %v3342 = vunpack.c.h.b16 %v2374
    %v3343 = vunpack.c.l.b16 %v2375
    %v3344 = vunpack.c.h.b16 %v2375
    %v3345 = vunpack.c.l.b16 %v2376
    %v3346 = vunpack.c.h.b16 %v2376
    %v3347 = vunpack.c.l.b16 %v2377
    %v3348 = vunpack.c.h.b16 %v2377
    %v3349 = vunpack.c.l.b16 %v2378
    %v3350 = vunpack.c.h.b16 %v2378
    %v3351 = vunpack.c.l.b16 %v2379
    %v3352 = vunpack.c.h.b16 %v2379
    %v3353 = vunpack.c.l.b16 %v2380
    %v3354 = vunpack.c.h.b16 %v2380
    %v3355 = vunpack.c.l.b16 %v2381
    %v3356 = vunpack.c.h.b16 %v2381
    %v3357 = vunpack.c.l.b16 %v2382
    %v3358 = vunpack.c.h.b16 %v2382
    %v3359 = vunpack.c.l.b16 %v2383
    %v3360 = vunpack.c.h.b16 %v2383
    %v3361 = vunpack.c.l.b16 %v2384
    %v3362 = vunpack.c.h.b16 %v2384
    %v3363 = vunpack.c.l.b16 %v2385
    %v3364 = vunpack.c.h.b16 %v2385
    %v3365 = vunpack.c.l.b16 %v2386
    %v3366 = vunpack.c.h.b16 %v2386
    %v3367 = vunpack.c.l.b16 %v2387
    %v3368 = vunpack.c.h.b16 %v2387
    %v3369 = vunpack.c.l.b16 %v2388
    %v3370 = vunpack.c.h.b16 %v2388
    %v3371 = vunpack.c.l.b16 %v2389
    %v3372 = vunpack.c.h.b16 %v2389
    %v3373 = vunpack.c.l.b16 %v2390
    %v3374 = vunpack.c.h.b16 %v2390
    %v3375 = vunpack.c.l.b16 %v2391
    %v3376 = vunpack.c.h.b16 %v2391
    %v3377 = vunpack.c.l.b16 %v2392
    %v3378 = vunpack.c.h.b16 %v2392
    %v3379 = vunpack.c.l.b16 %v2393
    %v3380 = vunpack.c.h.b16 %v2393
    %v3381 = vunpack.c.l.b16 %v2394
    %v3382 = vunpack.c.h.b16 %v2394
    %v3383 = vunpack.c.l.b16 %v2395
    %v3384 = vunpack.c.h.b16 %v2395
    %v3385 = vunpack.c.l.b16 %v2396
    %v3386 = vunpack.c.h.b16 %v2396
    %v3387 = vunpack.c.l.b16 %v2397
    %v3388 = vunpack.c.h.b16 %v2397
    %v3389 = vunpack.c.l.b16 %v2398
    %v3390 = vunpack.c.h.b16 %v2398
    %v3391 = vunpack.c.l.b16 %v2399
    %v3392 = vunpack.c.h.b16 %v2399
    %v3393 = vunpack.c.l.b16 %v2400
    %v3394 = vunpack.c.h.b16 %v2400
    %v3395 = vunpack.c.l.b16 %v2401
    %v3396 = vunpack.c.h.b16 %v2401
    %v3397 = vunpack.c.l.b16 %v2402
    %v3398 = vunpack.c.h.b16 %v2402
    %v3399 = vunpack.c.l.b16 %v2403
    %v3400 = vunpack.c.h.b16 %v2403
    %v3401 = vunpack.c.l.b16 %v2404
    %v3402 = vunpack.c.h.b16 %v2404
    %v3403 = vunpack.c.l.b16 %v2405
    %v3404 = vunpack.c.h.b16 %v2405
    %v3405 = vunpack.c.l.b16 %v2406
    %v3406 = vunpack.c.h.b16 %v2406
    %v3407 = vunpack.c.l.b16 %v2407
    %v3408 = vunpack.c.h.b16 %v2407
    %v3409 = vunpack.c.l.b16 %v2408
    %v3410 = vunpack.c.h.b16 %v2408
    %v3411 = vunpack.c.l.b16 %v2409
    %v3412 = vunpack.c.h.b16 %v2409
    %v3413 = vunpack.c.l.b16 %v2410
    %v3414 = vunpack.c.h.b16 %v2410
    %v3415 = vunpack.c.l.b16 %v2411
    %v3416 = vunpack.c.h.b16 %v2411
    %v3417 = vunpack.c.l.b16 %v2412
    %v3418 = vunpack.c.h.b16 %v2412
    %v3419 = vunpack.c.l.b16 %v2413
    %v3420 = vunpack.c.h.b16 %v2413
    %v3421 = vunpack.c.l.b16 %v2414
    %v3422 = vunpack.c.h.b16 %v2414
    %v3423 = vunpack.c.l.b16 %v2415
    %v3424 = vunpack.c.h.b16 %v2415
    %v3425 = vunpack.c.l.b16 %v2416
    %v3426 = vunpack.c.h.b16 %v2416
    %v3427 = vunpack.c.l.b16 %v2417
    %v3428 = vunpack.c.h.b16 %v2417
    %v3429 = vunpack.c.l.b16 %v2418
    %v3430 = vunpack.c.h.b16 %v2418
    %v3431 = vunpack.c.l.b16 %v2419
    %v3432 = vunpack.c.h.b16 %v2419
    %v3433 = vunpack.c.l.b16 %v2420
    %v3434 = vunpack.c.h.b16 %v2420
    %v3435 = vpack.c.b16 %v2805, %v2795
    %v3436 = vpack.c.b16 %v2806, %v2796
    %v3437 = vpack.c.b16 %v2807, %v2797
    %v3438 = vpack.c.b16 %v2808, %v2798
    %v3439 = vpack.c.b16 %v2809, %v2799
    %v3440 = vpack.c.b16 %v2810, %v2800
    %v3441 = vpack.c.b16 %v2811, %v2801
    %v3442 = vpack.c.b16 %v2812, %v2802
    %v3443 = vpack.c.b16 %v2813, %v2803
    %v3444 = vpack.c.b16 %v2814, %v2804
    %v3445 = vpack.c.b16 %v2825, %v2815
    %v3446 = vpack.c.b16 %v2826, %v2816
    %v3447 = vpack.c.b16 %v2827, %v2817
    %v3448 = vpack.c.b16 %v2828, %v2818
    %v3449 = vpack.c.b16 %v2829, %v2819
    %v3450 = vpack.c.b16 %v2830, %v2820
    %v3451 = vpack.c.b16 %v2831, %v2821
    %v3452 = vpack.c.b16 %v2832, %v2822
    %v3453 = vpack.c.b16 %v2833, %v2823
    %v3454 = vpack.c.b16 %v2834, %v2824
    %v3455 = vpack.c.b16 %v2845, %v2835
    %v3456 = vpack.c.b16 %v2846, %v2836
    %v3457 = vpack.c.b16 %v2847, %v2837
    %v3458 = vpack.c.b16 %v2848, %v2838
    %v3459 = vpack.c.b16 %v2849, %v2839
    %v3460 = vpack.c.b16 %v2850, %v2840
    %v3461 = vpack.c.b16 %v2851, %v2841
    %v3462 = vpack.c.b16 %v2852, %v2842
    %v3463 = vpack.c.b16 %v2853, %v2843
    %v3464 = vpack.c.b16 %v2854, %v2844
    %v3465 = vpack.c.b16 %v2865, %v2855
    %v3466 = vpack.c.b16 %v2866, %v2856
    %v3467 = vpack.c.b16 %v2867, %v2857
    %v3468 = vpack.c.b16 %v2868, %v2858
    %v3469 = vpack.c.b16 %v2869, %v2859
    %v3470 = vpack.c.b16 %v2870, %v2860
    %v3471 = vpack.c.b16 %v2871, %v2861
    %v3472 = vpack.c.b16 %v2872, %v2862
    %v3473 = vpack.c.b16 %v2873, %v2863
    %v3474 = vpack.c.b16 %v2874, %v2864
    %v3475 = vpack.c.b16 %v2885, %v2875
    %v3476 = vpack.c.b16 %v2886, %v2876
    %v3477 = vpack.c.b16 %v2887, %v2877
    %v3478 = vpack.c.b16 %v2888, %v2878
    %v3479 = vpack.c.b16 %v2889, %v2879
    %v3480 = vpack.c.b16 %v2890, %v2880
    %v3481 = vpack.c.b16 %v2891, %v2881
    %v3482 = vpack.c.b16 %v2892, %v2882
    %v3483 = vpack.c.b16 %v2893, %v2883
    %v3484 = vpack.c.b16 %v2894, %v2884
    %v3485 = vpack.c.b16 %v2905, %v2895
    %v3486 = vpack.c.b16 %v2906, %v2896
    %v3487 = vpack.c.b16 %v2907, %v2897
    %v3488 = vpack.c.b16 %v2908, %v2898
    %v3489 = vpack.c.b16 %v2909, %v2899
    %v3490 = vpack.c.b16 %v2910, %v2900
    %v3491 = vpack.c.b16 %v2911, %v2901
    %v3492 = vpack.c.b16 %v2912, %v2902
    %v3493 = vpack.c.b16 %v2913, %v2903
    %v3494 = vpack.c.b16 %v2914, %v2904
    %v3495 = vpack.c.b16 %v2925, %v2915
    %v3496 = vpack.c.b16 %v2926, %v2916
    %v3497 = vpack.c.b16 %v2927, %v2917
    %v3498 = vpack.c.b16 %v2928, %v2918
    %v3499 = vpack.c.b16 %v2929, %v2919
    %v3500 = vpack.c.b16 %v2930, %v2920
    %v3501 = vpack.c.b16 %v2931, %v2921
    %v3502 = vpack.c.b16 %v2932, %v2922
    %v3503 = vpack.c.b16 %v2933, %v2923
    %v3504 = vpack.c.b16 %v2934, %v2924
    %v3505 = vpack.c.b16 %v2945, %v2935
    %v3506 = vpack.c.b16 %v2946, %v2936
    %v3507 = vpack.c.b16 %v2947, %v2937
    %v3508 = vpack.c.b16 %v2948, %v2938
    %v3509 = vpack.c.b16 %v2949, %v2939
    %v3510 = vpack.c.b16 %v2950, %v2940
    %v3511 = vpack.c.b16 %v2951, %v2941
    %v3512 = vpack.c.b16 %v2952, %v2942
    %v3513 = vpack.c.b16 %v2953, %v2943
    %v3514 = vpack.c.b16 %v2954, %v2944
    %v3515 = vpack.c.b16 %v2965, %v2955
    %v3516 = vpack.c.b16 %v2966, %v2956
    %v3517 = vpack.c.b16 %v2967, %v2957
    %v3518 = vpack.c.b16 %v2968, %v2958
    %v3519 = vpack.c.b16 %v2969, %v2959
    %v3520 = vpack.c.b16 %v2970, %v2960
    %v3521 = vpack.c.b16 %v2971, %v2961
    %v3522 = vpack.c.b16 %v2972, %v2962
    %v3523 = vpack.c.b16 %v2973, %v2963
    %v3524 = vpack.c.b16 %v2974, %v2964
    %v3525 = vpack.c.b16 %v2985, %v2975
    %v3526 = vpack.c.b16 %v2986, %v2976
    %v3527 = vpack.c.b16 %v2987, %v2977
    %v3528 = vpack.c.b16 %v2988, %v2978
    %v3529 = vpack.c.b16 %v2989, %v2979
    %v3530 = vpack.c.b16 %v2990, %v2980
    %v3531 = vpack.c.b16 %v2991, %v2981
    %v3532 = vpack.c.b16 %v2992, %v2982
    %v3533 = vpack.c.b16 %v2993, %v2983
    %v3534 = vpack.c.b16 %v2994, %v2984
    %v3535 = vpack.c.b16 %v3005, %v2995
    %v3536 = vpack.c.b16 %v3006, %v2996
    %v3537 = vpack.c.b16 %v3007, %v2997
    %v3538 = vpack.c.b16 %v3008, %v2998
    %v3539 = vpack.c.b16 %v3009, %v2999
    %v3540 = vpack.c.b16 %v3010, %v3000
    %v3541 = vpack.c.b16 %v3011, %v3001
    %v3542 = vpack.c.b16 %v3012, %v3002
    %v3543 = vpack.c.b16 %v3013, %v3003
    %v3544 = vpack.c.b16 %v3014, %v3004
    %v3545 = vpack.c.b16 %v3025, %v3015
    %v3546 = vpack.c.b16 %v3026, %v3016
    %v3547 = vpack.c.b16 %v3027, %v3017
    %v3548 = vpack.c.b16 %v3028, %v3018
    %v3549 = vpack.c.b16 %v3029, %v3019
    %v3550 = vpack.c.b16 %v3030, %v3020
    %v3551 = vpack.c.b16 %v3031, %v3021
    %v3552 = vpack.c.b16 %v3032, %v3022
    %v3553 = vpack.c.b16 %v3033, %v3023
    %v3554 = vpack.c.b16 %v3034, %v3024
    %v3555 = vpack.c.b16 %v3045, %v3035
    %v3556 = vpack.c.b16 %v3046, %v3036
    %v3557 = vpack.c.b16 %v3047, %v3037
    %v3558 = vpack.c.b16 %v3048, %v3038
    %v3559 = vpack.c.b16 %v3049, %v3039
    %v3560 = vpack.c.b16 %v3050, %v3040
    %v3561 = vpack.c.b16 %v3051, %v3041
    %v3562 = vpack.c.b16 %v3052, %v3042
    %v3563 = vpack.c.b16 %v3053, %v3043
    %v3564 = vpack.c.b16 %v3054, %v3044
    %v3565 = vpack.c.b16 %v3065, %v3055
    %v3566 = vpack.c.b16 %v3066, %v3056
    %v3567 = vpack.c.b16 %v3067, %v3057
    %v3568 = vpack.c.b16 %v3068, %v3058
    %v3569 = vpack.c.b16 %v3069, %v3059
    %v3570 = vpack.c.b16 %v3070, %v3060
    %v3571 = vpack.c.b16 %v3071, %v3061
    %v3572 = vpack.c.b16 %v3072, %v3062
    %v3573 = vpack.c.b16 %v3073, %v3063
    %v3574 = vpack.c.b16 %v3074, %v3064
    %v3575 = vpack.c.b16 %v3085, %v3075
    %v3576 = vpack.c.b16 %v3086, %v3076
    %v3577 = vpack.c.b16 %v3087, %v3077
    %v3578 = vpack.c.b16 %v3088, %v3078
    %v3579 = vpack.c.b16 %v3089, %v3079
    %v3580 = vpack.c.b16 %v3090, %v3080
    %v3581 = vpack.c.b16 %v3091, %v3081
    %v3582 = vpack.c.b16 %v3092, %v3082
    %v3583 = vpack.c.b16 %v3093, %v3083
    %v3584 = vpack.c.b16 %v3094, %v3084
    %v3585 = vpack.c.b16 %v3105, %v3095
    %v3586 = vpack.c.b16 %v3106, %v3096
    %v3587 = vpack.c.b16 %v3107, %v3097
    %v3588 = vpack.c.b16 %v3108, %v3098
    %v3589 = vpack.c.b16 %v3109, %v3099
    %v3590 = vpack.c.b16 %v3110, %v3100
    %v3591 = vpack.c.b16 %v3111, %v3101
    %v3592 = vpack.c.b16 %v3112, %v3102
    %v3593 = vpack.c.b16 %v3113, %v3103
    %v3594 = vpack.c.b16 %v3114, %v3104
    %v3595 = vpack.c.b16 %v3125, %v3115
    %v3596 = vpack.c.b16 %v3126, %v3116
    %v3597 = vpack.c.b16 %v3127, %v3117
    %v3598 = vpack.c.b16 %v3128, %v3118
    %v3599 = vpack.c.b16 %v3129, %v3119
    %v3600 = vpack.c.b16 %v3130, %v3120
    %v3601 = vpack.c.b16 %v3131, %v3121
    %v3602 = vpack.c.b16 %v3132, %v3122
    %v3603 = vpack.c.b16 %v3133, %v3123
    %v3604 = vpack.c.b16 %v3134, %v3124
    %v3605 = vpack.c.b16 %v3145, %v3135
    %v3606 = vpack.c.b16 %v3146, %v3136
    %v3607 = vpack.c.b16 %v3147, %v3137
    %v3608 = vpack.c.b16 %v3148, %v3138
    %v3609 = vpack.c.b16 %v3149, %v3139
    %v3610 = vpack.c.b16 %v3150, %v3140
    %v3611 = vpack.c.b16 %v3151, %v3141
    %v3612 = vpack.c.b16 %v3152, %v3142
    %v3613 = vpack.c.b16 %v3153, %v3143
    %v3614 = vpack.c.b16 %v3154, %v3144
    %v3615 = vpack.c.b16 %v3165, %v3155
    %v3616 = vpack.c.b16 %v3166, %v3156
    %v3617 = vpack.c.b16 %v3167, %v3157
    %v3618 = vpack.c.b16 %v3168, %v3158
    %v3619 = vpack.c.b16 %v3169, %v3159
    %v3620 = vpack.c.b16 %v3170, %v3160
    %v3621 = vpack.c.b16 %v3171, %v3161
    %v3622 = vpack.c.b16 %v3172, %v3162
    %v3623 = vpack.c.b16 %v3173, %v3163
    %v3624 = vpack.c.b16 %v3174, %v3164
    %v3625 = vpack.c.b16 %v3185, %v3175
    %v3626 = vpack.c.b16 %v3186, %v3176
    %v3627 = vpack.c.b16 %v3187, %v3177
    %v3628 = vpack.c.b16 %v3188, %v3178
    %v3629 = vpack.c.b16 %v3189, %v3179
    %v3630 = vpack.c.b16 %v3190, %v3180
    %v3631 = vpack.c.b16 %v3191, %v3181
    %v3632 = vpack.c.b16 %v3192, %v3182
    %v3633 = vpack.c.b16 %v3193, %v3183
    %v3634 = vpack.c.b16 %v3194, %v3184
    %v3635 = vpack.c.b16 %v3205, %v3195
    %v3636 = vpack.c.b16 %v3206, %v3196
    %v3637 = vpack.c.b16 %v3207, %v3197
    %v3638 = vpack.c.b16 %v3208, %v3198
    %v3639 = vpack.c.b16 %v3209, %v3199
    %v3640 = vpack.c.b16 %v3210, %v3200
    %v3641 = vpack.c.b16 %v3211, %v3201
    %v3642 = vpack.c.b16 %v3212, %v3202
    %v3643 = vpack.c.b16 %v3213, %v3203
    %v3644 = vpack.c.b16 %v3214, %v3204
    %v3645 = vpack.c.b16 %v3225, %v3215
    %v3646 = vpack.c.b16 %v3226, %v3216
    %v3647 = vpack.c.b16 %v3227, %v3217
    %v3648 = vpack.c.b16 %v3228, %v3218
    %v3649 = vpack.c.b16 %v3229, %v3219
    %v3650 = vpack.c.b16 %v3230, %v3220
    %v3651 = vpack.c.b16 %v3231, %v3221
    %v3652 = vpack.c.b16 %v3232, %v3222
    %v3653 = vpack.c.b16 %v3233, %v3223
    %v3654 = vpack.c.b16 %v3234, %v3224
    %v3655 = vpack.c.b16 %v3245, %v3235
    %v3656 = vpack.c.b16 %v3246, %v3236
    %v3657 = vpack.c.b16 %v3247, %v3237
    %v3658 = vpack.c.b16 %v3248, %v3238
    %v3659 = vpack.c.b16 %v3249, %v3239
    %v3660 = vpack.c.b16 %v3250, %v3240
    %v3661 = vpack.c.b16 %v3251, %v3241
    %v3662 = vpack.c.b16 %v3252, %v3242
    %v3663 = vpack.c.b16 %v3253, %v3243
    %v3664 = vpack.c.b16 %v3254, %v3244
    %v3665 = vpack.c.b16 %v3265, %v3255
    %v3666 = vpack.c.b16 %v3266, %v3256
    %v3667 = vpack.c.b16 %v3267, %v3257
    %v3668 = vpack.c.b16 %v3268, %v3258
    %v3669 = vpack.c.b16 %v3269, %v3259
    %v3670 = vpack.c.b16 %v3270, %v3260
    %v3671 = vpack.c.b16 %v3271, %v3261
    %v3672 = vpack.c.b16 %v3272, %v3262
    %v3673 = vpack.c.b16 %v3273, %v3263
    %v3674 = vpack.c.b16 %v3274, %v3264
    %v3675 = vpack.c.b16 %v3285, %v3275
    %v3676 = vpack.c.b16 %v3286, %v3276
    %v3677 = vpack.c.b16 %v3287, %v3277
    %v3678 = vpack.c.b16 %v3288, %v3278
    %v3679 = vpack.c.b16 %v3289, %v3279
    %v3680 = vpack.c.b16 %v3290, %v3280
    %v3681 = vpack.c.b16 %v3291, %v3281
    %v3682 = vpack.c.b16 %v3292, %v3282
    %v3683 = vpack.c.b16 %v3293, %v3283
    %v3684 = vpack.c.b16 %v3294, %v3284
    %v3685 = vpack.c.b16 %v3305, %v3295
    %v3686 = vpack.c.b16 %v3306, %v3296
    %v3687 = vpack.c.b16 %v3307, %v3297
    %v3688 = vpack.c.b16 %v3308, %v3298
    %v3689 = vpack.c.b16 %v3309, %v3299
    %v3690 = vpack.c.b16 %v3310, %v3300
    %v3691 = vpack.c.b16 %v3311, %v3301
    %v3692 = vpack.c.b16 %v3312, %v3302
    %v3693 = vpack.c.b16 %v3313, %v3303
    %v3694 = vpack.c.b16 %v3314, %v3304
    %v3695 = vpack.c.b16 %v3325, %v3315
    %v3696 = vpack.c.b16 %v3326, %v3316
    %v3697 = vpack.c.b16 %v3327, %v3317
    %v3698 = vpack.c.b16 %v3328, %v3318
    %v3699 = vpack.c.b16 %v3329, %v3319
    %v3700 = vpack.c.b16 %v3330, %v3320
    %v3701 = vpack.c.b16 %v3331, %v3321
    %v3702 = vpack.c.b16 %v3332, %v3322
    %v3703 = vpack.c.b16 %v3333, %v3323
    %v3704 = vpack.c.b16 %v3334, %v3324
    %v3705 = vpack.c.b16 %v3345, %v3335
    %v3706 = vpack.c.b16 %v3346, %v3336
    %v3707 = vpack.c.b16 %v3347, %v3337
    %v3708 = vpack.c.b16 %v3348, %v3338
    %v3709 = vpack.c.b16 %v3349, %v3339
    %v3710 = vpack.c.b16 %v3350, %v3340
    %v3711 = vpack.c.b16 %v3351, %v3341
    %v3712 = vpack.c.b16 %v3352, %v3342
    %v3713 = vpack.c.b16 %v3353, %v3343
    %v3714 = vpack.c.b16 %v3354, %v3344
    %v3715 = vpack.c.b16 %v3365, %v3355
    %v3716 = vpack.c.b16 %v3366, %v3356
    %v3717 = vpack.c.b16 %v3367, %v3357
    %v3718 = vpack.c.b16 %v3368, %v3358
    %v3719 = vpack.c.b16 %v3369, %v3359
    %v3720 = vpack.c.b16 %v3370, %v3360
    %v3721 = vpack.c.b16 %v3371, %v3361
    %v3722 = vpack.c.b16 %v3372, %v3362
    %v3723 = vpack.c.b16 %v3373, %v3363
    %v3724 = vpack.c.b16 %v3374, %v3364
    %v3725 = vpack.c.b16 %v3385, %v3375
    %v3726 = vpack.c.b16 %v3386, %v3376
    %v3727 = vpack.c.b16 %v3387, %v3377
    %v3728 = vpack.c.b16 %v3388, %v3378
    %v3729 = vpack.c.b16 %v3389, %v3379
    %v3730 = vpack.c.b16 %v3390, %v3380
    %v3731 = vpack.c.b16 %v3391, %v3381
    %v3732 = vpack.c.b16 %v3392, %v3382
    %v3733 = vpack.c.b16 %v3393, %v3383
    %v3734 = vpack.c.b16 %v3394, %v3384
    %v3735 = vpack.c.b16 %v3405, %v3395
    %v3736 = vpack.c.b16 %v3406, %v3396
    %v3737 = vpack.c.b16 %v3407, %v3397
    %v3738 = vpack.c.b16 %v3408, %v3398
    %v3739 = vpack.c.b16 %v3409, %v3399
    %v3740 = vpack.c.b16 %v3410, %v3400
    %v3741 = vpack.c.b16 %v3411, %v3401
    %v3742 = vpack.c.b16 %v3412, %v3402
    %v3743 = vpack.c.b16 %v3413, %v3403
    %v3744 = vpack.c.b16 %v3414, %v3404
    %v3745 = vpack.c.b16 %v3425, %v3415
    %v3746 = vpack.c.b16 %v3426, %v3416
    %v3747 = vpack.c.b16 %v3427, %v3417
    %v3748 = vpack.c.b16 %v3428, %v3418
    %v3749 = vpack.c.b16 %v3429, %v3419
    %v3750 = vpack.c.b16 %v3430, %v3420
    %v3751 = vpack.c.b16 %v3431, %v3421
    %v3752 = vpack.c.b16 %v3432, %v3422
    %v3753 = vpack.c.b16 %v3433, %v3423
    %v3754 = vpack.c.b16 %v3434, %v3424
    %4075 = vmatprep.subr.bf16.mxu0 %v3506
    %4076 = vmatpush1.bf16.msra.mxu0 %v3505
    %4077 = vmatprep.subr.bf16.mxu0 %v3496
    %4078 = vmatpush1.bf16.msra.mxu0 %v3495
    %4079 = vmatprep.subr.bf16.mxu0 %v3486
    %4080 = vmatpush1.bf16.msra.mxu0 %v3485
    %4081 = vmatprep.subr.bf16.mxu0 %v3476
    %4082 = vmatpush1.bf16.msra.mxu0 %v3475
    %4083 = vmatprep.subr.bf16.mxu0 %v3466
    %4084 = vmatpush1.bf16.msra.mxu0 %v3465
    %4085 = vmatprep.subr.bf16.mxu0 %v3456
    %4086 = vmatpush1.bf16.msra.mxu0 %v3455
    %4087 = vmatprep.subr.bf16.mxu0 %v3446
    %4088 = vmatpush1.bf16.msra.mxu0 %v3445
    %4089 = vmatprep.subr.bf16.mxu0 %v3436
    %4090 = vmatpush1.bf16.msra.mxu0 %v3435
    %4091 = vmatprep.subr.bf16.mxu0 %v3586
    %4092 = vmatpush2.bf16.msra.mxu0 %v3585
    %4093 = vmatprep.subr.bf16.mxu0 %v3576
    %4094 = vmatpush2.bf16.msra.mxu0 %v3575
    %4095 = vmatprep.subr.bf16.mxu0 %v3566
    %4096 = vmatpush2.bf16.msra.mxu0 %v3565
    %4097 = vmatprep.subr.bf16.mxu0 %v3556
    %4098 = vmatpush2.bf16.msra.mxu0 %v3555
    %4099 = vmatprep.subr.bf16.mxu0 %v3546
    %4100 = vmatpush2.bf16.msra.mxu0 %v3545
    %4101 = vmatprep.subr.bf16.mxu0 %v3536
    %4102 = vmatpush2.bf16.msra.mxu0 %v3535
    %4103 = vmatprep.subr.bf16.mxu0 %v3526
    %4104 = vmatpush2.bf16.msra.mxu0 %v3525
    %4105 = vmatprep.subr.bf16.mxu0 %v3516
    %4106 = vmatpush2.bf16.msra.mxu0 %v3515
    %4107 = vmatprep.mubr.bf16.mxu0 %v2098
    %4108 = vmatmul.mubr.bf16.gmra.mxu0 %v2097
    %v4109 = vpop.f32.mrf.mxu0
    %v4110 = vadd.f32 %v2428, %v4109
    %v4111 = vpop.f32.mrf.mxu0
    %v4112 = vadd.f32 %v2432, %v4111
    %v4113 = vpop.f32.mrf.mxu0
    %v4114 = vadd.f32 %v2428, %v4113
    %v4115 = vpop.f32.mrf.mxu0
    %v4116 = vadd.f32 %v2432, %v4115
    %4117 = vdwg.mxu0
    %4118 = vmatprep.subr.bf16.mxu0 %v3666
    %4119 = vmatpush1.bf16.msra.mxu0 %v3665
    %4120 = vmatprep.subr.bf16.mxu0 %v3656
    %4121 = vmatpush1.bf16.msra.mxu0 %v3655
    %4122 = vmatprep.subr.bf16.mxu0 %v3646
    %4123 = vmatpush1.bf16.msra.mxu0 %v3645
    %4124 = vmatprep.subr.bf16.mxu0 %v3636
    %4125 = vmatpush1.bf16.msra.mxu0 %v3635
    %4126 = vmatprep.subr.bf16.mxu0 %v3626
    %4127 = vmatpush1.bf16.msra.mxu0 %v3625
    %4128 = vmatprep.subr.bf16.mxu0 %v3616
    %4129 = vmatpush1.bf16.msra.mxu0 %v3615
    %4130 = vmatprep.subr.bf16.mxu0 %v3606
    %4131 = vmatpush1.bf16.msra.mxu0 %v3605
    %4132 = vmatprep.subr.bf16.mxu0 %v3596
    %4133 = vmatpush1.bf16.msra.mxu0 %v3595
    %4134 = vmatprep.subr.bf16.mxu0 %v3746
    %4135 = vmatpush2.bf16.msra.mxu0 %v3745
    %4136 = vmatprep.subr.bf16.mxu0 %v3736
    %4137 = vmatpush2.bf16.msra.mxu0 %v3735
    %4138 = vmatprep.subr.bf16.mxu0 %v3726
    %4139 = vmatpush2.bf16.msra.mxu0 %v3725
    %4140 = vmatprep.subr.bf16.mxu0 %v3716
    %4141 = vmatpush2.bf16.msra.mxu0 %v3715
    %4142 = vmatprep.subr.bf16.mxu0 %v3706
    %4143 = vmatpush2.bf16.msra.mxu0 %v3705
    %4144 = vmatprep.subr.bf16.mxu0 %v3696
    %4145 = vmatpush2.bf16.msra.mxu0 %v3695
    %4146 = vmatprep.subr.bf16.mxu0 %v3686
    %4147 = vmatpush2.bf16.msra.mxu0 %v3685
    %4148 = vmatprep.subr.bf16.mxu0 %v3676
    %4149 = vmatpush2.bf16.msra.mxu0 %v3675
    %4150 = vmatprep.mubr.bf16.mxu0 %v2100
    %4151 = vmatmul.mubr.bf16.gmra.mxu0 %v2099
    %v4152 = vpop.f32.mrf.mxu0
    %v4153 = vadd.f32 %v4110, %v4152
    %v4154 = vpop.f32.mrf.mxu0
    %v4155 = vadd.f32 %v4112, %v4154
    %v4156 = vpop.f32.mrf.mxu0
    %v4157 = vadd.f32 %v4114, %v4156
    %v4158 = vpop.f32.mrf.mxu0
    %v4159 = vadd.f32 %v4116, %v4158
    %4160 = vdwg.mxu0
    %4161 = vmatprep.subr.bf16.mxu0 %v3508
    %4162 = vmatpush1.bf16.msra.mxu0 %v3507
    %4163 = vmatprep.subr.bf16.mxu0 %v3498
    %4164 = vmatpush1.bf16.msra.mxu0 %v3497
    %4165 = vmatprep.subr.bf16.mxu0 %v3488
    %4166 = vmatpush1.bf16.msra.mxu0 %v3487
    %4167 = vmatprep.subr.bf16.mxu0 %v3478
    %4168 = vmatpush1.bf16.msra.mxu0 %v3477
    %4169 = vmatprep.subr.bf16.mxu0 %v3468
    %4170 = vmatpush1.bf16.msra.mxu0 %v3467
    %4171 = vmatprep.subr.bf16.mxu0 %v3458
    %4172 = vmatpush1.bf16.msra.mxu0 %v3457
    %4173 = vmatprep.subr.bf16.mxu0 %v3448
    %4174 = vmatpush1.bf16.msra.mxu0 %v3447
    %4175 = vmatprep.subr.bf16.mxu0 %v3438
    %4176 = vmatpush1.bf16.msra.mxu0 %v3437
    %4177 = vmatprep.subr.bf16.mxu0 %v3588
    %4178 = vmatpush2.bf16.msra.mxu0 %v3587
    %4179 = vmatprep.subr.bf16.mxu0 %v3578
    %4180 = vmatpush2.bf16.msra.mxu0 %v3577
    %4181 = vmatprep.subr.bf16.mxu0 %v3568
    %4182 = vmatpush2.bf16.msra.mxu0 %v3567
    %4183 = vmatprep.subr.bf16.mxu0 %v3558
    %4184 = vmatpush2.bf16.msra.mxu0 %v3557
    %4185 = vmatprep.subr.bf16.mxu0 %v3548
    %4186 = vmatpush2.bf16.msra.mxu0 %v3547
    %4187 = vmatprep.subr.bf16.mxu0 %v3538
    %4188 = vmatpush2.bf16.msra.mxu0 %v3537
    %4189 = vmatprep.subr.bf16.mxu0 %v3528
    %4190 = vmatpush2.bf16.msra.mxu0 %v3527
    %4191 = vmatprep.subr.bf16.mxu0 %v3518
    %4192 = vmatpush2.bf16.msra.mxu0 %v3517
    %4193 = vmatprep.mubr.bf16.mxu0 %v2098
    %4194 = vmatmul.mubr.bf16.gmra.mxu0 %v2097
    %v4195 = vpop.f32.mrf.mxu0
    %v4196 = vadd.f32 %v2436, %v4195
    %v4197 = vpop.f32.mrf.mxu0
    %v4198 = vadd.f32 %v2440, %v4197
    %v4199 = vpop.f32.mrf.mxu0
    %v4200 = vadd.f32 %v2436, %v4199
    %v4201 = vpop.f32.mrf.mxu0
    %v4202 = vadd.f32 %v2440, %v4201
    %4203 = vdwg.mxu0
    %4204 = vmatprep.subr.bf16.mxu0 %v3668
    %4205 = vmatpush1.bf16.msra.mxu0 %v3667
    %4206 = vmatprep.subr.bf16.mxu0 %v3658
    %4207 = vmatpush1.bf16.msra.mxu0 %v3657
    %4208 = vmatprep.subr.bf16.mxu0 %v3648
    %4209 = vmatpush1.bf16.msra.mxu0 %v3647
    %4210 = vmatprep.subr.bf16.mxu0 %v3638
    %4211 = vmatpush1.bf16.msra.mxu0 %v3637
    %4212 = vmatprep.subr.bf16.mxu0 %v3628
    %4213 = vmatpush1.bf16.msra.mxu0 %v3627
    %4214 = vmatprep.subr.bf16.mxu0 %v3618
    %4215 = vmatpush1.bf16.msra.mxu0 %v3617
    %4216 = vmatprep.subr.bf16.mxu0 %v3608
    %4217 = vmatpush1.bf16.msra.mxu0 %v3607
    %4218 = vmatprep.subr.bf16.mxu0 %v3598
    %4219 = vmatpush1.bf16.msra.mxu0 %v3597
    %4220 = vmatprep.subr.bf16.mxu0 %v3748
    %4221 = vmatpush2.bf16.msra.mxu0 %v3747
    %4222 = vmatprep.subr.bf16.mxu0 %v3738
    %4223 = vmatpush2.bf16.msra.mxu0 %v3737
    %4224 = vmatprep.subr.bf16.mxu0 %v3728
    %4225 = vmatpush2.bf16.msra.mxu0 %v3727
    %4226 = vmatprep.subr.bf16.mxu0 %v3718
    %4227 = vmatpush2.bf16.msra.mxu0 %v3717
    %4228 = vmatprep.subr.bf16.mxu0 %v3708
    %4229 = vmatpush2.bf16.msra.mxu0 %v3707
    %4230 = vmatprep.subr.bf16.mxu0 %v3698
    %4231 = vmatpush2.bf16.msra.mxu0 %v3697
    %4232 = vmatprep.subr.bf16.mxu0 %v3688
    %4233 = vmatpush2.bf16.msra.mxu0 %v3687
    %4234 = vmatprep.subr.bf16.mxu0 %v3678
    %4235 = vmatpush2.bf16.msra.mxu0 %v3677
    %4236 = vmatprep.mubr.bf16.mxu0 %v2100
    %4237 = vmatmul.mubr.bf16.gmra.mxu0 %v2099
    %v4238 = vpop.f32.mrf.mxu0
    %v4239 = vadd.f32 %v4196, %v4238
    %v4240 = vpop.f32.mrf.mxu0
    %v4241 = vadd.f32 %v4198, %v4240
    %v4242 = vpop.f32.mrf.mxu0
    %v4243 = vadd.f32 %v4200, %v4242
    %v4244 = vpop.f32.mrf.mxu0
    %v4245 = vadd.f32 %v4202, %v4244
    %4246 = vdwg.mxu0
    %4247 = vmatprep.subr.bf16.mxu0 %v3510
    %4248 = vmatpush1.bf16.msra.mxu0 %v3509
    %4249 = vmatprep.subr.bf16.mxu0 %v3500
    %4250 = vmatpush1.bf16.msra.mxu0 %v3499
    %4251 = vmatprep.subr.bf16.mxu0 %v3490
    %4252 = vmatpush1.bf16.msra.mxu0 %v3489
    %4253 = vmatprep.subr.bf16.mxu0 %v3480
    %4254 = vmatpush1.bf16.msra.mxu0 %v3479
    %4255 = vmatprep.subr.bf16.mxu0 %v3470
    %4256 = vmatpush1.bf16.msra.mxu0 %v3469
    %4257 = vmatprep.subr.bf16.mxu0 %v3460
    %4258 = vmatpush1.bf16.msra.mxu0 %v3459
    %4259 = vmatprep.subr.bf16.mxu0 %v3450
    %4260 = vmatpush1.bf16.msra.mxu0 %v3449
    %4261 = vmatprep.subr.bf16.mxu0 %v3440
    %4262 = vmatpush1.bf16.msra.mxu0 %v3439
    %4263 = vmatprep.subr.bf16.mxu0 %v3590
    %4264 = vmatpush2.bf16.msra.mxu0 %v3589
    %4265 = vmatprep.subr.bf16.mxu0 %v3580
    %4266 = vmatpush2.bf16.msra.mxu0 %v3579
    %4267 = vmatprep.subr.bf16.mxu0 %v3570
    %4268 = vmatpush2.bf16.msra.mxu0 %v3569
    %4269 = vmatprep.subr.bf16.mxu0 %v3560
    %4270 = vmatpush2.bf16.msra.mxu0 %v3559
    %4271 = vmatprep.subr.bf16.mxu0 %v3550
    %4272 = vmatpush2.bf16.msra.mxu0 %v3549
    %4273 = vmatprep.subr.bf16.mxu0 %v3540
    %4274 = vmatpush2.bf16.msra.mxu0 %v3539
    %4275 = vmatprep.subr.bf16.mxu0 %v3530
    %4276 = vmatpush2.bf16.msra.mxu0 %v3529
    %4277 = vmatprep.subr.bf16.mxu0 %v3520
    %4278 = vmatpush2.bf16.msra.mxu0 %v3519
    %4279 = vmatprep.mubr.bf16.mxu0 %v2098
    %4280 = vmatmul.mubr.bf16.gmra.mxu0 %v2097
    %v4281 = vpop.f32.mrf.mxu0
    %v4282 = vadd.f32 %v2444, %v4281
    %v4283 = vpop.f32.mrf.mxu0
    %v4284 = vadd.f32 %v2448, %v4283
    %v4285 = vpop.f32.mrf.mxu0
    %v4286 = vadd.f32 %v2444, %v4285
    %v4287 = vpop.f32.mrf.mxu0
    %v4288 = vadd.f32 %v2448, %v4287
    %4289 = vdwg.mxu0
    %4290 = vmatprep.subr.bf16.mxu0 %v3670
    %4291 = vmatpush1.bf16.msra.mxu0 %v3669
    %4292 = vmatprep.subr.bf16.mxu0 %v3660
    %4293 = vmatpush1.bf16.msra.mxu0 %v3659
    %4294 = vmatprep.subr.bf16.mxu0 %v3650
    %4295 = vmatpush1.bf16.msra.mxu0 %v3649
    %4296 = vmatprep.subr.bf16.mxu0 %v3640
    %4297 = vmatpush1.bf16.msra.mxu0 %v3639
    %4298 = vmatprep.subr.bf16.mxu0 %v3630
    %4299 = vmatpush1.bf16.msra.mxu0 %v3629
    %4300 = vmatprep.subr.bf16.mxu0 %v3620
    %4301 = vmatpush1.bf16.msra.mxu0 %v3619
    %4302 = vmatprep.subr.bf16.mxu0 %v3610
    %4303 = vmatpush1.bf16.msra.mxu0 %v3609
    %4304 = vmatprep.subr.bf16.mxu0 %v3600
    %4305 = vmatpush1.bf16.msra.mxu0 %v3599
    %4306 = vmatprep.subr.bf16.mxu0 %v3750
    %4307 = vmatpush2.bf16.msra.mxu0 %v3749
    %4308 = vmatprep.subr.bf16.mxu0 %v3740
    %4309 = vmatpush2.bf16.msra.mxu0 %v3739
    %4310 = vmatprep.subr.bf16.mxu0 %v3730
    %4311 = vmatpush2.bf16.msra.mxu0 %v3729
    %4312 = vmatprep.subr.bf16.mxu0 %v3720
    %4313 = vmatpush2.bf16.msra.mxu0 %v3719
    %4314 = vmatprep.subr.bf16.mxu0 %v3710
    %4315 = vmatpush2.bf16.msra.mxu0 %v3709
    %4316 = vmatprep.subr.bf16.mxu0 %v3700
    %4317 = vmatpush2.bf16.msra.mxu0 %v3699
    %4318 = vmatprep.subr.bf16.mxu0 %v3690
    %4319 = vmatpush2.bf16.msra.mxu0 %v3689
    %4320 = vmatprep.subr.bf16.mxu0 %v3680
    %4321 = vmatpush2.bf16.msra.mxu0 %v3679
    %4322 = vmatprep.mubr.bf16.mxu0 %v2100
    %4323 = vmatmul.mubr.bf16.gmra.mxu0 %v2099
    %v4324 = vpop.f32.mrf.mxu0
    %v4325 = vadd.f32 %v4282, %v4324
    %v4326 = vpop.f32.mrf.mxu0
    %v4327 = vadd.f32 %v4284, %v4326
    %v4328 = vpop.f32.mrf.mxu0
    %v4329 = vadd.f32 %v4286, %v4328
    %v4330 = vpop.f32.mrf.mxu0
    %v4331 = vadd.f32 %v4288, %v4330
    %4332 = vdwg.mxu0
    %4333 = vmatprep.subr.bf16.mxu0 %v3512
    %4334 = vmatpush1.bf16.msra.mxu0 %v3511
    %4335 = vmatprep.subr.bf16.mxu0 %v3502
    %4336 = vmatpush1.bf16.msra.mxu0 %v3501
    %4337 = vmatprep.subr.bf16.mxu0 %v3492
    %4338 = vmatpush1.bf16.msra.mxu0 %v3491
    %4339 = vmatprep.subr.bf16.mxu0 %v3482
    %4340 = vmatpush1.bf16.msra.mxu0 %v3481
    %4341 = vmatprep.subr.bf16.mxu0 %v3472
    %4342 = vmatpush1.bf16.msra.mxu0 %v3471
    %4343 = vmatprep.subr.bf16.mxu0 %v3462
    %4344 = vmatpush1.bf16.msra.mxu0 %v3461
    %4345 = vmatprep.subr.bf16.mxu0 %v3452
    %4346 = vmatpush1.bf16.msra.mxu0 %v3451
    %4347 = vmatprep.subr.bf16.mxu0 %v3442
    %4348 = vmatpush1.bf16.msra.mxu0 %v3441
    %4349 = vmatprep.subr.bf16.mxu0 %v3592
    %4350 = vmatpush2.bf16.msra.mxu0 %v3591
    %4351 = vmatprep.subr.bf16.mxu0 %v3582
    %4352 = vmatpush2.bf16.msra.mxu0 %v3581
    %4353 = vmatprep.subr.bf16.mxu0 %v3572
    %4354 = vmatpush2.bf16.msra.mxu0 %v3571
    %4355 = vmatprep.subr.bf16.mxu0 %v3562
    %4356 = vmatpush2.bf16.msra.mxu0 %v3561
    %4357 = vmatprep.subr.bf16.mxu0 %v3552
    %4358 = vmatpush2.bf16.msra.mxu0 %v3551
    %4359 = vmatprep.subr.bf16.mxu0 %v3542
    %4360 = vmatpush2.bf16.msra.mxu0 %v3541
    %4361 = vmatprep.subr.bf16.mxu0 %v3532
    %4362 = vmatpush2.bf16.msra.mxu0 %v3531
    %4363 = vmatprep.subr.bf16.mxu0 %v3522
    %4364 = vmatpush2.bf16.msra.mxu0 %v3521
    %4365 = vmatprep.mubr.bf16.mxu0 %v2098
    %4366 = vmatmul.mubr.bf16.gmra.mxu0 %v2097
    %v4367 = vpop.f32.mrf.mxu0
    %v4368 = vadd.f32 %v2452, %v4367
    %v4369 = vpop.f32.mrf.mxu0
    %v4370 = vadd.f32 %v2456, %v4369
    %v4371 = vpop.f32.mrf.mxu0
    %v4372 = vadd.f32 %v2452, %v4371
    %v4373 = vpop.f32.mrf.mxu0
    %v4374 = vadd.f32 %v2456, %v4373
    %4375 = vdwg.mxu0
    %4376 = vmatprep.subr.bf16.mxu0 %v3672
    %4377 = vmatpush1.bf16.msra.mxu0 %v3671
    %4378 = vmatprep.subr.bf16.mxu0 %v3662
    %4379 = vmatpush1.bf16.msra.mxu0 %v3661
    %4380 = vmatprep.subr.bf16.mxu0 %v3652
    %4381 = vmatpush1.bf16.msra.mxu0 %v3651
    %4382 = vmatprep.subr.bf16.mxu0 %v3642
    %4383 = vmatpush1.bf16.msra.mxu0 %v3641
    %4384 = vmatprep.subr.bf16.mxu0 %v3632
    %4385 = vmatpush1.bf16.msra.mxu0 %v3631
    %4386 = vmatprep.subr.bf16.mxu0 %v3622
    %4387 = vmatpush1.bf16.msra.mxu0 %v3621
    %4388 = vmatprep.subr.bf16.mxu0 %v3612
    %4389 = vmatpush1.bf16.msra.mxu0 %v3611
    %4390 = vmatprep.subr.bf16.mxu0 %v3602
    %4391 = vmatpush1.bf16.msra.mxu0 %v3601
    %4392 = vmatprep.subr.bf16.mxu0 %v3752
    %4393 = vmatpush2.bf16.msra.mxu0 %v3751
    %4394 = vmatprep.subr.bf16.mxu0 %v3742
    %4395 = vmatpush2.bf16.msra.mxu0 %v3741
    %4396 = vmatprep.subr.bf16.mxu0 %v3732
    %4397 = vmatpush2.bf16.msra.mxu0 %v3731
    %4398 = vmatprep.subr.bf16.mxu0 %v3722
    %4399 = vmatpush2.bf16.msra.mxu0 %v3721
    %4400 = vmatprep.subr.bf16.mxu0 %v3712
    %4401 = vmatpush2.bf16.msra.mxu0 %v3711
    %4402 = vmatprep.subr.bf16.mxu0 %v3702
    %4403 = vmatpush2.bf16.msra.mxu0 %v3701
    %4404 = vmatprep.subr.bf16.mxu0 %v3692
    %4405 = vmatpush2.bf16.msra.mxu0 %v3691
    %4406 = vmatprep.subr.bf16.mxu0 %v3682
    %4407 = vmatpush2.bf16.msra.mxu0 %v3681
    %4408 = vmatprep.mubr.bf16.mxu0 %v2100
    %4409 = vmatmul.mubr.bf16.gmra.mxu0 %v2099
    %v4410 = vpop.f32.mrf.mxu0
    %v4411 = vadd.f32 %v4368, %v4410
    %v4412 = vpop.f32.mrf.mxu0
    %v4413 = vadd.f32 %v4370, %v4412
    %v4414 = vpop.f32.mrf.mxu0
    %v4415 = vadd.f32 %v4372, %v4414
    %v4416 = vpop.f32.mrf.mxu0
    %v4417 = vadd.f32 %v4374, %v4416
    %4418 = vdwg.mxu0
    %4419 = vmatprep.subr.bf16.mxu0 %v3514
    %4420 = vmatpush1.bf16.msra.mxu0 %v3513
    %4421 = vmatprep.subr.bf16.mxu0 %v3504
    %4422 = vmatpush1.bf16.msra.mxu0 %v3503
    %4423 = vmatprep.subr.bf16.mxu0 %v3494
    %4424 = vmatpush1.bf16.msra.mxu0 %v3493
    %4425 = vmatprep.subr.bf16.mxu0 %v3484
    %4426 = vmatpush1.bf16.msra.mxu0 %v3483
    %4427 = vmatprep.subr.bf16.mxu0 %v3474
    %4428 = vmatpush1.bf16.msra.mxu0 %v3473
    %4429 = vmatprep.subr.bf16.mxu0 %v3464
    %4430 = vmatpush1.bf16.msra.mxu0 %v3463
    %4431 = vmatprep.subr.bf16.mxu0 %v3454
    %4432 = vmatpush1.bf16.msra.mxu0 %v3453
    %4433 = vmatprep.subr.bf16.mxu0 %v3444
    %4434 = vmatpush1.bf16.msra.mxu0 %v3443
    %4435 = vmatprep.subr.bf16.mxu0 %v3594
    %4436 = vmatpush2.bf16.msra.mxu0 %v3593
    %4437 = vmatprep.subr.bf16.mxu0 %v3584
    %4438 = vmatpush2.bf16.msra.mxu0 %v3583
    %4439 = vmatprep.subr.bf16.mxu0 %v3574
    %4440 = vmatpush2.bf16.msra.mxu0 %v3573
    %4441 = vmatprep.subr.bf16.mxu0 %v3564
    %4442 = vmatpush2.bf16.msra.mxu0 %v3563
    %4443 = vmatprep.subr.bf16.mxu0 %v3554
    %4444 = vmatpush2.bf16.msra.mxu0 %v3553
    %4445 = vmatprep.subr.bf16.mxu0 %v3544
    %4446 = vmatpush2.bf16.msra.mxu0 %v3543
    %4447 = vmatprep.subr.bf16.mxu0 %v3534
    %4448 = vmatpush2.bf16.msra.mxu0 %v3533
    %4449 = vmatprep.subr.bf16.mxu0 %v3524
    %4450 = vmatpush2.bf16.msra.mxu0 %v3523
    %4451 = vmatprep.mubr.bf16.mxu0 %v2098
    %4452 = vmatmul.mubr.bf16.gmra.mxu0 %v2097
    %v4453 = vpop.f32.mrf.mxu0
    %v4454 = vadd.f32 %v2460, %v4453
    %v4455 = vpop.f32.mrf.mxu0
    %v4456 = vadd.f32 %v2464, %v4455
    %v4457 = vpop.f32.mrf.mxu0
    %v4458 = vadd.f32 %v2460, %v4457
    %v4459 = vpop.f32.mrf.mxu0
    %v4460 = vadd.f32 %v2464, %v4459
    %4461 = vdwg.mxu0
    %4462 = vmatprep.subr.bf16.mxu0 %v3674
    %4463 = vmatpush1.bf16.msra.mxu0 %v3673
    %4464 = vmatprep.subr.bf16.mxu0 %v3664
    %4465 = vmatpush1.bf16.msra.mxu0 %v3663
    %4466 = vmatprep.subr.bf16.mxu0 %v3654
    %4467 = vmatpush1.bf16.msra.mxu0 %v3653
    %4468 = vmatprep.subr.bf16.mxu0 %v3644
    %4469 = vmatpush1.bf16.msra.mxu0 %v3643
    %4470 = vmatprep.subr.bf16.mxu0 %v3634
    %4471 = vmatpush1.bf16.msra.mxu0 %v3633
    %4472 = vmatprep.subr.bf16.mxu0 %v3624
    %4473 = vmatpush1.bf16.msra.mxu0 %v3623
    %4474 = vmatprep.subr.bf16.mxu0 %v3614
    %4475 = vmatpush1.bf16.msra.mxu0 %v3613
    %4476 = vmatprep.subr.bf16.mxu0 %v3604
    %4477 = vmatpush1.bf16.msra.mxu0 %v3603
    %4478 = vmatprep.subr.bf16.mxu0 %v3754
    %4479 = vmatpush2.bf16.msra.mxu0 %v3753
    %4480 = vmatprep.subr.bf16.mxu0 %v3744
    %4481 = vmatpush2.bf16.msra.mxu0 %v3743
    %4482 = vmatprep.subr.bf16.mxu0 %v3734
    %4483 = vmatpush2.bf16.msra.mxu0 %v3733
    %4484 = vmatprep.subr.bf16.mxu0 %v3724
    %4485 = vmatpush2.bf16.msra.mxu0 %v3723
    %4486 = vmatprep.subr.bf16.mxu0 %v3714
    %4487 = vmatpush2.bf16.msra.mxu0 %v3713
    %4488 = vmatprep.subr.bf16.mxu0 %v3704
    %4489 = vmatpush2.bf16.msra.mxu0 %v3703
    %4490 = vmatprep.subr.bf16.mxu0 %v3694
    %4491 = vmatpush2.bf16.msra.mxu0 %v3693
    %4492 = vmatprep.subr.bf16.mxu0 %v3684
    %4493 = vmatpush2.bf16.msra.mxu0 %v3683
    %4494 = vmatprep.mubr.bf16.mxu0 %v2100
    %4495 = vmatmul.mubr.bf16.gmra.mxu0 %v2099
    %v4496 = vpop.f32.mrf.mxu0
    %v4497 = vadd.f32 %v4454, %v4496
    %v4498 = vpop.f32.mrf.mxu0
    %v4499 = vadd.f32 %v4456, %v4498
    %v4500 = vpop.f32.mrf.mxu0
    %v4501 = vadd.f32 %v4458, %v4500
    %v4502 = vpop.f32.mrf.mxu0
    %v4503 = vadd.f32 %v4460, %v4502
    %4504 = vdwg.mxu0
    %v4505 = vmul.f32 %v4153, 0.5
    %v4506 = vmul.f32 %v4155, 0.5
    %v4507 = vmul.f32 %v4239, 0.5
    %v4508 = vmul.f32 %v4241, 0.5
    %v4509 = vmul.f32 %v4325, 0.5
    %v4510 = vmul.f32 %v4327, 0.5
    %v4511 = vmul.f32 %v4411, 0.5
    %v4512 = vmul.f32 %v4413, 0.5
    %v4513 = vmul.f32 %v4497, 0.5
    %v4514 = vmul.f32 %v4499, 0.5
    %v4515 = vmul.f32 %v4157, 0.5
    %v4516 = vmul.f32 %v4159, 0.5
    %v4517 = vmul.f32 %v4243, 0.5
    %v4518 = vmul.f32 %v4245, 0.5
    %v4519 = vmul.f32 %v4329, 0.5
    %v4520 = vmul.f32 %v4331, 0.5
    %v4521 = vmul.f32 %v4415, 0.5
    %v4522 = vmul.f32 %v4417, 0.5
    %v4523 = vmul.f32 %v4501, 0.5
    %v4524 = vmul.f32 %v4503, 0.5
    %v4525 = vtanh.pop %v4505
    %v4526 = vtanh.pop %v4506
    %v4527 = vtanh.pop %v4507
    %v4528 = vtanh.pop %v4508
    %v4529 = vtanh.pop %v4509
    %v4530 = vtanh.pop %v4510
    %v4531 = vtanh.pop %v4511
    %v4532 = vtanh.pop %v4512
    %v4533 = vtanh.pop %v4513
    %v4534 = vtanh.pop %v4514
    %v4535 = vtanh.pop %v4515
    %v4536 = vtanh.pop %v4516
    %v4537 = vtanh.pop %v4517
    %v4538 = vtanh.pop %v4518
    %v4539 = vtanh.pop %v4519
    %v4540 = vtanh.pop %v4520
    %v4541 = vtanh.pop %v4521
    %v4542 = vtanh.pop %v4522
    %v4543 = vtanh.pop %v4523
    %v4544 = vtanh.pop %v4524
    %v4545 = vadd.f32 %v4525, 1.0
    %v4546 = vadd.f32 %v4526, 1.0
    %v4547 = vadd.f32 %v4527, 1.0
    %v4548 = vadd.f32 %v4528, 1.0
    %v4549 = vadd.f32 %v4529, 1.0
    %v4550 = vadd.f32 %v4530, 1.0
    %v4551 = vadd.f32 %v4531, 1.0
    %v4552 = vadd.f32 %v4532, 1.0
    %v4553 = vadd.f32 %v4533, 1.0
    %v4554 = vadd.f32 %v4534, 1.0
    %v4555 = vadd.f32 %v4535, 1.0
    %v4556 = vadd.f32 %v4536, 1.0
    %v4557 = vadd.f32 %v4537, 1.0
    %v4558 = vadd.f32 %v4538, 1.0
    %v4559 = vadd.f32 %v4539, 1.0
    %v4560 = vadd.f32 %v4540, 1.0
    %v4561 = vadd.f32 %v4541, 1.0
    %v4562 = vadd.f32 %v4542, 1.0
    %v4563 = vadd.f32 %v4543, 1.0
    %v4564 = vadd.f32 %v4544, 1.0
    %v4565 = vmul.f32 %v4545, 0.5
    %v4566 = vmul.f32 %v4546, 0.5
    %v4567 = vmul.f32 %v4547, 0.5
    %v4568 = vmul.f32 %v4548, 0.5
    %v4569 = vmul.f32 %v4549, 0.5
    %v4570 = vmul.f32 %v4550, 0.5
    %v4571 = vmul.f32 %v4551, 0.5
    %v4572 = vmul.f32 %v4552, 0.5
    %v4573 = vmul.f32 %v4553, 0.5
    %v4574 = vmul.f32 %v4554, 0.5
    %v4575 = vmul.f32 %v4555, 0.5
    %v4576 = vmul.f32 %v4556, 0.5
    %v4577 = vmul.f32 %v4557, 0.5
    %v4578 = vmul.f32 %v4558, 0.5
    %v4579 = vmul.f32 %v4559, 0.5
    %v4580 = vmul.f32 %v4560, 0.5
    %v4581 = vmul.f32 %v4561, 0.5
    %v4582 = vmul.f32 %v4562, 0.5
    %v4583 = vmul.f32 %v4563, 0.5
    %v4584 = vmul.f32 %v4564, 0.5
    %v4585 = vpack.c.bf16 %v4575, %v4565
    %v4586 = vpack.c.bf16 %v4576, %v4566
    %v4587 = vpack.c.bf16 %v4577, %v4567
    %v4588 = vpack.c.bf16 %v4578, %v4568
    %v4589 = vpack.c.bf16 %v4579, %v4569
    %v4590 = vpack.c.bf16 %v4580, %v4570
    %v4591 = vpack.c.bf16 %v4581, %v4571
    %v4592 = vpack.c.bf16 %v4582, %v4572
    %v4593 = vpack.c.bf16 %v4583, %v4573
    %v4594 = vpack.c.bf16 %v4584, %v4574
    %v4605 = vunpack.c.l.b16 %v4585
    %v4606 = vunpack.c.l.b16 %v4586
    %v4607 = vunpack.c.l.b16 %v4587
    %v4608 = vunpack.c.l.b16 %v4588
    %v4609 = vunpack.c.l.b16 %v4589
    %v4610 = vunpack.c.l.b16 %v4590
    %v4611 = vunpack.c.l.b16 %v4591
    %v4612 = vunpack.c.l.b16 %v4592
    %v4613 = vunpack.c.l.b16 %v4593
    %v4614 = vunpack.c.l.b16 %v4594
    %v4615 = vunpack.c.h.b16 %v4585
    %v4616 = vunpack.c.h.b16 %v4586
    %v4617 = vunpack.c.h.b16 %v4587
    %v4618 = vunpack.c.h.b16 %v4588
    %v4619 = vunpack.c.h.b16 %v4589
    %v4620 = vunpack.c.h.b16 %v4590
    %v4621 = vunpack.c.h.b16 %v4591
    %v4622 = vunpack.c.h.b16 %v4592
    %v4623 = vunpack.c.h.b16 %v4593
    %v4624 = vunpack.c.h.b16 %v4594
    %v4625 = vpack.c.b16 %v4606, %v4605
    %v4626 = vpack.c.b16 %v4608, %v4607
    %v4627 = vpack.c.b16 %v4610, %v4609
    %v4628 = vpack.c.b16 %v4612, %v4611
    %v4629 = vpack.c.b16 %v4614, %v4613
    %v4630 = vpack.c.b16 %v4616, %v4615
    %v4631 = vpack.c.b16 %v4618, %v4617
    %v4632 = vpack.c.b16 %v4620, %v4619
    %v4633 = vpack.c.b16 %v4622, %v4621
    %v4634 = vpack.c.b16 %v4624, %v4623
    %4645 = vst [vmem:[%s10] sm:$0xff] %v4625
    %4646 = vst [vmem:[%s10 + $0x8] sm:$0xff] %v4626
    %4647 = vst [vmem:[%s10 + $0x10] sm:$0xff] %v4627
    %4648 = vst [vmem:[%s10 + $0x18] sm:$0xff] %v4628
    %4649 = vst [vmem:[%s10 + $0x20] sm:$0xff] %v4629
    %4650 = vst [vmem:[%s10 + $0x28] sm:$0xff] %v4630
    %4651 = vst [vmem:[%s10 + $0x30] sm:$0xff] %v4631
    %4652 = vst [vmem:[%s10 + $0x38] sm:$0xff] %v4632
    %4653 = vst [vmem:[%s10 + $0x40] sm:$0xff] %v4633
    %4654 = vst [vmem:[%s10 + $0x48] sm:$0xff] %v4634
    // Predicated region
    $region74: #{vae_forward.1} parent=1 // pred_check
      _
    $region75: #{vae_forward.1} parent=1 // pred_check_branch
      %4656 = sbr.rel (0) target = $region77
    $region76: #{vae_forward.1} parent=1 // pred_region
      _
    $region77: #{vae_forward.1} parent=1 // pred_fallthru
      _
    // Predicated region
    $region78: #{vae_forward.1} parent=1 // pred_check
      _
    $region79: #{vae_forward.1} parent=1 // pred_check_branch
      %4658 = sbr.rel (0) target = $region81
    $region80: #{vae_forward.1} parent=1 // pred_region
      _
    $region81: #{vae_forward.1} parent=1 // pred_fallthru
      _
    // Predicated region
    $region82: #{vae_forward.1} parent=1 // pred_check
      _
    $region83: #{vae_forward.1} parent=1 // pred_check_branch
      %4660 = sbr.rel (0) target = $region85
    $region84: #{vae_forward.1} parent=1 // pred_region
      _
    $region85: #{vae_forward.1} parent=1 // pred_fallthru
      _
    // Predicated region
    $region86: #{vae_forward.1} parent=1 // pred_check
      _
    $region87: #{vae_forward.1} parent=1 // pred_check_branch
      %4662 = sbr.rel (0) target = $region89
    $region88: #{vae_forward.1} parent=1 // pred_region
      _
    $region89: #{vae_forward.1} parent=1 // pred_fallthru
      _
    %4663 = vsyncpa [#allocation3], 1
    %4664 = vsyncpa [#allocation5], 1
    %4665 = vsyncpa [#allocation8], 1
    %4666 = vsyncpa [#allocation11], 1
    %4667 = vsyncpa [#allocation14], 1

</llo_original>
